<compile_context>
chip_gen: v7x
topology: tpu7x:2x2x1
jax: 0.10.0
libtpu: 0.0.40
codegen_flags: <defaults>
</compile_context>

<pallas_src>
import math
from functools import partial

import jax
import jax.numpy as jnp
from jax.experimental import pallas as pl
from jax.experimental.pallas import tpu as pltpu


# ----------------------------------------------------------------------------
# Exact-erf GELU from guaranteed-supported element-wise ops
# ----------------------------------------------------------------------------

def _erf(x):
    # Abramowitz & Stegun 7.1.26, |error| <= 1.5e-7 (well below f32 parity
    # tolerances vs PyTorch's exact-erf GELU).  Avoids relying on a Mosaic
    # lowering for lax.erf.
    p = 0.3275911
    a1, a2, a3, a4, a5 = (0.254829592, -0.284496736, 1.421413741,
                          -1.453152027, 1.061405429)
    z = jnp.abs(x)
    t = 1.0 / (1.0 + p * z)
    poly = ((((a5 * t + a4) * t + a3) * t + a2) * t + a1) * t
    y = 1.0 - poly * jnp.exp(-(z * z))
    return jnp.where(x >= 0.0, y, -y)


def _gelu_exact(x):
    return 0.5 * x * (1.0 + _erf(x * (1.0 / math.sqrt(2.0))))


# ----------------------------------------------------------------------------
# Fused forward kernel (one grid step == one batch element)
# ----------------------------------------------------------------------------

def _decoder_kernel(
    # ---- batch-blocked inputs (1, T_i, C_i) --------------------------------
    pose_ref, root_ref, lat_ref,
    # ---- weights (whole arrays, resident in VMEM) ---------------------------
    pe_ref,                                      # (S, D)
    epw_ref, epb_ref,                            # pose embed    (Pf, D), (1, D)
    erw_ref, erb_ref,                            # root embed    (Rf, D), (1, D)
    elw_ref, elb_ref,                            # latents embed (Lf, D), (1, D)
    wq_ref, bq_ref, wk_ref, bk_ref, wv_ref, bv_ref,   # (L, D, D), (L, 1, D)
    wo_ref, bo_ref,                                   # (L, D, D), (L, 1, D)
    w1_ref, b1_ref, w2_ref, b2_ref,                   # (L, D, F), (L, 1, F), (L, F, D), (L, 1, D)
    ln1g_ref, ln1b_ref, ln2g_ref, ln2b_ref,           # (L, 1, D) each
    hw_ref, hb_ref,                              # fused heads (D, P), (1, P)
    # ---- output -------------------------------------------------------------
    out_ref,                                     # (1, S, P)
    *, num_heads, num_layers, eps):
    f32 = jnp.float32
    S = pe_ref.shape[0]
    D = pe_ref.shape[1]
    H = num_heads
    Dh = D // H
    scale = 1.0 / math.sqrt(Dh)

    # ---------------- InputProcess + PositionalEncoding ---------------------
    # One GEMM per segment; x rows follow the PyTorch seq order
    # [pose, root, past_latents, future_latents] for this batch element.
    e_pose = jnp.dot(pose_ref[0], epw_ref[...], preferred_element_type=f32) + epb_ref[...]
    e_root = jnp.dot(root_ref[0], erw_ref[...], preferred_element_type=f32) + erb_ref[...]
    e_lat = jnp.dot(lat_ref[0], elw_ref[...], preferred_element_type=f32) + elb_ref[...]
    x = jnp.concatenate([e_pose, e_root, e_lat], axis=0) + pe_ref[...]      # (S, D)

    # head-selection lane masks, hoisted out of the layer loop
    col = jax.lax.broadcasted_iota(jnp.int32, (1, D), 1)
    masks = [((col >= h * Dh) & (col < (h + 1) * Dh)).astype(f32) for h in range(H)]

    def layer_norm(v, g, b):
        mu = jnp.mean(v, axis=-1, keepdims=True)
        var = jnp.mean(jnp.square(v - mu), axis=-1, keepdims=True)
        return (v - mu) * jax.lax.rsqrt(var + eps) * g + b

    # ---------------- TransformerEncoder (post-norm, eval/no-dropout) -------
    for l in range(num_layers):
        # Q/K/V projections (weights pre-split in the wrapper -> no lane
        # slicing inside a 128-lane tile here).
        q = (jnp.dot(x, wq_ref[l], preferred_element_type=f32) + bq_ref[l]) * scale
        k = jnp.dot(x, wk_ref[l], preferred_element_type=f32) + bk_ref[l]
        v = jnp.dot(x, wv_ref[l], preferred_element_type=f32) + bv_ref[l]

        # Stack the H lane-masked queries along the sublane (row) axis so the
        # whole score computation is ONE matmul; (q*m_h)·k == q_h·k_h.
        q_stack = jnp.concatenate([q * m for m in masks], axis=0)          # (H*S, D)
        s = jnp.einsum('rd,cd->rc', q_stack, k,
                       preferred_element_type=f32)                          # (H*S, S)
        s = s - jnp.max(s, axis=-1, keepdims=True)
        p = jnp.exp(s)
        p = p / jnp.sum(p, axis=-1, keepdims=True)        # exact softmax (parity)

        # ONE PV matmul; per-head lane masking of the result reproduces the
        # head-concat layout because P_h @ (V*m_h) == (P_h @ V) * m_h.
        pv = jnp.dot(p, v, preferred_element_type=f32)                      # (H*S, D)
        attn = pv[0:S] * masks[0]
        for h in range(1, H):
            attn = attn + pv[h * S:(h + 1) * S] * masks[h]

        y = jnp.dot(attn, wo_ref[l], preferred_element_type=f32) + bo_ref[l]
        x = layer_norm(x + y, ln1g_ref[l], ln1b_ref[l])

        h1 = _gelu_exact(jnp.dot(x, w1_ref[l], preferred_element_type=f32) + b1_ref[l])
        h2 = jnp.dot(h1, w2_ref[l], preferred_element_type=f32) + b2_ref[l]
        x = layer_norm(x + h2, ln2g_ref[l], ln2b_ref[l])

    # ---------------- Fused OutputProcess heads ------------------------------
    # One lane-dense (S, D) x (D, 128) GEMM over all rows; one unmasked store.
    out_ref[0] = (jnp.dot(x, hw_ref[...], preferred_element_type=f32)
                  + hb_ref[...]).astype(out_ref.dtype)


# ----------------------------------------------------------------------------
# Parameters (self-initialized; layout matches x @ W + b with W = torch W^T)
# ----------------------------------------------------------------------------

def _linear_init(key, fan_in, fan_out):
    kw, kb = jax.random.split(key)
    bound = 1.0 / math.sqrt(fan_in)
    w = jax.random.uniform(kw, (fan_in, fan_out), jnp.float32, -bound, bound)
    b = jax.random.uniform(kb, (1, fan_out), jnp.float32, -bound, bound)
    return w, b


def _stack_linears(pairs):
    ws = jnp.stack([w for w, _ in pairs])
    bs = jnp.stack([b for _, b in pairs])
    return ws, bs


def _positional_encoding(max_len, d_model):
    position = jnp.arange(max_len, dtype=jnp.float32)[:, None]
    div_term = jnp.exp(jnp.arange(0, d_model, 2, dtype=jnp.float32)
                       * (-math.log(10000.0) / d_model))
    pe = jnp.zeros((max_len, d_model), jnp.float32)
    pe = pe.at[:, 0::2].set(jnp.sin(position * div_term))
    pe = pe.at[:, 1::2].set(jnp.cos(position * div_term))
    return pe


def init_params(key, *, pose_feats, root_feats, latents_feats,
                latent_dim, ff_size, num_layers, max_len=5000):
    D, F, L = latent_dim, ff_size, num_layers
    keys = jax.random.split(key, 5 + 4 * L)
    # NOTE: when porting real PyTorch weights, nn.MultiheadAttention stores
    # in_proj_weight as (3D, D) with Q/K/V packed in that order -> transpose.
    params = {
        "embed_pose":    _linear_init(keys[0], pose_feats, D),
        "embed_root":    _linear_init(keys[1], root_feats, D),
        "embed_latents": _linear_init(keys[2], latents_feats, D),
        "pose_head":     _linear_init(keys[3], D, pose_feats),
        "root_head":     _linear_init(keys[4], D, root_feats),
        "pe":            _positional_encoding(max_len, D),
        "in_proj":  _stack_linears([_linear_init(keys[5 + 4 * l + 0], D, 3 * D)
                                    for l in range(L)]),
        "out_proj": _stack_linears([_linear_init(keys[5 + 4 * l + 1], D, D)
                                    for l in range(L)]),
        "ff1":      _stack_linears([_linear_init(keys[5 + 4 * l + 2], D, F)
                                    for l in range(L)]),
        "ff2":      _stack_linears([_linear_init(keys[5 + 4 * l + 3], F, D)
                                    for l in range(L)]),
        "ln1": (jnp.ones((L, 1, D), jnp.float32), jnp.zeros((L, 1, D), jnp.float32)),
        "ln2": (jnp.ones((L, 1, D), jnp.float32), jnp.zeros((L, 1, D), jnp.float32)),
    }
    return params


# ----------------------------------------------------------------------------
# Forward: a single pallas_call, grid over batch ("parallel" for v7x megacore)
# ----------------------------------------------------------------------------

def reactive_ar_decoder_forward(params, num_heads,
                                past_pose_series, past_root_info,
                                past_latents, future_latents):
    B, T_pose, pose_feats = past_pose_series.shape
    _, T_root, root_feats = past_root_info.shape
    T_lat = past_latents.shape[1] + future_latents.shape[1]
    S = T_pose + T_root + T_lat
    D = params["pe"].shape[1]
    L = params["in_proj"][0].shape[0]

    # past and future latents share the embedding weights -> concat in wrapper
    latents = jnp.concatenate([past_latents, future_latents], axis=1)
    pe_s = params["pe"][:S]

    # split fused in_proj into Q/K/V (trace-time slices; no in-kernel slicing)
    ipw, ipb = params["in_proj"]
    wq, wk, wv = ipw[:, :, 0:D], ipw[:, :, D:2 * D], ipw[:, :, 2 * D:3 * D]
    bq, bk, bv = ipb[:, :, 0:D], ipb[:, :, D:2 * D], ipb[:, :, 2 * D:3 * D]

    # fuse + lane-pad output heads to a multiple of 128 output lanes
    phw, phb = params["pose_head"]
    rhw, rhb = params["root_head"]
    P_out = pose_feats + root_feats
    P_pad = max(128, ((P_out + 127) // 128) * 128)
    hw = jnp.pad(jnp.concatenate([phw, rhw], axis=1), ((0, 0), (0, P_pad - P_out)))
    hb = jnp.pad(jnp.concatenate([phb, rhb], axis=1), ((0, 0), (0, P_pad - P_out)))

    kernel = partial(_decoder_kernel, num_heads=num_heads, num_layers=L, eps=1e-5)

    def batch_spec(a):
        return pl.BlockSpec((1,) + a.shape[1:], lambda b: (b, 0, 0))

    def const_spec(a):
        return pl.BlockSpec(a.shape, lambda b, _n=a.ndim: (0,) * _n)

    weights = (pe_s,
               params["embed_pose"][0], params["embed_pose"][1],
               params["embed_root"][0], params["embed_root"][1],
               params["embed_latents"][0], params["embed_latents"][1],
               wq, bq, wk, bk, wv, bv,
               params["out_proj"][0], params["out_proj"][1],
               params["ff1"][0], params["ff1"][1],
               params["ff2"][0], params["ff2"][1],
               params["ln1"][0], params["ln1"][1],
               params["ln2"][0], params["ln2"][1],
               hw, hb)

    in_specs = ([batch_spec(past_pose_series),
                 batch_spec(past_root_info),
                 batch_spec(latents)]
                + [const_spec(w) for w in weights])

    out = pl.pallas_call(
        kernel,
        grid=(B,),
        in_specs=in_specs,
        out_specs=pl.BlockSpec((1, S, P_pad), lambda b: (b, 0, 0)),
        out_shape=jax.ShapeDtypeStruct((B, S, P_pad), jnp.float32),
        compiler_params=pltpu.CompilerParams(
            dimension_semantics=("parallel",)),
    )(past_pose_series, past_root_info, latents, *weights)

    pred_pose = out[:, 0:T_pose, 0:pose_feats].astype(past_pose_series.dtype)
    pred_root = out[:, T_pose:T_pose + T_root,
                    pose_feats:pose_feats + root_feats].astype(past_root_info.dtype)
    return pred_pose, pred_root


# ----------------------------------------------------------------------------
# Main
# ----------------------------------------------------------------------------

if __name__ == "__main__":
    # small config consistent with the module constructor
    pose_feats, root_feats, latents_feats = 12, 6, 8
    latent_dim, ff_size, num_layers, num_heads = 32, 64, 2, 4
    B, T_pose, T_root, T_past, T_future = 2, 8, 8, 4, 4

    key = jax.random.PRNGKey(0)
    kp, kx = jax.random.split(key)
    params = init_params(kp,
                         pose_feats=pose_feats, root_feats=root_feats,
                         latents_feats=latents_feats, latent_dim=latent_dim,
                         ff_size=ff_size, num_layers=num_layers, max_len=256)

    k1, k2, k3, k4 = jax.random.split(kx, 4)
    past_pose_series = jax.random.normal(k1, (B, T_pose, pose_feats), jnp.float32)
    past_root_info = jax.random.normal(k2, (B, T_root, root_feats), jnp.float32)
    past_latents = jax.random.normal(k3, (B, T_past, latents_feats), jnp.float32)
    future_latents = jax.random.normal(k4, (B, T_future, latents_feats), jnp.float32)

    pred_pose, pred_root = reactive_ar_decoder_forward(
        params, num_heads,
        past_pose_series, past_root_info, past_latents, future_latents)

    jax.block_until_ready((pred_pose, pred_root))
    assert pred_pose.shape == (B, T_pose, pose_feats)
    assert pred_root.shape == (B, T_root, root_feats)
    assert bool(jnp.all(jnp.isfinite(pred_pose)))
    assert bool(jnp.all(jnp.isfinite(pred_root)))
    print("KERNEL_OK")
</pallas_src>

<mosaic_0001>
module attributes {stable_mosaic.version = 11 : i64} {
  func.func @_decoder_kernel(%arg0: i32, %arg1: memref<1x8x12xf32, #tpu.memory_space<vmem>>, %arg2: memref<1x8x6xf32, #tpu.memory_space<vmem>>, %arg3: memref<1x8x8xf32, #tpu.memory_space<vmem>>, %arg4: memref<24x32xf32, #tpu.memory_space<vmem>>, %arg5: memref<12x32xf32, #tpu.memory_space<vmem>>, %arg6: memref<1x32xf32, #tpu.memory_space<vmem>>, %arg7: memref<6x32xf32, #tpu.memory_space<vmem>>, %arg8: memref<1x32xf32, #tpu.memory_space<vmem>>, %arg9: memref<8x32xf32, #tpu.memory_space<vmem>>, %arg10: memref<1x32xf32, #tpu.memory_space<vmem>>, %arg11: memref<2x32x32xf32, #tpu.memory_space<vmem>>, %arg12: memref<2x1x32xf32, #tpu.memory_space<vmem>>, %arg13: memref<2x32x32xf32, #tpu.memory_space<vmem>>, %arg14: memref<2x1x32xf32, #tpu.memory_space<vmem>>, %arg15: memref<2x32x32xf32, #tpu.memory_space<vmem>>, %arg16: memref<2x1x32xf32, #tpu.memory_space<vmem>>, %arg17: memref<2x32x32xf32, #tpu.memory_space<vmem>>, %arg18: memref<2x1x32xf32, #tpu.memory_space<vmem>>, %arg19: memref<2x32x64xf32, #tpu.memory_space<vmem>>, %arg20: memref<2x1x64xf32, #tpu.memory_space<vmem>>, %arg21: memref<2x64x32xf32, #tpu.memory_space<vmem>>, %arg22: memref<2x1x32xf32, #tpu.memory_space<vmem>>, %arg23: memref<2x1x32xf32, #tpu.memory_space<vmem>>, %arg24: memref<2x1x32xf32, #tpu.memory_space<vmem>>, %arg25: memref<2x1x32xf32, #tpu.memory_space<vmem>>, %arg26: memref<2x1x32xf32, #tpu.memory_space<vmem>>, %arg27: memref<32x128xf32, #tpu.memory_space<vmem>>, %arg28: memref<1x128xf32, #tpu.memory_space<vmem>>, %arg29: memref<1x24x128xf32, #tpu.memory_space<vmem>>) attributes {dimension_semantics = [#tpu.dimension_semantics<parallel>], iteration_bounds = array<i64: 2>, scalar_prefetch = 0 : i64, scratch_operands = 0 : i64, tpu.core_type = #tpu.core_type<tc>, window_params = [{transform_indices = @transform_0, window_bounds = array<i64: 1, 8, 12>}, {transform_indices = @transform_1, window_bounds = array<i64: 1, 8, 6>}, {transform_indices = @transform_2, window_bounds = array<i64: 1, 8, 8>}, {pipeline_mode = #tpu.pipeline_mode<synchronous>, transform_indices = @transform_3, window_bounds = array<i64: 24, 32>}, {pipeline_mode = #tpu.pipeline_mode<synchronous>, transform_indices = @transform_4, window_bounds = array<i64: 12, 32>}, {pipeline_mode = #tpu.pipeline_mode<synchronous>, transform_indices = @transform_5, window_bounds = array<i64: 1, 32>}, {pipeline_mode = #tpu.pipeline_mode<synchronous>, transform_indices = @transform_6, window_bounds = array<i64: 6, 32>}, {pipeline_mode = #tpu.pipeline_mode<synchronous>, transform_indices = @transform_7, window_bounds = array<i64: 1, 32>}, {pipeline_mode = #tpu.pipeline_mode<synchronous>, transform_indices = @transform_8, window_bounds = array<i64: 8, 32>}, {pipeline_mode = #tpu.pipeline_mode<synchronous>, transform_indices = @transform_9, window_bounds = array<i64: 1, 32>}, {pipeline_mode = #tpu.pipeline_mode<synchronous>, transform_indices = @transform_10, window_bounds = array<i64: 2, 32, 32>}, {pipeline_mode = #tpu.pipeline_mode<synchronous>, transform_indices = @transform_11, window_bounds = array<i64: 2, 1, 32>}, {pipeline_mode = #tpu.pipeline_mode<synchronous>, transform_indices = @transform_12, window_bounds = array<i64: 2, 32, 32>}, {pipeline_mode = #tpu.pipeline_mode<synchronous>, transform_indices = @transform_13, window_bounds = array<i64: 2, 1, 32>}, {pipeline_mode = #tpu.pipeline_mode<synchronous>, transform_indices = @transform_14, window_bounds = array<i64: 2, 32, 32>}, {pipeline_mode = #tpu.pipeline_mode<synchronous>, transform_indices = @transform_15, window_bounds = array<i64: 2, 1, 32>}, {pipeline_mode = #tpu.pipeline_mode<synchronous>, transform_indices = @transform_16, window_bounds = array<i64: 2, 32, 32>}, {pipeline_mode = #tpu.pipeline_mode<synchronous>, transform_indices = @transform_17, window_bounds = array<i64: 2, 1, 32>}, {pipeline_mode = #tpu.pipeline_mode<synchronous>, transform_indices = @transform_18, window_bounds = array<i64: 2, 32, 64>}, {pipeline_mode = #tpu.pipeline_mode<synchronous>, transform_indices = @transform_19, window_bounds = array<i64: 2, 1, 64>}, {pipeline_mode = #tpu.pipeline_mode<synchronous>, transform_indices = @transform_20, window_bounds = array<i64: 2, 64, 32>}, {pipeline_mode = #tpu.pipeline_mode<synchronous>, transform_indices = @transform_21, window_bounds = array<i64: 2, 1, 32>}, {pipeline_mode = #tpu.pipeline_mode<synchronous>, transform_indices = @transform_22, window_bounds = array<i64: 2, 1, 32>}, {pipeline_mode = #tpu.pipeline_mode<synchronous>, transform_indices = @transform_23, window_bounds = array<i64: 2, 1, 32>}, {pipeline_mode = #tpu.pipeline_mode<synchronous>, transform_indices = @transform_24, window_bounds = array<i64: 2, 1, 32>}, {pipeline_mode = #tpu.pipeline_mode<synchronous>, transform_indices = @transform_25, window_bounds = array<i64: 2, 1, 32>}, {pipeline_mode = #tpu.pipeline_mode<synchronous>, transform_indices = @transform_26, window_bounds = array<i64: 32, 128>}, {pipeline_mode = #tpu.pipeline_mode<synchronous>, transform_indices = @transform_27, window_bounds = array<i64: 1, 128>}, {transform_indices = @transform_28, window_bounds = array<i64: 1, 24, 128>}]} {
    %c0 = arith.constant 0 : index
    %c0_0 = arith.constant 0 : index
    %c0_1 = arith.constant 0 : index
    %0 = vector.load %arg1[%c0, %c0_0, %c0_1] : memref<1x8x12xf32, #tpu.memory_space<vmem>>, vector<1x8x12xf32>
    %1 = vector.shape_cast %0 : vector<1x8x12xf32> to vector<8x12xf32>
    %c0_2 = arith.constant 0 : index
    %c0_3 = arith.constant 0 : index
    %2 = vector.load %arg5[%c0_2, %c0_3] : memref<12x32xf32, #tpu.memory_space<vmem>>, vector<12x32xf32>
    %cst = arith.constant dense<0.000000e+00> : vector<8x32xf32>
    %3 = tpu.matmul %1, %2, %cst {dimension_numbers = #tpu.dot_dimension_numbers<[1], [0], [0], [1], [0, 0, 1, 1], [], []>} : vector<8x12xf32>, vector<12x32xf32>, vector<8x32xf32> -> vector<8x32xf32>
    %c0_4 = arith.constant 0 : index
    %c0_5 = arith.constant 0 : index
    %4 = vector.load %arg6[%c0_4, %c0_5] : memref<1x32xf32, #tpu.memory_space<vmem>>, vector<1x32xf32>
    %5 = vector.broadcast %4 : vector<1x32xf32> to vector<8x32xf32>
    %6 = arith.addf %3, %5 : vector<8x32xf32>
    %c0_6 = arith.constant 0 : index
    %c0_7 = arith.constant 0 : index
    %c0_8 = arith.constant 0 : index
    %7 = vector.load %arg2[%c0_6, %c0_7, %c0_8] : memref<1x8x6xf32, #tpu.memory_space<vmem>>, vector<1x8x6xf32>
    %8 = vector.shape_cast %7 : vector<1x8x6xf32> to vector<8x6xf32>
    %c0_9 = arith.constant 0 : index
    %c0_10 = arith.constant 0 : index
    %9 = vector.load %arg7[%c0_9, %c0_10] : memref<6x32xf32, #tpu.memory_space<vmem>>, vector<6x32xf32>
    %cst_11 = arith.constant dense<0.000000e+00> : vector<8x32xf32>
    %10 = tpu.matmul %8, %9, %cst_11 {dimension_numbers = #tpu.dot_dimension_numbers<[1], [0], [0], [1], [0, 0, 1, 1], [], []>} : vector<8x6xf32>, vector<6x32xf32>, vector<8x32xf32> -> vector<8x32xf32>
    %c0_12 = arith.constant 0 : index
    %c0_13 = arith.constant 0 : index
    %11 = vector.load %arg8[%c0_12, %c0_13] : memref<1x32xf32, #tpu.memory_space<vmem>>, vector<1x32xf32>
    %12 = vector.broadcast %11 : vector<1x32xf32> to vector<8x32xf32>
    %13 = arith.addf %10, %12 : vector<8x32xf32>
    %c0_14 = arith.constant 0 : index
    %c0_15 = arith.constant 0 : index
    %c0_16 = arith.constant 0 : index
    %14 = vector.load %arg3[%c0_14, %c0_15, %c0_16] : memref<1x8x8xf32, #tpu.memory_space<vmem>>, vector<1x8x8xf32>
    %15 = vector.shape_cast %14 : vector<1x8x8xf32> to vector<8x8xf32>
    %c0_17 = arith.constant 0 : index
    %c0_18 = arith.constant 0 : index
    %16 = vector.load %arg9[%c0_17, %c0_18] : memref<8x32xf32, #tpu.memory_space<vmem>>, vector<8x32xf32>
    %cst_19 = arith.constant dense<0.000000e+00> : vector<8x32xf32>
    %17 = tpu.matmul %15, %16, %cst_19 {dimension_numbers = #tpu.dot_dimension_numbers<[1], [0], [0], [1], [0, 0, 1, 1], [], []>} : vector<8x8xf32>, vector<8x32xf32>, vector<8x32xf32> -> vector<8x32xf32>
    %c0_20 = arith.constant 0 : index
    %c0_21 = arith.constant 0 : index
    %18 = vector.load %arg10[%c0_20, %c0_21] : memref<1x32xf32, #tpu.memory_space<vmem>>, vector<1x32xf32>
    %19 = vector.broadcast %18 : vector<1x32xf32> to vector<8x32xf32>
    %20 = arith.addf %17, %19 : vector<8x32xf32>
    %21 = tpu.concatenate %6, %13, %20 in 0 : vector<8x32xf32>, vector<8x32xf32>, vector<8x32xf32> -> vector<24x32xf32>
    %c0_22 = arith.constant 0 : index
    %c0_23 = arith.constant 0 : index
    %22 = vector.load %arg4[%c0_22, %c0_23] : memref<24x32xf32, #tpu.memory_space<vmem>>, vector<24x32xf32>
    %23 = arith.addf %21, %22 : vector<24x32xf32>
    %24 = tpu.iota {dimensions = array<i32: 1>} : vector<1x32xi32>
    %c0_i32 = arith.constant 0 : i32
    %25 = vector.broadcast %c0_i32 : i32 to vector<1x32xi32>
    %26 = arith.cmpi sge, %24, %25 : vector<1x32xi32>
    %c8_i32 = arith.constant 8 : i32
    %27 = vector.broadcast %c8_i32 : i32 to vector<1x32xi32>
    %28 = arith.cmpi slt, %24, %27 : vector<1x32xi32>
    %29 = arith.andi %26, %28 : vector<1x32xi1>
    %30 = arith.extui %29 : vector<1x32xi1> to vector<1x32xi32>
    %31 = arith.sitofp %30 : vector<1x32xi32> to vector<1x32xf32>
    %c8_i32_24 = arith.constant 8 : i32
    %32 = vector.broadcast %c8_i32_24 : i32 to vector<1x32xi32>
    %33 = arith.cmpi sge, %24, %32 : vector<1x32xi32>
    %c16_i32 = arith.constant 16 : i32
    %34 = vector.broadcast %c16_i32 : i32 to vector<1x32xi32>
    %35 = arith.cmpi slt, %24, %34 : vector<1x32xi32>
    %36 = arith.andi %33, %35 : vector<1x32xi1>
    %37 = arith.extui %36 : vector<1x32xi1> to vector<1x32xi32>
    %38 = arith.sitofp %37 : vector<1x32xi32> to vector<1x32xf32>
    %c16_i32_25 = arith.constant 16 : i32
    %39 = vector.broadcast %c16_i32_25 : i32 to vector<1x32xi32>
    %40 = arith.cmpi sge, %24, %39 : vector<1x32xi32>
    %c24_i32 = arith.constant 24 : i32
    %41 = vector.broadcast %c24_i32 : i32 to vector<1x32xi32>
    %42 = arith.cmpi slt, %24, %41 : vector<1x32xi32>
    %43 = arith.andi %40, %42 : vector<1x32xi1>
    %44 = arith.extui %43 : vector<1x32xi1> to vector<1x32xi32>
    %45 = arith.sitofp %44 : vector<1x32xi32> to vector<1x32xf32>
    %c24_i32_26 = arith.constant 24 : i32
    %46 = vector.broadcast %c24_i32_26 : i32 to vector<1x32xi32>
    %47 = arith.cmpi sge, %24, %46 : vector<1x32xi32>
    %c32_i32 = arith.constant 32 : i32
    %48 = vector.broadcast %c32_i32 : i32 to vector<1x32xi32>
    %49 = arith.cmpi slt, %24, %48 : vector<1x32xi32>
    %50 = arith.andi %47, %49 : vector<1x32xi1>
    %51 = arith.extui %50 : vector<1x32xi1> to vector<1x32xi32>
    %52 = arith.sitofp %51 : vector<1x32xi32> to vector<1x32xf32>
    %c0_27 = arith.constant 0 : index
    %c0_28 = arith.constant 0 : index
    %c0_29 = arith.constant 0 : index
    %53 = vector.load %arg11[%c0_27, %c0_28, %c0_29] : memref<2x32x32xf32, #tpu.memory_space<vmem>>, vector<1x32x32xf32>
    %54 = vector.shape_cast %53 : vector<1x32x32xf32> to vector<32x32xf32>
    %cst_30 = arith.constant dense<0.000000e+00> : vector<24x32xf32>
    %55 = tpu.matmul %23, %54, %cst_30 {dimension_numbers = #tpu.dot_dimension_numbers<[1], [0], [0], [1], [0, 0, 1, 1], [], []>} : vector<24x32xf32>, vector<32x32xf32>, vector<24x32xf32> -> vector<24x32xf32>
    %c0_31 = arith.constant 0 : index
    %c0_32 = arith.constant 0 : index
    %c0_33 = arith.constant 0 : index
    %56 = vector.load %arg12[%c0_31, %c0_32, %c0_33] : memref<2x1x32xf32, #tpu.memory_space<vmem>>, vector<1x1x32xf32>
    %57 = vector.shape_cast %56 : vector<1x1x32xf32> to vector<1x32xf32>
    %58 = vector.broadcast %57 : vector<1x32xf32> to vector<24x32xf32>
    %59 = arith.addf %55, %58 : vector<24x32xf32>
    %cst_34 = arith.constant 0.353553385 : f32
    %60 = vector.broadcast %cst_34 : f32 to vector<24x32xf32>
    %61 = arith.mulf %59, %60 : vector<24x32xf32>
    %c0_35 = arith.constant 0 : index
    %c0_36 = arith.constant 0 : index
    %c0_37 = arith.constant 0 : index
    %62 = vector.load %arg13[%c0_35, %c0_36, %c0_37] : memref<2x32x32xf32, #tpu.memory_space<vmem>>, vector<1x32x32xf32>
    %63 = vector.shape_cast %62 : vector<1x32x32xf32> to vector<32x32xf32>
    %cst_38 = arith.constant dense<0.000000e+00> : vector<24x32xf32>
    %64 = tpu.matmul %23, %63, %cst_38 {dimension_numbers = #tpu.dot_dimension_numbers<[1], [0], [0], [1], [0, 0, 1, 1], [], []>} : vector<24x32xf32>, vector<32x32xf32>, vector<24x32xf32> -> vector<24x32xf32>
    %c0_39 = arith.constant 0 : index
    %c0_40 = arith.constant 0 : index
    %c0_41 = arith.constant 0 : index
    %65 = vector.load %arg14[%c0_39, %c0_40, %c0_41] : memref<2x1x32xf32, #tpu.memory_space<vmem>>, vector<1x1x32xf32>
    %66 = vector.shape_cast %65 : vector<1x1x32xf32> to vector<1x32xf32>
    %67 = vector.broadcast %66 : vector<1x32xf32> to vector<24x32xf32>
    %68 = arith.addf %64, %67 : vector<24x32xf32>
    %c0_42 = arith.constant 0 : index
    %c0_43 = arith.constant 0 : index
    %c0_44 = arith.constant 0 : index
    %69 = vector.load %arg15[%c0_42, %c0_43, %c0_44] : memref<2x32x32xf32, #tpu.memory_space<vmem>>, vector<1x32x32xf32>
    %70 = vector.shape_cast %69 : vector<1x32x32xf32> to vector<32x32xf32>
    %cst_45 = arith.constant dense<0.000000e+00> : vector<24x32xf32>
    %71 = tpu.matmul %23, %70, %cst_45 {dimension_numbers = #tpu.dot_dimension_numbers<[1], [0], [0], [1], [0, 0, 1, 1], [], []>} : vector<24x32xf32>, vector<32x32xf32>, vector<24x32xf32> -> vector<24x32xf32>
    %c0_46 = arith.constant 0 : index
    %c0_47 = arith.constant 0 : index
    %c0_48 = arith.constant 0 : index
    %72 = vector.load %arg16[%c0_46, %c0_47, %c0_48] : memref<2x1x32xf32, #tpu.memory_space<vmem>>, vector<1x1x32xf32>
    %73 = vector.shape_cast %72 : vector<1x1x32xf32> to vector<1x32xf32>
    %74 = vector.broadcast %73 : vector<1x32xf32> to vector<24x32xf32>
    %75 = arith.addf %71, %74 : vector<24x32xf32>
    %76 = vector.broadcast %31 : vector<1x32xf32> to vector<24x32xf32>
    %77 = arith.mulf %61, %76 : vector<24x32xf32>
    %78 = vector.broadcast %38 : vector<1x32xf32> to vector<24x32xf32>
    %79 = arith.mulf %61, %78 : vector<24x32xf32>
    %80 = vector.broadcast %45 : vector<1x32xf32> to vector<24x32xf32>
    %81 = arith.mulf %61, %80 : vector<24x32xf32>
    %82 = vector.broadcast %52 : vector<1x32xf32> to vector<24x32xf32>
    %83 = arith.mulf %61, %82 : vector<24x32xf32>
    %84 = tpu.concatenate %77, %79, %81, %83 in 0 : vector<24x32xf32>, vector<24x32xf32>, vector<24x32xf32>, vector<24x32xf32> -> vector<96x32xf32>
    "tpu.trace_start"() <{level = 10 : i32, message = "rd,cd->rc"}> : () -> ()
    %cst_49 = arith.constant dense<0.000000e+00> : vector<96x24xf32>
    %85 = tpu.matmul %84, %68, %cst_49 {dimension_numbers = #tpu.dot_dimension_numbers<[1], [1], [0], [0], [0, 0, 1, 0], [], []>} : vector<96x32xf32>, vector<24x32xf32>, vector<96x24xf32> -> vector<96x24xf32>
    "tpu.trace_stop"() : () -> ()
    %cst_50 = arith.constant dense<0xFF800000> : vector<96xf32>
    %86 = vector.multi_reduction <maximumf>, %85, %cst_50 [1] : vector<96x24xf32> to vector<96xf32>
    %87 = vector.shape_cast %86 : vector<96xf32> to vector<96x1xf32>
    %88 = vector.broadcast %87 : vector<96x1xf32> to vector<96x24xf32>
    %89 = arith.subf %85, %88 : vector<96x24xf32>
    %90 = math.exp %89 : vector<96x24xf32>
    %cst_51 = arith.constant dense<0.000000e+00> : vector<96xf32>
    %91 = vector.multi_reduction <add>, %90, %cst_51 [1] : vector<96x24xf32> to vector<96xf32>
    %92 = vector.shape_cast %91 : vector<96xf32> to vector<96x1xf32>
    %93 = vector.broadcast %92 : vector<96x1xf32> to vector<96x24xf32>
    %94 = arith.divf %90, %93 : vector<96x24xf32>
    %cst_52 = arith.constant dense<0.000000e+00> : vector<96x32xf32>
    %95 = tpu.matmul %94, %75, %cst_52 {dimension_numbers = #tpu.dot_dimension_numbers<[1], [0], [0], [1], [0, 0, 1, 1], [], []>} : vector<96x24xf32>, vector<24x32xf32>, vector<96x32xf32> -> vector<96x32xf32>
    %96 = vector.extract_strided_slice %95 {offsets = [0, 0], sizes = [24, 32], strides = [1, 1]} : vector<96x32xf32> to vector<24x32xf32>
    %97 = vector.broadcast %31 : vector<1x32xf32> to vector<24x32xf32>
    %98 = arith.mulf %96, %97 : vector<24x32xf32>
    %99 = vector.extract_strided_slice %95 {offsets = [24, 0], sizes = [24, 32], strides = [1, 1]} : vector<96x32xf32> to vector<24x32xf32>
    %100 = vector.broadcast %38 : vector<1x32xf32> to vector<24x32xf32>
    %101 = arith.mulf %99, %100 : vector<24x32xf32>
    %102 = arith.addf %98, %101 : vector<24x32xf32>
    %103 = vector.extract_strided_slice %95 {offsets = [48, 0], sizes = [24, 32], strides = [1, 1]} : vector<96x32xf32> to vector<24x32xf32>
    %104 = vector.broadcast %45 : vector<1x32xf32> to vector<24x32xf32>
    %105 = arith.mulf %103, %104 : vector<24x32xf32>
    %106 = arith.addf %102, %105 : vector<24x32xf32>
    %107 = vector.extract_strided_slice %95 {offsets = [72, 0], sizes = [24, 32], strides = [1, 1]} : vector<96x32xf32> to vector<24x32xf32>
    %108 = vector.broadcast %52 : vector<1x32xf32> to vector<24x32xf32>
    %109 = arith.mulf %107, %108 : vector<24x32xf32>
    %110 = arith.addf %106, %109 : vector<24x32xf32>
    %c0_53 = arith.constant 0 : index
    %c0_54 = arith.constant 0 : index
    %c0_55 = arith.constant 0 : index
    %111 = vector.load %arg17[%c0_53, %c0_54, %c0_55] : memref<2x32x32xf32, #tpu.memory_space<vmem>>, vector<1x32x32xf32>
    %112 = vector.shape_cast %111 : vector<1x32x32xf32> to vector<32x32xf32>
    %cst_56 = arith.constant dense<0.000000e+00> : vector<24x32xf32>
    %113 = tpu.matmul %110, %112, %cst_56 {dimension_numbers = #tpu.dot_dimension_numbers<[1], [0], [0], [1], [0, 0, 1, 1], [], []>} : vector<24x32xf32>, vector<32x32xf32>, vector<24x32xf32> -> vector<24x32xf32>
    %c0_57 = arith.constant 0 : index
    %c0_58 = arith.constant 0 : index
    %c0_59 = arith.constant 0 : index
    %114 = vector.load %arg18[%c0_57, %c0_58, %c0_59] : memref<2x1x32xf32, #tpu.memory_space<vmem>>, vector<1x1x32xf32>
    %115 = vector.shape_cast %114 : vector<1x1x32xf32> to vector<1x32xf32>
    %116 = vector.broadcast %115 : vector<1x32xf32> to vector<24x32xf32>
    %117 = arith.addf %113, %116 : vector<24x32xf32>
    %118 = arith.addf %23, %117 : vector<24x32xf32>
    %c0_60 = arith.constant 0 : index
    %c0_61 = arith.constant 0 : index
    %c0_62 = arith.constant 0 : index
    %119 = vector.load %arg23[%c0_60, %c0_61, %c0_62] : memref<2x1x32xf32, #tpu.memory_space<vmem>>, vector<1x1x32xf32>
    %120 = vector.shape_cast %119 : vector<1x1x32xf32> to vector<1x32xf32>
    %c0_63 = arith.constant 0 : index
    %c0_64 = arith.constant 0 : index
    %c0_65 = arith.constant 0 : index
    %121 = vector.load %arg24[%c0_63, %c0_64, %c0_65] : memref<2x1x32xf32, #tpu.memory_space<vmem>>, vector<1x1x32xf32>
    %122 = vector.shape_cast %121 : vector<1x1x32xf32> to vector<1x32xf32>
    %cst_66 = arith.constant dense<0.000000e+00> : vector<24xf32>
    %123 = vector.multi_reduction <add>, %118, %cst_66 [1] : vector<24x32xf32> to vector<24xf32>
    %124 = vector.shape_cast %123 : vector<24xf32> to vector<24x1xf32>
    %cst_67 = arith.constant 3.200000e+01 : f32
    %125 = vector.broadcast %cst_67 : f32 to vector<24x1xf32>
    %126 = arith.divf %124, %125 : vector<24x1xf32>
    %127 = vector.broadcast %126 : vector<24x1xf32> to vector<24x32xf32>
    %128 = arith.subf %118, %127 : vector<24x32xf32>
    %129 = arith.mulf %128, %128 : vector<24x32xf32>
    %cst_68 = arith.constant dense<0.000000e+00> : vector<24xf32>
    %130 = vector.multi_reduction <add>, %129, %cst_68 [1] : vector<24x32xf32> to vector<24xf32>
    %131 = vector.shape_cast %130 : vector<24xf32> to vector<24x1xf32>
    %cst_69 = arith.constant 3.200000e+01 : f32
    %132 = vector.broadcast %cst_69 : f32 to vector<24x1xf32>
    %133 = arith.divf %131, %132 : vector<24x1xf32>
    %134 = vector.broadcast %126 : vector<24x1xf32> to vector<24x32xf32>
    %135 = arith.subf %118, %134 : vector<24x32xf32>
    %cst_70 = arith.constant 9.99999974E-6 : f32
    %136 = vector.broadcast %cst_70 : f32 to vector<24x1xf32>
    %137 = arith.addf %133, %136 : vector<24x1xf32>
    %138 = math.rsqrt %137 : vector<24x1xf32>
    %139 = vector.broadcast %138 : vector<24x1xf32> to vector<24x32xf32>
    %140 = arith.mulf %135, %139 : vector<24x32xf32>
    %141 = vector.broadcast %120 : vector<1x32xf32> to vector<24x32xf32>
    %142 = arith.mulf %140, %141 : vector<24x32xf32>
    %143 = vector.broadcast %122 : vector<1x32xf32> to vector<24x32xf32>
    %144 = arith.addf %142, %143 : vector<24x32xf32>
    %c0_71 = arith.constant 0 : index
    %c0_72 = arith.constant 0 : index
    %c0_73 = arith.constant 0 : index
    %145 = vector.load %arg19[%c0_71, %c0_72, %c0_73] : memref<2x32x64xf32, #tpu.memory_space<vmem>>, vector<1x32x64xf32>
    %146 = vector.shape_cast %145 : vector<1x32x64xf32> to vector<32x64xf32>
    %cst_74 = arith.constant dense<0.000000e+00> : vector<24x64xf32>
    %147 = tpu.matmul %144, %146, %cst_74 {dimension_numbers = #tpu.dot_dimension_numbers<[1], [0], [0], [1], [0, 0, 1, 1], [], []>} : vector<24x32xf32>, vector<32x64xf32>, vector<24x64xf32> -> vector<24x64xf32>
    %c0_75 = arith.constant 0 : index
    %c0_76 = arith.constant 0 : index
    %c0_77 = arith.constant 0 : index
    %148 = vector.load %arg20[%c0_75, %c0_76, %c0_77] : memref<2x1x64xf32, #tpu.memory_space<vmem>>, vector<1x1x64xf32>
    %149 = vector.shape_cast %148 : vector<1x1x64xf32> to vector<1x64xf32>
    %150 = vector.broadcast %149 : vector<1x64xf32> to vector<24x64xf32>
    %151 = arith.addf %147, %150 : vector<24x64xf32>
    %cst_78 = arith.constant 5.000000e-01 : f32
    %152 = vector.broadcast %cst_78 : f32 to vector<24x64xf32>
    %153 = arith.mulf %152, %151 : vector<24x64xf32>
    %cst_79 = arith.constant 0.707106769 : f32
    %154 = vector.broadcast %cst_79 : f32 to vector<24x64xf32>
    %155 = arith.mulf %151, %154 : vector<24x64xf32>
    %156 = math.absf %155 : vector<24x64xf32>
    %cst_80 = arith.constant 0.327591091 : f32
    %157 = vector.broadcast %cst_80 : f32 to vector<24x64xf32>
    %158 = arith.mulf %157, %156 : vector<24x64xf32>
    %cst_81 = arith.constant 1.000000e+00 : f32
    %159 = vector.broadcast %cst_81 : f32 to vector<24x64xf32>
    %160 = arith.addf %159, %158 : vector<24x64xf32>
    %cst_82 = arith.constant 1.000000e+00 : f32
    %161 = vector.broadcast %cst_82 : f32 to vector<24x64xf32>
    %162 = arith.divf %161, %160 : vector<24x64xf32>
    %cst_83 = arith.constant 1.06140542 : f32
    %163 = vector.broadcast %cst_83 : f32 to vector<24x64xf32>
    %164 = arith.mulf %163, %162 : vector<24x64xf32>
    %cst_84 = arith.constant -1.45315206 : f32
    %165 = vector.broadcast %cst_84 : f32 to vector<24x64xf32>
    %166 = arith.addf %164, %165 : vector<24x64xf32>
    %167 = arith.mulf %166, %162 : vector<24x64xf32>
    %cst_85 = arith.constant 1.42141378 : f32
    %168 = vector.broadcast %cst_85 : f32 to vector<24x64xf32>
    %169 = arith.addf %167, %168 : vector<24x64xf32>
    %170 = arith.mulf %169, %162 : vector<24x64xf32>
    %cst_86 = arith.constant -0.284496725 : f32
    %171 = vector.broadcast %cst_86 : f32 to vector<24x64xf32>
    %172 = arith.addf %170, %171 : vector<24x64xf32>
    %173 = arith.mulf %172, %162 : vector<24x64xf32>
    %cst_87 = arith.constant 0.254829586 : f32
    %174 = vector.broadcast %cst_87 : f32 to vector<24x64xf32>
    %175 = arith.addf %173, %174 : vector<24x64xf32>
    %176 = arith.mulf %175, %162 : vector<24x64xf32>
    %177 = arith.mulf %156, %156 : vector<24x64xf32>
    %cst_88 = arith.constant 0.000000e+00 : f32
    %178 = vector.broadcast %cst_88 : f32 to vector<24x64xf32>
    %179 = arith.subf %178, %177 : vector<24x64xf32>
    %180 = math.exp %179 : vector<24x64xf32>
    %181 = arith.mulf %176, %180 : vector<24x64xf32>
    %cst_89 = arith.constant 1.000000e+00 : f32
    %182 = vector.broadcast %cst_89 : f32 to vector<24x64xf32>
    %183 = arith.subf %182, %181 : vector<24x64xf32>
    %cst_90 = arith.constant 0.000000e+00 : f32
    %184 = vector.broadcast %cst_90 : f32 to vector<24x64xf32>
    %185 = arith.cmpf oge, %155, %184 : vector<24x64xf32>
    %cst_91 = arith.constant 0.000000e+00 : f32
    %186 = vector.broadcast %cst_91 : f32 to vector<24x64xf32>
    %187 = arith.subf %186, %183 : vector<24x64xf32>
    %188 = arith.select %185, %183, %187 : vector<24x64xi1>, vector<24x64xf32>
    %cst_92 = arith.constant 1.000000e+00 : f32
    %189 = vector.broadcast %cst_92 : f32 to vector<24x64xf32>
    %190 = arith.addf %189, %188 : vector<24x64xf32>
    %191 = arith.mulf %153, %190 : vector<24x64xf32>
    %c0_93 = arith.constant 0 : index
    %c0_94 = arith.constant 0 : index
    %c0_95 = arith.constant 0 : index
    %192 = vector.load %arg21[%c0_93, %c0_94, %c0_95] : memref<2x64x32xf32, #tpu.memory_space<vmem>>, vector<1x64x32xf32>
    %193 = vector.shape_cast %192 : vector<1x64x32xf32> to vector<64x32xf32>
    %cst_96 = arith.constant dense<0.000000e+00> : vector<24x32xf32>
    %194 = tpu.matmul %191, %193, %cst_96 {dimension_numbers = #tpu.dot_dimension_numbers<[1], [0], [0], [1], [0, 0, 1, 1], [], []>} : vector<24x64xf32>, vector<64x32xf32>, vector<24x32xf32> -> vector<24x32xf32>
    %c0_97 = arith.constant 0 : index
    %c0_98 = arith.constant 0 : index
    %c0_99 = arith.constant 0 : index
    %195 = vector.load %arg22[%c0_97, %c0_98, %c0_99] : memref<2x1x32xf32, #tpu.memory_space<vmem>>, vector<1x1x32xf32>
    %196 = vector.shape_cast %195 : vector<1x1x32xf32> to vector<1x32xf32>
    %197 = vector.broadcast %196 : vector<1x32xf32> to vector<24x32xf32>
    %198 = arith.addf %194, %197 : vector<24x32xf32>
    %199 = arith.addf %144, %198 : vector<24x32xf32>
    %c0_100 = arith.constant 0 : index
    %c0_101 = arith.constant 0 : index
    %c0_102 = arith.constant 0 : index
    %200 = vector.load %arg25[%c0_100, %c0_101, %c0_102] : memref<2x1x32xf32, #tpu.memory_space<vmem>>, vector<1x1x32xf32>
    %201 = vector.shape_cast %200 : vector<1x1x32xf32> to vector<1x32xf32>
    %c0_103 = arith.constant 0 : index
    %c0_104 = arith.constant 0 : index
    %c0_105 = arith.constant 0 : index
    %202 = vector.load %arg26[%c0_103, %c0_104, %c0_105] : memref<2x1x32xf32, #tpu.memory_space<vmem>>, vector<1x1x32xf32>
    %203 = vector.shape_cast %202 : vector<1x1x32xf32> to vector<1x32xf32>
    %cst_106 = arith.constant dense<0.000000e+00> : vector<24xf32>
    %204 = vector.multi_reduction <add>, %199, %cst_106 [1] : vector<24x32xf32> to vector<24xf32>
    %205 = vector.shape_cast %204 : vector<24xf32> to vector<24x1xf32>
    %cst_107 = arith.constant 3.200000e+01 : f32
    %206 = vector.broadcast %cst_107 : f32 to vector<24x1xf32>
    %207 = arith.divf %205, %206 : vector<24x1xf32>
    %208 = vector.broadcast %207 : vector<24x1xf32> to vector<24x32xf32>
    %209 = arith.subf %199, %208 : vector<24x32xf32>
    %210 = arith.mulf %209, %209 : vector<24x32xf32>
    %cst_108 = arith.constant dense<0.000000e+00> : vector<24xf32>
    %211 = vector.multi_reduction <add>, %210, %cst_108 [1] : vector<24x32xf32> to vector<24xf32>
    %212 = vector.shape_cast %211 : vector<24xf32> to vector<24x1xf32>
    %cst_109 = arith.constant 3.200000e+01 : f32
    %213 = vector.broadcast %cst_109 : f32 to vector<24x1xf32>
    %214 = arith.divf %212, %213 : vector<24x1xf32>
    %215 = vector.broadcast %207 : vector<24x1xf32> to vector<24x32xf32>
    %216 = arith.subf %199, %215 : vector<24x32xf32>
    %cst_110 = arith.constant 9.99999974E-6 : f32
    %217 = vector.broadcast %cst_110 : f32 to vector<24x1xf32>
    %218 = arith.addf %214, %217 : vector<24x1xf32>
    %219 = math.rsqrt %218 : vector<24x1xf32>
    %220 = vector.broadcast %219 : vector<24x1xf32> to vector<24x32xf32>
    %221 = arith.mulf %216, %220 : vector<24x32xf32>
    %222 = vector.broadcast %201 : vector<1x32xf32> to vector<24x32xf32>
    %223 = arith.mulf %221, %222 : vector<24x32xf32>
    %224 = vector.broadcast %203 : vector<1x32xf32> to vector<24x32xf32>
    %225 = arith.addf %223, %224 : vector<24x32xf32>
    %c1 = arith.constant 1 : index
    %c0_111 = arith.constant 0 : index
    %c0_112 = arith.constant 0 : index
    %226 = vector.load %arg11[%c1, %c0_111, %c0_112] : memref<2x32x32xf32, #tpu.memory_space<vmem>>, vector<1x32x32xf32>
    %227 = vector.shape_cast %226 : vector<1x32x32xf32> to vector<32x32xf32>
    %cst_113 = arith.constant dense<0.000000e+00> : vector<24x32xf32>
    %228 = tpu.matmul %225, %227, %cst_113 {dimension_numbers = #tpu.dot_dimension_numbers<[1], [0], [0], [1], [0, 0, 1, 1], [], []>} : vector<24x32xf32>, vector<32x32xf32>, vector<24x32xf32> -> vector<24x32xf32>
    %c1_114 = arith.constant 1 : index
    %c0_115 = arith.constant 0 : index
    %c0_116 = arith.constant 0 : index
    %229 = vector.load %arg12[%c1_114, %c0_115, %c0_116] : memref<2x1x32xf32, #tpu.memory_space<vmem>>, vector<1x1x32xf32>
    %230 = vector.shape_cast %229 : vector<1x1x32xf32> to vector<1x32xf32>
    %231 = vector.broadcast %230 : vector<1x32xf32> to vector<24x32xf32>
    %232 = arith.addf %228, %231 : vector<24x32xf32>
    %cst_117 = arith.constant 0.353553385 : f32
    %233 = vector.broadcast %cst_117 : f32 to vector<24x32xf32>
    %234 = arith.mulf %232, %233 : vector<24x32xf32>
    %c1_118 = arith.constant 1 : index
    %c0_119 = arith.constant 0 : index
    %c0_120 = arith.constant 0 : index
    %235 = vector.load %arg13[%c1_118, %c0_119, %c0_120] : memref<2x32x32xf32, #tpu.memory_space<vmem>>, vector<1x32x32xf32>
    %236 = vector.shape_cast %235 : vector<1x32x32xf32> to vector<32x32xf32>
    %cst_121 = arith.constant dense<0.000000e+00> : vector<24x32xf32>
    %237 = tpu.matmul %225, %236, %cst_121 {dimension_numbers = #tpu.dot_dimension_numbers<[1], [0], [0], [1], [0, 0, 1, 1], [], []>} : vector<24x32xf32>, vector<32x32xf32>, vector<24x32xf32> -> vector<24x32xf32>
    %c1_122 = arith.constant 1 : index
    %c0_123 = arith.constant 0 : index
    %c0_124 = arith.constant 0 : index
    %238 = vector.load %arg14[%c1_122, %c0_123, %c0_124] : memref<2x1x32xf32, #tpu.memory_space<vmem>>, vector<1x1x32xf32>
    %239 = vector.shape_cast %238 : vector<1x1x32xf32> to vector<1x32xf32>
    %240 = vector.broadcast %239 : vector<1x32xf32> to vector<24x32xf32>
    %241 = arith.addf %237, %240 : vector<24x32xf32>
    %c1_125 = arith.constant 1 : index
    %c0_126 = arith.constant 0 : index
    %c0_127 = arith.constant 0 : index
    %242 = vector.load %arg15[%c1_125, %c0_126, %c0_127] : memref<2x32x32xf32, #tpu.memory_space<vmem>>, vector<1x32x32xf32>
    %243 = vector.shape_cast %242 : vector<1x32x32xf32> to vector<32x32xf32>
    %cst_128 = arith.constant dense<0.000000e+00> : vector<24x32xf32>
    %244 = tpu.matmul %225, %243, %cst_128 {dimension_numbers = #tpu.dot_dimension_numbers<[1], [0], [0], [1], [0, 0, 1, 1], [], []>} : vector<24x32xf32>, vector<32x32xf32>, vector<24x32xf32> -> vector<24x32xf32>
    %c1_129 = arith.constant 1 : index
    %c0_130 = arith.constant 0 : index
    %c0_131 = arith.constant 0 : index
    %245 = vector.load %arg16[%c1_129, %c0_130, %c0_131] : memref<2x1x32xf32, #tpu.memory_space<vmem>>, vector<1x1x32xf32>
    %246 = vector.shape_cast %245 : vector<1x1x32xf32> to vector<1x32xf32>
    %247 = vector.broadcast %246 : vector<1x32xf32> to vector<24x32xf32>
    %248 = arith.addf %244, %247 : vector<24x32xf32>
    %249 = vector.broadcast %31 : vector<1x32xf32> to vector<24x32xf32>
    %250 = arith.mulf %234, %249 : vector<24x32xf32>
    %251 = vector.broadcast %38 : vector<1x32xf32> to vector<24x32xf32>
    %252 = arith.mulf %234, %251 : vector<24x32xf32>
    %253 = vector.broadcast %45 : vector<1x32xf32> to vector<24x32xf32>
    %254 = arith.mulf %234, %253 : vector<24x32xf32>
    %255 = vector.broadcast %52 : vector<1x32xf32> to vector<24x32xf32>
    %256 = arith.mulf %234, %255 : vector<24x32xf32>
    %257 = tpu.concatenate %250, %252, %254, %256 in 0 : vector<24x32xf32>, vector<24x32xf32>, vector<24x32xf32>, vector<24x32xf32> -> vector<96x32xf32>
    "tpu.trace_start"() <{level = 10 : i32, message = "rd,cd->rc"}> : () -> ()
    %cst_132 = arith.constant dense<0.000000e+00> : vector<96x24xf32>
    %258 = tpu.matmul %257, %241, %cst_132 {dimension_numbers = #tpu.dot_dimension_numbers<[1], [1], [0], [0], [0, 0, 1, 0], [], []>} : vector<96x32xf32>, vector<24x32xf32>, vector<96x24xf32> -> vector<96x24xf32>
    "tpu.trace_stop"() : () -> ()
    %cst_133 = arith.constant dense<0xFF800000> : vector<96xf32>
    %259 = vector.multi_reduction <maximumf>, %258, %cst_133 [1] : vector<96x24xf32> to vector<96xf32>
    %260 = vector.shape_cast %259 : vector<96xf32> to vector<96x1xf32>
    %261 = vector.broadcast %260 : vector<96x1xf32> to vector<96x24xf32>
    %262 = arith.subf %258, %261 : vector<96x24xf32>
    %263 = math.exp %262 : vector<96x24xf32>
    %cst_134 = arith.constant dense<0.000000e+00> : vector<96xf32>
    %264 = vector.multi_reduction <add>, %263, %cst_134 [1] : vector<96x24xf32> to vector<96xf32>
    %265 = vector.shape_cast %264 : vector<96xf32> to vector<96x1xf32>
    %266 = vector.broadcast %265 : vector<96x1xf32> to vector<96x24xf32>
    %267 = arith.divf %263, %266 : vector<96x24xf32>
    %cst_135 = arith.constant dense<0.000000e+00> : vector<96x32xf32>
    %268 = tpu.matmul %267, %248, %cst_135 {dimension_numbers = #tpu.dot_dimension_numbers<[1], [0], [0], [1], [0, 0, 1, 1], [], []>} : vector<96x24xf32>, vector<24x32xf32>, vector<96x32xf32> -> vector<96x32xf32>
    %269 = vector.extract_strided_slice %268 {offsets = [0, 0], sizes = [24, 32], strides = [1, 1]} : vector<96x32xf32> to vector<24x32xf32>
    %270 = vector.broadcast %31 : vector<1x32xf32> to vector<24x32xf32>
    %271 = arith.mulf %269, %270 : vector<24x32xf32>
    %272 = vector.extract_strided_slice %268 {offsets = [24, 0], sizes = [24, 32], strides = [1, 1]} : vector<96x32xf32> to vector<24x32xf32>
    %273 = vector.broadcast %38 : vector<1x32xf32> to vector<24x32xf32>
    %274 = arith.mulf %272, %273 : vector<24x32xf32>
    %275 = arith.addf %271, %274 : vector<24x32xf32>
    %276 = vector.extract_strided_slice %268 {offsets = [48, 0], sizes = [24, 32], strides = [1, 1]} : vector<96x32xf32> to vector<24x32xf32>
    %277 = vector.broadcast %45 : vector<1x32xf32> to vector<24x32xf32>
    %278 = arith.mulf %276, %277 : vector<24x32xf32>
    %279 = arith.addf %275, %278 : vector<24x32xf32>
    %280 = vector.extract_strided_slice %268 {offsets = [72, 0], sizes = [24, 32], strides = [1, 1]} : vector<96x32xf32> to vector<24x32xf32>
    %281 = vector.broadcast %52 : vector<1x32xf32> to vector<24x32xf32>
    %282 = arith.mulf %280, %281 : vector<24x32xf32>
    %283 = arith.addf %279, %282 : vector<24x32xf32>
    %c1_136 = arith.constant 1 : index
    %c0_137 = arith.constant 0 : index
    %c0_138 = arith.constant 0 : index
    %284 = vector.load %arg17[%c1_136, %c0_137, %c0_138] : memref<2x32x32xf32, #tpu.memory_space<vmem>>, vector<1x32x32xf32>
    %285 = vector.shape_cast %284 : vector<1x32x32xf32> to vector<32x32xf32>
    %cst_139 = arith.constant dense<0.000000e+00> : vector<24x32xf32>
    %286 = tpu.matmul %283, %285, %cst_139 {dimension_numbers = #tpu.dot_dimension_numbers<[1], [0], [0], [1], [0, 0, 1, 1], [], []>} : vector<24x32xf32>, vector<32x32xf32>, vector<24x32xf32> -> vector<24x32xf32>
    %c1_140 = arith.constant 1 : index
    %c0_141 = arith.constant 0 : index
    %c0_142 = arith.constant 0 : index
    %287 = vector.load %arg18[%c1_140, %c0_141, %c0_142] : memref<2x1x32xf32, #tpu.memory_space<vmem>>, vector<1x1x32xf32>
    %288 = vector.shape_cast %287 : vector<1x1x32xf32> to vector<1x32xf32>
    %289 = vector.broadcast %288 : vector<1x32xf32> to vector<24x32xf32>
    %290 = arith.addf %286, %289 : vector<24x32xf32>
    %291 = arith.addf %225, %290 : vector<24x32xf32>
    %c1_143 = arith.constant 1 : index
    %c0_144 = arith.constant 0 : index
    %c0_145 = arith.constant 0 : index
    %292 = vector.load %arg23[%c1_143, %c0_144, %c0_145] : memref<2x1x32xf32, #tpu.memory_space<vmem>>, vector<1x1x32xf32>
    %293 = vector.shape_cast %292 : vector<1x1x32xf32> to vector<1x32xf32>
    %c1_146 = arith.constant 1 : index
    %c0_147 = arith.constant 0 : index
    %c0_148 = arith.constant 0 : index
    %294 = vector.load %arg24[%c1_146, %c0_147, %c0_148] : memref<2x1x32xf32, #tpu.memory_space<vmem>>, vector<1x1x32xf32>
    %295 = vector.shape_cast %294 : vector<1x1x32xf32> to vector<1x32xf32>
    %cst_149 = arith.constant dense<0.000000e+00> : vector<24xf32>
    %296 = vector.multi_reduction <add>, %291, %cst_149 [1] : vector<24x32xf32> to vector<24xf32>
    %297 = vector.shape_cast %296 : vector<24xf32> to vector<24x1xf32>
    %cst_150 = arith.constant 3.200000e+01 : f32
    %298 = vector.broadcast %cst_150 : f32 to vector<24x1xf32>
    %299 = arith.divf %297, %298 : vector<24x1xf32>
    %300 = vector.broadcast %299 : vector<24x1xf32> to vector<24x32xf32>
    %301 = arith.subf %291, %300 : vector<24x32xf32>
    %302 = arith.mulf %301, %301 : vector<24x32xf32>
    %cst_151 = arith.constant dense<0.000000e+00> : vector<24xf32>
    %303 = vector.multi_reduction <add>, %302, %cst_151 [1] : vector<24x32xf32> to vector<24xf32>
    %304 = vector.shape_cast %303 : vector<24xf32> to vector<24x1xf32>
    %cst_152 = arith.constant 3.200000e+01 : f32
    %305 = vector.broadcast %cst_152 : f32 to vector<24x1xf32>
    %306 = arith.divf %304, %305 : vector<24x1xf32>
    %307 = vector.broadcast %299 : vector<24x1xf32> to vector<24x32xf32>
    %308 = arith.subf %291, %307 : vector<24x32xf32>
    %cst_153 = arith.constant 9.99999974E-6 : f32
    %309 = vector.broadcast %cst_153 : f32 to vector<24x1xf32>
    %310 = arith.addf %306, %309 : vector<24x1xf32>
    %311 = math.rsqrt %310 : vector<24x1xf32>
    %312 = vector.broadcast %311 : vector<24x1xf32> to vector<24x32xf32>
    %313 = arith.mulf %308, %312 : vector<24x32xf32>
    %314 = vector.broadcast %293 : vector<1x32xf32> to vector<24x32xf32>
    %315 = arith.mulf %313, %314 : vector<24x32xf32>
    %316 = vector.broadcast %295 : vector<1x32xf32> to vector<24x32xf32>
    %317 = arith.addf %315, %316 : vector<24x32xf32>
    %c1_154 = arith.constant 1 : index
    %c0_155 = arith.constant 0 : index
    %c0_156 = arith.constant 0 : index
    %318 = vector.load %arg19[%c1_154, %c0_155, %c0_156] : memref<2x32x64xf32, #tpu.memory_space<vmem>>, vector<1x32x64xf32>
    %319 = vector.shape_cast %318 : vector<1x32x64xf32> to vector<32x64xf32>
    %cst_157 = arith.constant dense<0.000000e+00> : vector<24x64xf32>
    %320 = tpu.matmul %317, %319, %cst_157 {dimension_numbers = #tpu.dot_dimension_numbers<[1], [0], [0], [1], [0, 0, 1, 1], [], []>} : vector<24x32xf32>, vector<32x64xf32>, vector<24x64xf32> -> vector<24x64xf32>
    %c1_158 = arith.constant 1 : index
    %c0_159 = arith.constant 0 : index
    %c0_160 = arith.constant 0 : index
    %321 = vector.load %arg20[%c1_158, %c0_159, %c0_160] : memref<2x1x64xf32, #tpu.memory_space<vmem>>, vector<1x1x64xf32>
    %322 = vector.shape_cast %321 : vector<1x1x64xf32> to vector<1x64xf32>
    %323 = vector.broadcast %322 : vector<1x64xf32> to vector<24x64xf32>
    %324 = arith.addf %320, %323 : vector<24x64xf32>
    %cst_161 = arith.constant 5.000000e-01 : f32
    %325 = vector.broadcast %cst_161 : f32 to vector<24x64xf32>
    %326 = arith.mulf %325, %324 : vector<24x64xf32>
    %cst_162 = arith.constant 0.707106769 : f32
    %327 = vector.broadcast %cst_162 : f32 to vector<24x64xf32>
    %328 = arith.mulf %324, %327 : vector<24x64xf32>
    %329 = math.absf %328 : vector<24x64xf32>
    %cst_163 = arith.constant 0.327591091 : f32
    %330 = vector.broadcast %cst_163 : f32 to vector<24x64xf32>
    %331 = arith.mulf %330, %329 : vector<24x64xf32>
    %cst_164 = arith.constant 1.000000e+00 : f32
    %332 = vector.broadcast %cst_164 : f32 to vector<24x64xf32>
    %333 = arith.addf %332, %331 : vector<24x64xf32>
    %cst_165 = arith.constant 1.000000e+00 : f32
    %334 = vector.broadcast %cst_165 : f32 to vector<24x64xf32>
    %335 = arith.divf %334, %333 : vector<24x64xf32>
    %cst_166 = arith.constant 1.06140542 : f32
    %336 = vector.broadcast %cst_166 : f32 to vector<24x64xf32>
    %337 = arith.mulf %336, %335 : vector<24x64xf32>
    %cst_167 = arith.constant -1.45315206 : f32
    %338 = vector.broadcast %cst_167 : f32 to vector<24x64xf32>
    %339 = arith.addf %337, %338 : vector<24x64xf32>
    %340 = arith.mulf %339, %335 : vector<24x64xf32>
    %cst_168 = arith.constant 1.42141378 : f32
    %341 = vector.broadcast %cst_168 : f32 to vector<24x64xf32>
    %342 = arith.addf %340, %341 : vector<24x64xf32>
    %343 = arith.mulf %342, %335 : vector<24x64xf32>
    %cst_169 = arith.constant -0.284496725 : f32
    %344 = vector.broadcast %cst_169 : f32 to vector<24x64xf32>
    %345 = arith.addf %343, %344 : vector<24x64xf32>
    %346 = arith.mulf %345, %335 : vector<24x64xf32>
    %cst_170 = arith.constant 0.254829586 : f32
    %347 = vector.broadcast %cst_170 : f32 to vector<24x64xf32>
    %348 = arith.addf %346, %347 : vector<24x64xf32>
    %349 = arith.mulf %348, %335 : vector<24x64xf32>
    %350 = arith.mulf %329, %329 : vector<24x64xf32>
    %cst_171 = arith.constant 0.000000e+00 : f32
    %351 = vector.broadcast %cst_171 : f32 to vector<24x64xf32>
    %352 = arith.subf %351, %350 : vector<24x64xf32>
    %353 = math.exp %352 : vector<24x64xf32>
    %354 = arith.mulf %349, %353 : vector<24x64xf32>
    %cst_172 = arith.constant 1.000000e+00 : f32
    %355 = vector.broadcast %cst_172 : f32 to vector<24x64xf32>
    %356 = arith.subf %355, %354 : vector<24x64xf32>
    %cst_173 = arith.constant 0.000000e+00 : f32
    %357 = vector.broadcast %cst_173 : f32 to vector<24x64xf32>
    %358 = arith.cmpf oge, %328, %357 : vector<24x64xf32>
    %cst_174 = arith.constant 0.000000e+00 : f32
    %359 = vector.broadcast %cst_174 : f32 to vector<24x64xf32>
    %360 = arith.subf %359, %356 : vector<24x64xf32>
    %361 = arith.select %358, %356, %360 : vector<24x64xi1>, vector<24x64xf32>
    %cst_175 = arith.constant 1.000000e+00 : f32
    %362 = vector.broadcast %cst_175 : f32 to vector<24x64xf32>
    %363 = arith.addf %362, %361 : vector<24x64xf32>
    %364 = arith.mulf %326, %363 : vector<24x64xf32>
    %c1_176 = arith.constant 1 : index
    %c0_177 = arith.constant 0 : index
    %c0_178 = arith.constant 0 : index
    %365 = vector.load %arg21[%c1_176, %c0_177, %c0_178] : memref<2x64x32xf32, #tpu.memory_space<vmem>>, vector<1x64x32xf32>
    %366 = vector.shape_cast %365 : vector<1x64x32xf32> to vector<64x32xf32>
    %cst_179 = arith.constant dense<0.000000e+00> : vector<24x32xf32>
    %367 = tpu.matmul %364, %366, %cst_179 {dimension_numbers = #tpu.dot_dimension_numbers<[1], [0], [0], [1], [0, 0, 1, 1], [], []>} : vector<24x64xf32>, vector<64x32xf32>, vector<24x32xf32> -> vector<24x32xf32>
    %c1_180 = arith.constant 1 : index
    %c0_181 = arith.constant 0 : index
    %c0_182 = arith.constant 0 : index
    %368 = vector.load %arg22[%c1_180, %c0_181, %c0_182] : memref<2x1x32xf32, #tpu.memory_space<vmem>>, vector<1x1x32xf32>
    %369 = vector.shape_cast %368 : vector<1x1x32xf32> to vector<1x32xf32>
    %370 = vector.broadcast %369 : vector<1x32xf32> to vector<24x32xf32>
    %371 = arith.addf %367, %370 : vector<24x32xf32>
    %372 = arith.addf %317, %371 : vector<24x32xf32>
    %c1_183 = arith.constant 1 : index
    %c0_184 = arith.constant 0 : index
    %c0_185 = arith.constant 0 : index
    %373 = vector.load %arg25[%c1_183, %c0_184, %c0_185] : memref<2x1x32xf32, #tpu.memory_space<vmem>>, vector<1x1x32xf32>
    %374 = vector.shape_cast %373 : vector<1x1x32xf32> to vector<1x32xf32>
    %c1_186 = arith.constant 1 : index
    %c0_187 = arith.constant 0 : index
    %c0_188 = arith.constant 0 : index
    %375 = vector.load %arg26[%c1_186, %c0_187, %c0_188] : memref<2x1x32xf32, #tpu.memory_space<vmem>>, vector<1x1x32xf32>
    %376 = vector.shape_cast %375 : vector<1x1x32xf32> to vector<1x32xf32>
    %cst_189 = arith.constant dense<0.000000e+00> : vector<24xf32>
    %377 = vector.multi_reduction <add>, %372, %cst_189 [1] : vector<24x32xf32> to vector<24xf32>
    %378 = vector.shape_cast %377 : vector<24xf32> to vector<24x1xf32>
    %cst_190 = arith.constant 3.200000e+01 : f32
    %379 = vector.broadcast %cst_190 : f32 to vector<24x1xf32>
    %380 = arith.divf %378, %379 : vector<24x1xf32>
    %381 = vector.broadcast %380 : vector<24x1xf32> to vector<24x32xf32>
    %382 = arith.subf %372, %381 : vector<24x32xf32>
    %383 = arith.mulf %382, %382 : vector<24x32xf32>
    %cst_191 = arith.constant dense<0.000000e+00> : vector<24xf32>
    %384 = vector.multi_reduction <add>, %383, %cst_191 [1] : vector<24x32xf32> to vector<24xf32>
    %385 = vector.shape_cast %384 : vector<24xf32> to vector<24x1xf32>
    %cst_192 = arith.constant 3.200000e+01 : f32
    %386 = vector.broadcast %cst_192 : f32 to vector<24x1xf32>
    %387 = arith.divf %385, %386 : vector<24x1xf32>
    %388 = vector.broadcast %380 : vector<24x1xf32> to vector<24x32xf32>
    %389 = arith.subf %372, %388 : vector<24x32xf32>
    %cst_193 = arith.constant 9.99999974E-6 : f32
    %390 = vector.broadcast %cst_193 : f32 to vector<24x1xf32>
    %391 = arith.addf %387, %390 : vector<24x1xf32>
    %392 = math.rsqrt %391 : vector<24x1xf32>
    %393 = vector.broadcast %392 : vector<24x1xf32> to vector<24x32xf32>
    %394 = arith.mulf %389, %393 : vector<24x32xf32>
    %395 = vector.broadcast %374 : vector<1x32xf32> to vector<24x32xf32>
    %396 = arith.mulf %394, %395 : vector<24x32xf32>
    %397 = vector.broadcast %376 : vector<1x32xf32> to vector<24x32xf32>
    %398 = arith.addf %396, %397 : vector<24x32xf32>
    %c0_194 = arith.constant 0 : index
    %c0_195 = arith.constant 0 : index
    %399 = vector.load %arg27[%c0_194, %c0_195] : memref<32x128xf32, #tpu.memory_space<vmem>>, vector<32x128xf32>
    %cst_196 = arith.constant dense<0.000000e+00> : vector<24x128xf32>
    %400 = tpu.matmul %398, %399, %cst_196 {dimension_numbers = #tpu.dot_dimension_numbers<[1], [0], [0], [1], [0, 0, 1, 1], [], []>} : vector<24x32xf32>, vector<32x128xf32>, vector<24x128xf32> -> vector<24x128xf32>
    %c0_197 = arith.constant 0 : index
    %c0_198 = arith.constant 0 : index
    %401 = vector.load %arg28[%c0_197, %c0_198] : memref<1x128xf32, #tpu.memory_space<vmem>>, vector<1x128xf32>
    %402 = vector.broadcast %401 : vector<1x128xf32> to vector<24x128xf32>
    %403 = arith.addf %400, %402 : vector<24x128xf32>
    %c0_199 = arith.constant 0 : index
    %c0_200 = arith.constant 0 : index
    %c0_201 = arith.constant 0 : index
    %404 = vector.load %arg29[%c0_199, %c0_200, %c0_201] : memref<1x24x128xf32, #tpu.memory_space<vmem>>, vector<1x24x128xf32>
    %405 = vector.shape_cast %404 : vector<1x24x128xf32> to vector<24x128xf32>
    %406 = vector.shape_cast %403 : vector<24x128xf32> to vector<1x24x128xf32>
    tpu.vector_store %arg29[%c0_199, %c0_200, %c0_201], %406 {strides = array<i32>} : memref<1x24x128xf32, #tpu.memory_space<vmem>>, vector<1x24x128xf32>,
    return
  }
  func.func @transform_0(%arg0: i32) -> (i32, i32, i32) {
    %c0_i32 = arith.constant 0 : i32
    %c0_i32_0 = arith.constant 0 : i32
    %c0_i32_1 = arith.constant 0 : i32
    return %arg0, %c0_i32, %c0_i32_0 : i32, i32, i32
  }
  func.func @transform_1(%arg0: i32) -> (i32, i32, i32) {
    %c0_i32 = arith.constant 0 : i32
    %c0_i32_0 = arith.constant 0 : i32
    %c0_i32_1 = arith.constant 0 : i32
    return %arg0, %c0_i32, %c0_i32_0 : i32, i32, i32
  }
  func.func @transform_2(%arg0: i32) -> (i32, i32, i32) {
    %c0_i32 = arith.constant 0 : i32
    %c0_i32_0 = arith.constant 0 : i32
    %c0_i32_1 = arith.constant 0 : i32
    return %arg0, %c0_i32, %c0_i32_0 : i32, i32, i32
  }
  func.func @transform_3(%arg0: i32) -> (i32, i32) {
    %c0_i32 = arith.constant 0 : i32
    %c0_i32_0 = arith.constant 0 : i32
    %c0_i32_1 = arith.constant 0 : i32
    return %c0_i32, %c0_i32_0 : i32, i32
  }
  func.func @transform_4(%arg0: i32) -> (i32, i32) {
    %c0_i32 = arith.constant 0 : i32
    %c0_i32_0 = arith.constant 0 : i32
    %c0_i32_1 = arith.constant 0 : i32
    return %c0_i32, %c0_i32_0 : i32, i32
  }
  func.func @transform_5(%arg0: i32) -> (i32, i32) {
    %c0_i32 = arith.constant 0 : i32
    %c0_i32_0 = arith.constant 0 : i32
    %c0_i32_1 = arith.constant 0 : i32
    return %c0_i32, %c0_i32_0 : i32, i32
  }
  func.func @transform_6(%arg0: i32) -> (i32, i32) {
    %c0_i32 = arith.constant 0 : i32
    %c0_i32_0 = arith.constant 0 : i32
    %c0_i32_1 = arith.constant 0 : i32
    return %c0_i32, %c0_i32_0 : i32, i32
  }
  func.func @transform_7(%arg0: i32) -> (i32, i32) {
    %c0_i32 = arith.constant 0 : i32
    %c0_i32_0 = arith.constant 0 : i32
    %c0_i32_1 = arith.constant 0 : i32
    return %c0_i32, %c0_i32_0 : i32, i32
  }
  func.func @transform_8(%arg0: i32) -> (i32, i32) {
    %c0_i32 = arith.constant 0 : i32
    %c0_i32_0 = arith.constant 0 : i32
    %c0_i32_1 = arith.constant 0 : i32
    return %c0_i32, %c0_i32_0 : i32, i32
  }
  func.func @transform_9(%arg0: i32) -> (i32, i32) {
    %c0_i32 = arith.constant 0 : i32
    %c0_i32_0 = arith.constant 0 : i32
    %c0_i32_1 = arith.constant 0 : i32
    return %c0_i32, %c0_i32_0 : i32, i32
  }
  func.func @transform_10(%arg0: i32) -> (i32, i32, i32) {
    %c0_i32 = arith.constant 0 : i32
    %c0_i32_0 = arith.constant 0 : i32
    %c0_i32_1 = arith.constant 0 : i32
    %c0_i32_2 = arith.constant 0 : i32
    return %c0_i32, %c0_i32_0, %c0_i32_1 : i32, i32, i32
  }
  func.func @transform_11(%arg0: i32) -> (i32, i32, i32) {
    %c0_i32 = arith.constant 0 : i32
    %c0_i32_0 = arith.constant 0 : i32
    %c0_i32_1 = arith.constant 0 : i32
    %c0_i32_2 = arith.constant 0 : i32
    return %c0_i32, %c0_i32_0, %c0_i32_1 : i32, i32, i32
  }
  func.func @transform_12(%arg0: i32) -> (i32, i32, i32) {
    %c0_i32 = arith.constant 0 : i32
    %c0_i32_0 = arith.constant 0 : i32
    %c0_i32_1 = arith.constant 0 : i32
    %c0_i32_2 = arith.constant 0 : i32
    return %c0_i32, %c0_i32_0, %c0_i32_1 : i32, i32, i32
  }
  func.func @transform_13(%arg0: i32) -> (i32, i32, i32) {
    %c0_i32 = arith.constant 0 : i32
    %c0_i32_0 = arith.constant 0 : i32
    %c0_i32_1 = arith.constant 0 : i32
    %c0_i32_2 = arith.constant 0 : i32
    return %c0_i32, %c0_i32_0, %c0_i32_1 : i32, i32, i32
  }
  func.func @transform_14(%arg0: i32) -> (i32, i32, i32) {
    %c0_i32 = arith.constant 0 : i32
    %c0_i32_0 = arith.constant 0 : i32
    %c0_i32_1 = arith.constant 0 : i32
    %c0_i32_2 = arith.constant 0 : i32
    return %c0_i32, %c0_i32_0, %c0_i32_1 : i32, i32, i32
  }
  func.func @transform_15(%arg0: i32) -> (i32, i32, i32) {
    %c0_i32 = arith.constant 0 : i32
    %c0_i32_0 = arith.constant 0 : i32
    %c0_i32_1 = arith.constant 0 : i32
    %c0_i32_2 = arith.constant 0 : i32
    return %c0_i32, %c0_i32_0, %c0_i32_1 : i32, i32, i32
  }
  func.func @transform_16(%arg0: i32) -> (i32, i32, i32) {
    %c0_i32 = arith.constant 0 : i32
    %c0_i32_0 = arith.constant 0 : i32
    %c0_i32_1 = arith.constant 0 : i32
    %c0_i32_2 = arith.constant 0 : i32
    return %c0_i32, %c0_i32_0, %c0_i32_1 : i32, i32, i32
  }
  func.func @transform_17(%arg0: i32) -> (i32, i32, i32) {
    %c0_i32 = arith.constant 0 : i32
    %c0_i32_0 = arith.constant 0 : i32
    %c0_i32_1 = arith.constant 0 : i32
    %c0_i32_2 = arith.constant 0 : i32
    return %c0_i32, %c0_i32_0, %c0_i32_1 : i32, i32, i32
  }
  func.func @transform_18(%arg0: i32) -> (i32, i32, i32) {
    %c0_i32 = arith.constant 0 : i32
    %c0_i32_0 = arith.constant 0 : i32
    %c0_i32_1 = arith.constant 0 : i32
    %c0_i32_2 = arith.constant 0 : i32
    return %c0_i32, %c0_i32_0, %c0_i32_1 : i32, i32, i32
  }
  func.func @transform_19(%arg0: i32) -> (i32, i32, i32) {
    %c0_i32 = arith.constant 0 : i32
    %c0_i32_0 = arith.constant 0 : i32
    %c0_i32_1 = arith.constant 0 : i32
    %c0_i32_2 = arith.constant 0 : i32
    return %c0_i32, %c0_i32_0, %c0_i32_1 : i32, i32, i32
  }
  func.func @transform_20(%arg0: i32) -> (i32, i32, i32) {
    %c0_i32 = arith.constant 0 : i32
    %c0_i32_0 = arith.constant 0 : i32
    %c0_i32_1 = arith.constant 0 : i32
    %c0_i32_2 = arith.constant 0 : i32
    return %c0_i32, %c0_i32_0, %c0_i32_1 : i32, i32, i32
  }
  func.func @transform_21(%arg0: i32) -> (i32, i32, i32) {
    %c0_i32 = arith.constant 0 : i32
    %c0_i32_0 = arith.constant 0 : i32
    %c0_i32_1 = arith.constant 0 : i32
    %c0_i32_2 = arith.constant 0 : i32
    return %c0_i32, %c0_i32_0, %c0_i32_1 : i32, i32, i32
  }
  func.func @transform_22(%arg0: i32) -> (i32, i32, i32) {
    %c0_i32 = arith.constant 0 : i32
    %c0_i32_0 = arith.constant 0 : i32
    %c0_i32_1 = arith.constant 0 : i32
    %c0_i32_2 = arith.constant 0 : i32
    return %c0_i32, %c0_i32_0, %c0_i32_1 : i32, i32, i32
  }
  func.func @transform_23(%arg0: i32) -> (i32, i32, i32) {
    %c0_i32 = arith.constant 0 : i32
    %c0_i32_0 = arith.constant 0 : i32
    %c0_i32_1 = arith.constant 0 : i32
    %c0_i32_2 = arith.constant 0 : i32
    return %c0_i32, %c0_i32_0, %c0_i32_1 : i32, i32, i32
  }
  func.func @transform_24(%arg0: i32) -> (i32, i32, i32) {
    %c0_i32 = arith.constant 0 : i32
    %c0_i32_0 = arith.constant 0 : i32
    %c0_i32_1 = arith.constant 0 : i32
    %c0_i32_2 = arith.constant 0 : i32
    return %c0_i32, %c0_i32_0, %c0_i32_1 : i32, i32, i32
  }
  func.func @transform_25(%arg0: i32) -> (i32, i32, i32) {
    %c0_i32 = arith.constant 0 : i32
    %c0_i32_0 = arith.constant 0 : i32
    %c0_i32_1 = arith.constant 0 : i32
    %c0_i32_2 = arith.constant 0 : i32
    return %c0_i32, %c0_i32_0, %c0_i32_1 : i32, i32, i32
  }
  func.func @transform_26(%arg0: i32) -> (i32, i32) {
    %c0_i32 = arith.constant 0 : i32
    %c0_i32_0 = arith.constant 0 : i32
    %c0_i32_1 = arith.constant 0 : i32
    return %c0_i32, %c0_i32_0 : i32, i32
  }
  func.func @transform_27(%arg0: i32) -> (i32, i32) {
    %c0_i32 = arith.constant 0 : i32
    %c0_i32_0 = arith.constant 0 : i32
    %c0_i32_1 = arith.constant 0 : i32
    return %c0_i32, %c0_i32_0 : i32, i32
  }
  func.func @transform_28(%arg0: i32) -> (i32, i32, i32) {
    %c0_i32 = arith.constant 0 : i32
    %c0_i32_0 = arith.constant 0 : i32
    %c0_i32_1 = arith.constant 0 : i32
    return %arg0, %c0_i32, %c0_i32_0 : i32, i32, i32
  }
}

</mosaic_0001>

<llo_original>
// kernel: tpu_custom_call.1
$region0: #{tpu_custom_call.1}
  #allocation0 [shape = 'u32[]', space=smem, size = 0x4, offset = 0x4, fixed_abs, tag = 'smem constant byte address 0x4 - core index']
  #allocation1 [shape = 'u32[144,128]{1,0:T(1,128)}', space=vmem, size = 0x12000, scoped, tag = 'internal scratch']
  %s0 = inlined_call_operand.hbm [shape: f32[2,8,12], index: 0, kind: input, shape index: {}]
  %s1 = inlined_call_operand.vmem [shape: f32[2,8,6], index: 1, kind: input, shape index: {}]
  %s2 = inlined_call_operand.hbm [shape: f32[2,8,8], index: 2, kind: input, shape index: {}]
  %s3 = inlined_call_operand.hbm [shape: f32[24,32], index: 3, kind: input, shape index: {}]
  %s4 = inlined_call_operand.hbm [shape: f32[12,32], index: 4, kind: input, shape index: {}]
  %s5 = inlined_call_operand.vmem [shape: f32[1,32], index: 5, kind: input, shape index: {}]
  %s6 = inlined_call_operand.hbm [shape: f32[6,32], index: 6, kind: input, shape index: {}]
  %s7 = inlined_call_operand.hbm [shape: f32[1,32], index: 7, kind: input, shape index: {}]
  %s8 = inlined_call_operand.hbm [shape: f32[8,32], index: 8, kind: input, shape index: {}]
  %s9 = inlined_call_operand.hbm [shape: f32[1,32], index: 9, kind: input, shape index: {}]
  %s10 = inlined_call_operand.vmem [shape: f32[2,32,32], index: 10, kind: input, shape index: {}]
  %s11 = inlined_call_operand.vmem [shape: f32[2,1,32], index: 11, kind: input, shape index: {}]
  %s12 = inlined_call_operand.vmem [shape: f32[2,32,32], index: 12, kind: input, shape index: {}]
  %s13 = inlined_call_operand.vmem [shape: f32[2,1,32], index: 13, kind: input, shape index: {}]
  %s14 = inlined_call_operand.vmem [shape: f32[2,32,32], index: 14, kind: input, shape index: {}]
  %s15 = inlined_call_operand.vmem [shape: f32[2,1,32], index: 15, kind: input, shape index: {}]
  %s16 = inlined_call_operand.hbm [shape: f32[2,32,32], index: 16, kind: input, shape index: {}]
  %s17 = inlined_call_operand.hbm [shape: f32[2,1,32], index: 17, kind: input, shape index: {}]
  %s18 = inlined_call_operand.hbm [shape: f32[2,32,64], index: 18, kind: input, shape index: {}]
  %s19 = inlined_call_operand.hbm [shape: f32[2,1,64], index: 19, kind: input, shape index: {}]
  %s20 = inlined_call_operand.vmem [shape: f32[2,64,32], index: 20, kind: input, shape index: {}]
  %s21 = inlined_call_operand.vmem [shape: f32[2,1,32], index: 21, kind: input, shape index: {}]
  %s22 = inlined_call_operand.vmem [shape: f32[2,1,32], index: 22, kind: input, shape index: {}]
  %s23 = inlined_call_operand.vmem [shape: f32[2,1,32], index: 23, kind: input, shape index: {}]
  %s24 = inlined_call_operand.vmem [shape: f32[2,1,32], index: 24, kind: input, shape index: {}]
  %s25 = inlined_call_operand.vmem [shape: f32[2,1,32], index: 25, kind: input, shape index: {}]
  %s26 = inlined_call_operand.vmem [shape: f32[32,128], index: 26, kind: input, shape index: {}]
  %s27 = inlined_call_operand.vmem [shape: f32[1,128], index: 27, kind: input, shape index: {}]
  %s28 = inlined_call_operand.hbm [shape: f32[2,24,128], index: 28, kind: output, shape index: {}]
  %s29 = sld [smem:[#allocation0]]
  $region193: #{tpu_custom_call.1} parent=0
    _
  %s31 = ssub.s32 1, %s29
  %s32 = scalar_select 0, %s31, %s29
  $region1: #{tpu_custom_call.1} parent=0
    #allocation2 [shape = 'u8[8192]{0}', space=vmem, size = 0x2000, scoped, tag = 'input window, operand 0']
    #allocation3 [shape = 's32[2]{0}', space=sflag, size = 0x8, scoped, tag = 'scoped memory for tpu_custom_call.1']
    #allocation4 [shape = 's32[2]{0}', space=sflag, size = 0x8, scoped, tag = 'scoped memory for tpu_custom_call.1']
    #allocation5 [shape = 'u8[8192]{0}', space=vmem, size = 0x2000, scoped, tag = 'input window, operand 2']
    #allocation6 [shape = 's32[2]{0}', space=sflag, size = 0x8, scoped, tag = 'scoped memory for tpu_custom_call.1']
    #allocation7 [shape = 'u8[12288]{0}', space=vmem, size = 0x3000, scoped, tag = 'input window, operand 3, single buffered']
    #allocation8 [shape = 'u8[8192]{0}', space=vmem, size = 0x2000, scoped, tag = 'input window, operand 4, single buffered']
    #allocation9 [shape = 's32[1]{0}', space=sflag, size = 0x4, scoped, tag = 'scoped memory for tpu_custom_call.1']
    #allocation10 [shape = 'u8[4096]{0}', space=vmem, size = 0x1000, scoped, tag = 'input window, operand 6, single buffered']
    #allocation11 [shape = 'u8[512]{0}', space=vmem, size = 0x400, scoped, tag = 'input window, operand 7, single buffered']
    #allocation12 [shape = 's32[1]{0}', space=sflag, size = 0x4, scoped, tag = 'scoped memory for tpu_custom_call.1']
    #allocation13 [shape = 'u8[4096]{0}', space=vmem, size = 0x1000, scoped, tag = 'input window, operand 8, single buffered']
    #allocation14 [shape = 'u8[512]{0}', space=vmem, size = 0x400, scoped, tag = 'input window, operand 9, single buffered']
    #allocation15 [shape = 's32[1]{0}', space=sflag, size = 0x4, scoped, tag = 'scoped memory for tpu_custom_call.1']
    #allocation16 [shape = 'u8[32768]{0}', space=vmem, size = 0x8000, scoped, tag = 'input window, operand 16, single buffered']
    #allocation17 [shape = 'u8[1024]{0}', space=vmem, size = 0x400, scoped, tag = 'input window, operand 17, single buffered']
    #allocation18 [shape = 's32[1]{0}', space=sflag, size = 0x4, scoped, tag = 'scoped memory for tpu_custom_call.1']
    #allocation19 [shape = 'u8[32768]{0}', space=vmem, size = 0x8000, scoped, tag = 'input window, operand 18, single buffered']
    #allocation20 [shape = 'u8[1024]{0}', space=vmem, size = 0x400, scoped, tag = 'input window, operand 19, single buffered']
    #allocation21 [shape = 's32[1]{0}', space=sflag, size = 0x4, scoped, tag = 'scoped memory for tpu_custom_call.1']
    #allocation22 [shape = 'u8[24576]{0}', space=vmem, size = 0x6000, scoped, tag = 'output window, operand 0']
    %33 = vsyncpa [#allocation3], 0
    %s34 = scalar_lea.sflag [#allocation3], 1
    %35 = vsyncpa %s34, 0
    %36 = vsyncpa [#allocation6], 0
    %s37 = scalar_lea.sflag [#allocation6], 1
    %38 = vsyncpa %s37, 0
    %39 = vsyncpa [#allocation9], 0
    %40 = vsyncpa [#allocation12], 0
    %41 = vsyncpa [#allocation15], 0
    %42 = vsyncpa [#allocation18], 0
    %43 = vsyncpa [#allocation21], 0
    %44 = vsyncpa [#allocation4], 0
    %s45 = scalar_lea.sflag [#allocation4], 1
    %46 = vsyncpa %s45, 0
    loop: start=0, step=1, limit=4
    $region2: #{tpu_custom_call.1} parent=1 // loop_pre_header
      _
    $region3: #{tpu_custom_call.1} parent=1 // loop_header
      %s48 = sphi 0, %s52
      %p49 = scmp.ge.s32.totalorder %s48, 4
      %s58 = sphi 0, %s60
      %s61 = sphi 0, %s58
      %s62 = sphi 0, %s61
      %s78 = sphi 0, %s62
      %s84 = sphi 0, %s86
      %s87 = sphi 0, %s84
      %s88 = sphi 0, %s87
      %s104 = sphi 0, %s88
      %s110 = sphi 0, %s112
      %s113 = sphi 0, %s110
      %s114 = sphi 0, %s113
      %s130 = sphi 0, %s114
      %s134 = sphi 0, %s134
      %s136 = sphi 0, %s134
      %s137 = sphi 0, %s136
      %s151 = sphi 0, %s137
      %s155 = sphi 0, %s155
      %s157 = sphi 0, %s155
      %s158 = sphi 0, %s157
      %s172 = sphi 0, %s158
      %s176 = sphi 0, %s176
      %s178 = sphi 0, %s176
      %s179 = sphi 0, %s178
      %s193 = sphi 0, %s179
      %s197 = sphi 0, %s197
      %s199 = sphi 0, %s197
      %s200 = sphi 0, %s199
      %s214 = sphi 0, %s200
      %s218 = sphi 0, %s218
      %s220 = sphi 0, %s218
      %s221 = sphi 0, %s220
      %s235 = sphi 0, %s221
      %s239 = sphi 0, %s239
      %s241 = sphi 0, %s239
      %s242 = sphi 0, %s241
      %s256 = sphi 0, %s242
      %s260 = sphi 0, %s260
      %s262 = sphi 0, %s260
      %s263 = sphi 0, %s262
      %s277 = sphi 0, %s263
      %s281 = sphi 0, %s281
      %s283 = sphi 0, %s281
      %s284 = sphi 0, %s283
      %s298 = sphi 0, %s284
      %s302 = sphi 0, %s302
      %s304 = sphi 0, %s302
      %s305 = sphi 0, %s304
      %s319 = sphi 0, %s305
      %s323 = sphi 0, %s323
      %s325 = sphi 0, %s323
      %s326 = sphi 0, %s325
      %s340 = sphi 0, %s326
      %s344 = sphi 0, %s344
      %s346 = sphi 0, %s344
      %s347 = sphi 0, %s346
      %s361 = sphi 0, %s347
      %s365 = sphi 0, %s365
      %s367 = sphi 0, %s365
      %s368 = sphi 0, %s367
      %s382 = sphi 0, %s368
      %s386 = sphi 0, %s386
      %s388 = sphi 0, %s386
      %s389 = sphi 0, %s388
      %s403 = sphi 0, %s389
      %s407 = sphi 0, %s407
      %s409 = sphi 0, %s407
      %s410 = sphi 0, %s409
      %s424 = sphi 0, %s410
      %s428 = sphi 0, %s428
      %s430 = sphi 0, %s428
      %s431 = sphi 0, %s430
      %s445 = sphi 0, %s431
      %s449 = sphi 0, %s449
      %s451 = sphi 0, %s449
      %s452 = sphi 0, %s451
      %s466 = sphi 0, %s452
      %s470 = sphi 0, %s470
      %s472 = sphi 0, %s470
      %s473 = sphi 0, %s472
      %s487 = sphi 0, %s473
      %s491 = sphi 0, %s491
      %s493 = sphi 0, %s491
      %s494 = sphi 0, %s493
      %s508 = sphi 0, %s494
      %s512 = sphi 0, %s512
      %s514 = sphi 0, %s512
      %s515 = sphi 0, %s514
      %s529 = sphi 0, %s515
      %s533 = sphi 0, %s533
      %s535 = sphi 0, %s533
      %s536 = sphi 0, %s535
      %s550 = sphi 0, %s536
      %s554 = sphi 0, %s554
      %s556 = sphi 0, %s554
      %s557 = sphi 0, %s556
      %s571 = sphi 0, %s557
      %s575 = sphi 0, %s575
      %s577 = sphi 0, %s575
      %s578 = sphi 0, %s577
      %s592 = sphi 0, %s578
      %s596 = sphi 0, %s596
      %s598 = sphi 0, %s596
      %s599 = sphi 0, %s598
      %s613 = sphi 0, %s599
      %s617 = sphi 0, %s617
      %s619 = sphi 0, %s617
      %s620 = sphi 0, %s619
      %s634 = sphi 0, %s620
      %s638 = sphi 0, %s638
      %s640 = sphi 0, %s638
      %s641 = sphi 0, %s640
      %s655 = sphi 0, %s641
      %s661 = sphi 0, %s663
      %s664 = sphi 0, %s661
      %s665 = sphi 0, %s664
      %s681 = sphi 0, %s665
    $region4: #{tpu_custom_call.1} parent=1 // loop_header_branch
      %51 = sbr.rel (%p49) target = $region8
    $region5: #{tpu_custom_call.1} parent=1 // loop_body
      %s53 = ssub.s32 %s48, 1
      %s54 = ssub.s32 %s48, 2
      %s55 = sadd.s32 %s48, 1
      %s56 = ssub.s32 %s48, %s55
      %p57 = scmp.eq.s32.totalorder %s56, 0
      %s59 = sadd.s32 %s58, 1
      %s60 = scalar_select %p57, %s58, %s59
      %p63 = pneg %p57
      %p64 = scmp.eq.s32.totalorder %s48, 1
      %p65 = por %p63, %p64
      %p66 = scmp.ne.s32.totalorder %s58, %s61
      %p67 = scmp.eq.s32.totalorder %s48, 0
      %p68 = por %p66, %p67
      %p69 = scmp.ne.s32.totalorder %s58, %s61
      %p70 = scmp.eq.s32.totalorder %s53, 1
      %p71 = por %p69, %p70
      %p72 = scmp.ne.s32.totalorder %s61, %s62
      %p73 = scmp.eq.s32.totalorder %s53, 0
      %p74 = por %p72, %p73
      %p75 = scmp.ne.s32.totalorder %s61, %s62
      %p76 = scmp.eq.s32.totalorder %s54, 1
      %p77 = por %p75, %p76
      %p79 = scmp.ne.s32.totalorder %s62, %s78
      %p80 = scmp.eq.s32.totalorder %s54, 0
      %p81 = por %p79, %p80
      %s82 = ssub.s32 %s48, %s55
      %p83 = scmp.eq.s32.totalorder %s82, 0
      %s85 = sadd.s32 %s84, 1
      %s86 = scalar_select %p83, %s84, %s85
      %p89 = pneg %p83
      %p90 = scmp.eq.s32.totalorder %s48, 1
      %p91 = por %p89, %p90
      %p92 = scmp.ne.s32.totalorder %s84, %s87
      %p93 = scmp.eq.s32.totalorder %s48, 0
      %p94 = por %p92, %p93
      %p95 = scmp.ne.s32.totalorder %s84, %s87
      %p96 = scmp.eq.s32.totalorder %s53, 1
      %p97 = por %p95, %p96
      %p98 = scmp.ne.s32.totalorder %s87, %s88
      %p99 = scmp.eq.s32.totalorder %s53, 0
      %p100 = por %p98, %p99
      %p101 = scmp.ne.s32.totalorder %s87, %s88
      %p102 = scmp.eq.s32.totalorder %s54, 1
      %p103 = por %p101, %p102
      %p105 = scmp.ne.s32.totalorder %s88, %s104
      %p106 = scmp.eq.s32.totalorder %s54, 0
      %p107 = por %p105, %p106
      %s108 = ssub.s32 %s48, %s55
      %p109 = scmp.eq.s32.totalorder %s108, 0
      %s111 = sadd.s32 %s110, 1
      %s112 = scalar_select %p109, %s110, %s111
      %p115 = pneg %p109
      %p116 = scmp.eq.s32.totalorder %s48, 1
      %p117 = por %p115, %p116
      %p118 = scmp.ne.s32.totalorder %s110, %s113
      %p119 = scmp.eq.s32.totalorder %s48, 0
      %p120 = por %p118, %p119
      %p121 = scmp.ne.s32.totalorder %s110, %s113
      %p122 = scmp.eq.s32.totalorder %s53, 1
      %p123 = por %p121, %p122
      %p124 = scmp.ne.s32.totalorder %s113, %s114
      %p125 = scmp.eq.s32.totalorder %s53, 0
      %p126 = por %p124, %p125
      %p127 = scmp.ne.s32.totalorder %s113, %s114
      %p128 = scmp.eq.s32.totalorder %s54, 1
      %p129 = por %p127, %p128
      %p131 = scmp.ne.s32.totalorder %s114, %s130
      %p132 = scmp.eq.s32.totalorder %s54, 0
      %p133 = por %p131, %p132
      %s135 = sadd.s32 %s134, 1
      %p138 = scmp.eq.s32.totalorder %s48, 1
      %p139 = scmp.ne.s32.totalorder %s134, %s136
      %p140 = scmp.eq.s32.totalorder %s48, 0
      %p141 = por %p139, %p140
      %p142 = scmp.ne.s32.totalorder %s134, %s136
      %p143 = scmp.eq.s32.totalorder %s53, 1
      %p144 = por %p142, %p143
      %p145 = scmp.ne.s32.totalorder %s136, %s137
      %p146 = scmp.eq.s32.totalorder %s53, 0
      %p147 = por %p145, %p146
      %p148 = scmp.ne.s32.totalorder %s136, %s137
      %p149 = scmp.eq.s32.totalorder %s54, 1
      %p150 = por %p148, %p149
      %p152 = scmp.ne.s32.totalorder %s137, %s151
      %p153 = scmp.eq.s32.totalorder %s54, 0
      %p154 = por %p152, %p153
      %s156 = sadd.s32 %s155, 1
      %p159 = scmp.eq.s32.totalorder %s48, 1
      %p160 = scmp.ne.s32.totalorder %s155, %s157
      %p161 = scmp.eq.s32.totalorder %s48, 0
      %p162 = por %p160, %p161
      %p163 = scmp.ne.s32.totalorder %s155, %s157
      %p164 = scmp.eq.s32.totalorder %s53, 1
      %p165 = por %p163, %p164
      %p166 = scmp.ne.s32.totalorder %s157, %s158
      %p167 = scmp.eq.s32.totalorder %s53, 0
      %p168 = por %p166, %p167
      %p169 = scmp.ne.s32.totalorder %s157, %s158
      %p170 = scmp.eq.s32.totalorder %s54, 1
      %p171 = por %p169, %p170
      %p173 = scmp.ne.s32.totalorder %s158, %s172
      %p174 = scmp.eq.s32.totalorder %s54, 0
      %p175 = por %p173, %p174
      %s177 = sadd.s32 %s176, 1
      %p180 = scmp.eq.s32.totalorder %s48, 1
      %p181 = scmp.ne.s32.totalorder %s176, %s178
      %p182 = scmp.eq.s32.totalorder %s48, 0
      %p183 = por %p181, %p182
      %p184 = scmp.ne.s32.totalorder %s176, %s178
      %p185 = scmp.eq.s32.totalorder %s53, 1
      %p186 = por %p184, %p185
      %p187 = scmp.ne.s32.totalorder %s178, %s179
      %p188 = scmp.eq.s32.totalorder %s53, 0
      %p189 = por %p187, %p188
      %p190 = scmp.ne.s32.totalorder %s178, %s179
      %p191 = scmp.eq.s32.totalorder %s54, 1
      %p192 = por %p190, %p191
      %p194 = scmp.ne.s32.totalorder %s179, %s193
      %p195 = scmp.eq.s32.totalorder %s54, 0
      %p196 = por %p194, %p195
      %s198 = sadd.s32 %s197, 1
      %p201 = scmp.eq.s32.totalorder %s48, 1
      %p202 = scmp.ne.s32.totalorder %s197, %s199
      %p203 = scmp.eq.s32.totalorder %s48, 0
      %p204 = por %p202, %p203
      %p205 = scmp.ne.s32.totalorder %s197, %s199
      %p206 = scmp.eq.s32.totalorder %s53, 1
      %p207 = por %p205, %p206
      %p208 = scmp.ne.s32.totalorder %s199, %s200
      %p209 = scmp.eq.s32.totalorder %s53, 0
      %p210 = por %p208, %p209
      %p211 = scmp.ne.s32.totalorder %s199, %s200
      %p212 = scmp.eq.s32.totalorder %s54, 1
      %p213 = por %p211, %p212
      %p215 = scmp.ne.s32.totalorder %s200, %s214
      %p216 = scmp.eq.s32.totalorder %s54, 0
      %p217 = por %p215, %p216
      %s219 = sadd.s32 %s218, 1
      %p222 = scmp.eq.s32.totalorder %s48, 1
      %p223 = scmp.ne.s32.totalorder %s218, %s220
      %p224 = scmp.eq.s32.totalorder %s48, 0
      %p225 = por %p223, %p224
      %p226 = scmp.ne.s32.totalorder %s218, %s220
      %p227 = scmp.eq.s32.totalorder %s53, 1
      %p228 = por %p226, %p227
      %p229 = scmp.ne.s32.totalorder %s220, %s221
      %p230 = scmp.eq.s32.totalorder %s53, 0
      %p231 = por %p229, %p230
      %p232 = scmp.ne.s32.totalorder %s220, %s221
      %p233 = scmp.eq.s32.totalorder %s54, 1
      %p234 = por %p232, %p233
      %p236 = scmp.ne.s32.totalorder %s221, %s235
      %p237 = scmp.eq.s32.totalorder %s54, 0
      %p238 = por %p236, %p237
      %s240 = sadd.s32 %s239, 1
      %p243 = scmp.eq.s32.totalorder %s48, 1
      %p244 = scmp.ne.s32.totalorder %s239, %s241
      %p245 = scmp.eq.s32.totalorder %s48, 0
      %p246 = por %p244, %p245
      %p247 = scmp.ne.s32.totalorder %s239, %s241
      %p248 = scmp.eq.s32.totalorder %s53, 1
      %p249 = por %p247, %p248
      %p250 = scmp.ne.s32.totalorder %s241, %s242
      %p251 = scmp.eq.s32.totalorder %s53, 0
      %p252 = por %p250, %p251
      %p253 = scmp.ne.s32.totalorder %s241, %s242
      %p254 = scmp.eq.s32.totalorder %s54, 1
      %p255 = por %p253, %p254
      %p257 = scmp.ne.s32.totalorder %s242, %s256
      %p258 = scmp.eq.s32.totalorder %s54, 0
      %p259 = por %p257, %p258
      %s261 = sadd.s32 %s260, 1
      %p264 = scmp.eq.s32.totalorder %s48, 1
      %p265 = scmp.ne.s32.totalorder %s260, %s262
      %p266 = scmp.eq.s32.totalorder %s48, 0
      %p267 = por %p265, %p266
      %p268 = scmp.ne.s32.totalorder %s260, %s262
      %p269 = scmp.eq.s32.totalorder %s53, 1
      %p270 = por %p268, %p269
      %p271 = scmp.ne.s32.totalorder %s262, %s263
      %p272 = scmp.eq.s32.totalorder %s53, 0
      %p273 = por %p271, %p272
      %p274 = scmp.ne.s32.totalorder %s262, %s263
      %p275 = scmp.eq.s32.totalorder %s54, 1
      %p276 = por %p274, %p275
      %p278 = scmp.ne.s32.totalorder %s263, %s277
      %p279 = scmp.eq.s32.totalorder %s54, 0
      %p280 = por %p278, %p279
      %s282 = sadd.s32 %s281, 1
      %p285 = scmp.eq.s32.totalorder %s48, 1
      %p286 = scmp.ne.s32.totalorder %s281, %s283
      %p287 = scmp.eq.s32.totalorder %s48, 0
      %p288 = por %p286, %p287
      %p289 = scmp.ne.s32.totalorder %s281, %s283
      %p290 = scmp.eq.s32.totalorder %s53, 1
      %p291 = por %p289, %p290
      %p292 = scmp.ne.s32.totalorder %s283, %s284
      %p293 = scmp.eq.s32.totalorder %s53, 0
      %p294 = por %p292, %p293
      %p295 = scmp.ne.s32.totalorder %s283, %s284
      %p296 = scmp.eq.s32.totalorder %s54, 1
      %p297 = por %p295, %p296
      %p299 = scmp.ne.s32.totalorder %s284, %s298
      %p300 = scmp.eq.s32.totalorder %s54, 0
      %p301 = por %p299, %p300
      %s303 = sadd.s32 %s302, 1
      %p306 = scmp.eq.s32.totalorder %s48, 1
      %p307 = scmp.ne.s32.totalorder %s302, %s304
      %p308 = scmp.eq.s32.totalorder %s48, 0
      %p309 = por %p307, %p308
      %p310 = scmp.ne.s32.totalorder %s302, %s304
      %p311 = scmp.eq.s32.totalorder %s53, 1
      %p312 = por %p310, %p311
      %p313 = scmp.ne.s32.totalorder %s304, %s305
      %p314 = scmp.eq.s32.totalorder %s53, 0
      %p315 = por %p313, %p314
      %p316 = scmp.ne.s32.totalorder %s304, %s305
      %p317 = scmp.eq.s32.totalorder %s54, 1
      %p318 = por %p316, %p317
      %p320 = scmp.ne.s32.totalorder %s305, %s319
      %p321 = scmp.eq.s32.totalorder %s54, 0
      %p322 = por %p320, %p321
      %s324 = sadd.s32 %s323, 1
      %p327 = scmp.eq.s32.totalorder %s48, 1
      %p328 = scmp.ne.s32.totalorder %s323, %s325
      %p329 = scmp.eq.s32.totalorder %s48, 0
      %p330 = por %p328, %p329
      %p331 = scmp.ne.s32.totalorder %s323, %s325
      %p332 = scmp.eq.s32.totalorder %s53, 1
      %p333 = por %p331, %p332
      %p334 = scmp.ne.s32.totalorder %s325, %s326
      %p335 = scmp.eq.s32.totalorder %s53, 0
      %p336 = por %p334, %p335
      %p337 = scmp.ne.s32.totalorder %s325, %s326
      %p338 = scmp.eq.s32.totalorder %s54, 1
      %p339 = por %p337, %p338
      %p341 = scmp.ne.s32.totalorder %s326, %s340
      %p342 = scmp.eq.s32.totalorder %s54, 0
      %p343 = por %p341, %p342
      %s345 = sadd.s32 %s344, 1
      %p348 = scmp.eq.s32.totalorder %s48, 1
      %p349 = scmp.ne.s32.totalorder %s344, %s346
      %p350 = scmp.eq.s32.totalorder %s48, 0
      %p351 = por %p349, %p350
      %p352 = scmp.ne.s32.totalorder %s344, %s346
      %p353 = scmp.eq.s32.totalorder %s53, 1
      %p354 = por %p352, %p353
      %p355 = scmp.ne.s32.totalorder %s346, %s347
      %p356 = scmp.eq.s32.totalorder %s53, 0
      %p357 = por %p355, %p356
      %p358 = scmp.ne.s32.totalorder %s346, %s347
      %p359 = scmp.eq.s32.totalorder %s54, 1
      %p360 = por %p358, %p359
      %p362 = scmp.ne.s32.totalorder %s347, %s361
      %p363 = scmp.eq.s32.totalorder %s54, 0
      %p364 = por %p362, %p363
      %s366 = sadd.s32 %s365, 1
      %p369 = scmp.eq.s32.totalorder %s48, 1
      %p370 = scmp.ne.s32.totalorder %s365, %s367
      %p371 = scmp.eq.s32.totalorder %s48, 0
      %p372 = por %p370, %p371
      %p373 = scmp.ne.s32.totalorder %s365, %s367
      %p374 = scmp.eq.s32.totalorder %s53, 1
      %p375 = por %p373, %p374
      %p376 = scmp.ne.s32.totalorder %s367, %s368
      %p377 = scmp.eq.s32.totalorder %s53, 0
      %p378 = por %p376, %p377
      %p379 = scmp.ne.s32.totalorder %s367, %s368
      %p380 = scmp.eq.s32.totalorder %s54, 1
      %p381 = por %p379, %p380
      %p383 = scmp.ne.s32.totalorder %s368, %s382
      %p384 = scmp.eq.s32.totalorder %s54, 0
      %p385 = por %p383, %p384
      %s387 = sadd.s32 %s386, 1
      %p390 = scmp.eq.s32.totalorder %s48, 1
      %p391 = scmp.ne.s32.totalorder %s386, %s388
      %p392 = scmp.eq.s32.totalorder %s48, 0
      %p393 = por %p391, %p392
      %p394 = scmp.ne.s32.totalorder %s386, %s388
      %p395 = scmp.eq.s32.totalorder %s53, 1
      %p396 = por %p394, %p395
      %p397 = scmp.ne.s32.totalorder %s388, %s389
      %p398 = scmp.eq.s32.totalorder %s53, 0
      %p399 = por %p397, %p398
      %p400 = scmp.ne.s32.totalorder %s388, %s389
      %p401 = scmp.eq.s32.totalorder %s54, 1
      %p402 = por %p400, %p401
      %p404 = scmp.ne.s32.totalorder %s389, %s403
      %p405 = scmp.eq.s32.totalorder %s54, 0
      %p406 = por %p404, %p405
      %s408 = sadd.s32 %s407, 1
      %p411 = scmp.eq.s32.totalorder %s48, 1
      %p412 = scmp.ne.s32.totalorder %s407, %s409
      %p413 = scmp.eq.s32.totalorder %s48, 0
      %p414 = por %p412, %p413
      %p415 = scmp.ne.s32.totalorder %s407, %s409
      %p416 = scmp.eq.s32.totalorder %s53, 1
      %p417 = por %p415, %p416
      %p418 = scmp.ne.s32.totalorder %s409, %s410
      %p419 = scmp.eq.s32.totalorder %s53, 0
      %p420 = por %p418, %p419
      %p421 = scmp.ne.s32.totalorder %s409, %s410
      %p422 = scmp.eq.s32.totalorder %s54, 1
      %p423 = por %p421, %p422
      %p425 = scmp.ne.s32.totalorder %s410, %s424
      %p426 = scmp.eq.s32.totalorder %s54, 0
      %p427 = por %p425, %p426
      %s429 = sadd.s32 %s428, 1
      %p432 = scmp.eq.s32.totalorder %s48, 1
      %p433 = scmp.ne.s32.totalorder %s428, %s430
      %p434 = scmp.eq.s32.totalorder %s48, 0
      %p435 = por %p433, %p434
      %p436 = scmp.ne.s32.totalorder %s428, %s430
      %p437 = scmp.eq.s32.totalorder %s53, 1
      %p438 = por %p436, %p437
      %p439 = scmp.ne.s32.totalorder %s430, %s431
      %p440 = scmp.eq.s32.totalorder %s53, 0
      %p441 = por %p439, %p440
      %p442 = scmp.ne.s32.totalorder %s430, %s431
      %p443 = scmp.eq.s32.totalorder %s54, 1
      %p444 = por %p442, %p443
      %p446 = scmp.ne.s32.totalorder %s431, %s445
      %p447 = scmp.eq.s32.totalorder %s54, 0
      %p448 = por %p446, %p447
      %s450 = sadd.s32 %s449, 1
      %p453 = scmp.eq.s32.totalorder %s48, 1
      %p454 = scmp.ne.s32.totalorder %s449, %s451
      %p455 = scmp.eq.s32.totalorder %s48, 0
      %p456 = por %p454, %p455
      %p457 = scmp.ne.s32.totalorder %s449, %s451
      %p458 = scmp.eq.s32.totalorder %s53, 1
      %p459 = por %p457, %p458
      %p460 = scmp.ne.s32.totalorder %s451, %s452
      %p461 = scmp.eq.s32.totalorder %s53, 0
      %p462 = por %p460, %p461
      %p463 = scmp.ne.s32.totalorder %s451, %s452
      %p464 = scmp.eq.s32.totalorder %s54, 1
      %p465 = por %p463, %p464
      %p467 = scmp.ne.s32.totalorder %s452, %s466
      %p468 = scmp.eq.s32.totalorder %s54, 0
      %p469 = por %p467, %p468
      %s471 = sadd.s32 %s470, 1
      %p474 = scmp.eq.s32.totalorder %s48, 1
      %p475 = scmp.ne.s32.totalorder %s470, %s472
      %p476 = scmp.eq.s32.totalorder %s48, 0
      %p477 = por %p475, %p476
      %p478 = scmp.ne.s32.totalorder %s470, %s472
      %p479 = scmp.eq.s32.totalorder %s53, 1
      %p480 = por %p478, %p479
      %p481 = scmp.ne.s32.totalorder %s472, %s473
      %p482 = scmp.eq.s32.totalorder %s53, 0
      %p483 = por %p481, %p482
      %p484 = scmp.ne.s32.totalorder %s472, %s473
      %p485 = scmp.eq.s32.totalorder %s54, 1
      %p486 = por %p484, %p485
      %p488 = scmp.ne.s32.totalorder %s473, %s487
      %p489 = scmp.eq.s32.totalorder %s54, 0
      %p490 = por %p488, %p489
      %s492 = sadd.s32 %s491, 1
      %p495 = scmp.eq.s32.totalorder %s48, 1
      %p496 = scmp.ne.s32.totalorder %s491, %s493
      %p497 = scmp.eq.s32.totalorder %s48, 0
      %p498 = por %p496, %p497
      %p499 = scmp.ne.s32.totalorder %s491, %s493
      %p500 = scmp.eq.s32.totalorder %s53, 1
      %p501 = por %p499, %p500
      %p502 = scmp.ne.s32.totalorder %s493, %s494
      %p503 = scmp.eq.s32.totalorder %s53, 0
      %p504 = por %p502, %p503
      %p505 = scmp.ne.s32.totalorder %s493, %s494
      %p506 = scmp.eq.s32.totalorder %s54, 1
      %p507 = por %p505, %p506
      %p509 = scmp.ne.s32.totalorder %s494, %s508
      %p510 = scmp.eq.s32.totalorder %s54, 0
      %p511 = por %p509, %p510
      %s513 = sadd.s32 %s512, 1
      %p516 = scmp.eq.s32.totalorder %s48, 1
      %p517 = scmp.ne.s32.totalorder %s512, %s514
      %p518 = scmp.eq.s32.totalorder %s48, 0
      %p519 = por %p517, %p518
      %p520 = scmp.ne.s32.totalorder %s512, %s514
      %p521 = scmp.eq.s32.totalorder %s53, 1
      %p522 = por %p520, %p521
      %p523 = scmp.ne.s32.totalorder %s514, %s515
      %p524 = scmp.eq.s32.totalorder %s53, 0
      %p525 = por %p523, %p524
      %p526 = scmp.ne.s32.totalorder %s514, %s515
      %p527 = scmp.eq.s32.totalorder %s54, 1
      %p528 = por %p526, %p527
      %p530 = scmp.ne.s32.totalorder %s515, %s529
      %p531 = scmp.eq.s32.totalorder %s54, 0
      %p532 = por %p530, %p531
      %s534 = sadd.s32 %s533, 1
      %p537 = scmp.eq.s32.totalorder %s48, 1
      %p538 = scmp.ne.s32.totalorder %s533, %s535
      %p539 = scmp.eq.s32.totalorder %s48, 0
      %p540 = por %p538, %p539
      %p541 = scmp.ne.s32.totalorder %s533, %s535
      %p542 = scmp.eq.s32.totalorder %s53, 1
      %p543 = por %p541, %p542
      %p544 = scmp.ne.s32.totalorder %s535, %s536
      %p545 = scmp.eq.s32.totalorder %s53, 0
      %p546 = por %p544, %p545
      %p547 = scmp.ne.s32.totalorder %s535, %s536
      %p548 = scmp.eq.s32.totalorder %s54, 1
      %p549 = por %p547, %p548
      %p551 = scmp.ne.s32.totalorder %s536, %s550
      %p552 = scmp.eq.s32.totalorder %s54, 0
      %p553 = por %p551, %p552
      %s555 = sadd.s32 %s554, 1
      %p558 = scmp.eq.s32.totalorder %s48, 1
      %p559 = scmp.ne.s32.totalorder %s554, %s556
      %p560 = scmp.eq.s32.totalorder %s48, 0
      %p561 = por %p559, %p560
      %p562 = scmp.ne.s32.totalorder %s554, %s556
      %p563 = scmp.eq.s32.totalorder %s53, 1
      %p564 = por %p562, %p563
      %p565 = scmp.ne.s32.totalorder %s556, %s557
      %p566 = scmp.eq.s32.totalorder %s53, 0
      %p567 = por %p565, %p566
      %p568 = scmp.ne.s32.totalorder %s556, %s557
      %p569 = scmp.eq.s32.totalorder %s54, 1
      %p570 = por %p568, %p569
      %p572 = scmp.ne.s32.totalorder %s557, %s571
      %p573 = scmp.eq.s32.totalorder %s54, 0
      %p574 = por %p572, %p573
      %s576 = sadd.s32 %s575, 1
      %p579 = scmp.eq.s32.totalorder %s48, 1
      %p580 = scmp.ne.s32.totalorder %s575, %s577
      %p581 = scmp.eq.s32.totalorder %s48, 0
      %p582 = por %p580, %p581
      %p583 = scmp.ne.s32.totalorder %s575, %s577
      %p584 = scmp.eq.s32.totalorder %s53, 1
      %p585 = por %p583, %p584
      %p586 = scmp.ne.s32.totalorder %s577, %s578
      %p587 = scmp.eq.s32.totalorder %s53, 0
      %p588 = por %p586, %p587
      %p589 = scmp.ne.s32.totalorder %s577, %s578
      %p590 = scmp.eq.s32.totalorder %s54, 1
      %p591 = por %p589, %p590
      %p593 = scmp.ne.s32.totalorder %s578, %s592
      %p594 = scmp.eq.s32.totalorder %s54, 0
      %p595 = por %p593, %p594
      %s597 = sadd.s32 %s596, 1
      %p600 = scmp.eq.s32.totalorder %s48, 1
      %p601 = scmp.ne.s32.totalorder %s596, %s598
      %p602 = scmp.eq.s32.totalorder %s48, 0
      %p603 = por %p601, %p602
      %p604 = scmp.ne.s32.totalorder %s596, %s598
      %p605 = scmp.eq.s32.totalorder %s53, 1
      %p606 = por %p604, %p605
      %p607 = scmp.ne.s32.totalorder %s598, %s599
      %p608 = scmp.eq.s32.totalorder %s53, 0
      %p609 = por %p607, %p608
      %p610 = scmp.ne.s32.totalorder %s598, %s599
      %p611 = scmp.eq.s32.totalorder %s54, 1
      %p612 = por %p610, %p611
      %p614 = scmp.ne.s32.totalorder %s599, %s613
      %p615 = scmp.eq.s32.totalorder %s54, 0
      %p616 = por %p614, %p615
      %s618 = sadd.s32 %s617, 1
      %p621 = scmp.eq.s32.totalorder %s48, 1
      %p622 = scmp.ne.s32.totalorder %s617, %s619
      %p623 = scmp.eq.s32.totalorder %s48, 0
      %p624 = por %p622, %p623
      %p625 = scmp.ne.s32.totalorder %s617, %s619
      %p626 = scmp.eq.s32.totalorder %s53, 1
      %p627 = por %p625, %p626
      %p628 = scmp.ne.s32.totalorder %s619, %s620
      %p629 = scmp.eq.s32.totalorder %s53, 0
      %p630 = por %p628, %p629
      %p631 = scmp.ne.s32.totalorder %s619, %s620
      %p632 = scmp.eq.s32.totalorder %s54, 1
      %p633 = por %p631, %p632
      %p635 = scmp.ne.s32.totalorder %s620, %s634
      %p636 = scmp.eq.s32.totalorder %s54, 0
      %p637 = por %p635, %p636
      %s639 = sadd.s32 %s638, 1
      %p642 = scmp.eq.s32.totalorder %s48, 1
      %p643 = scmp.ne.s32.totalorder %s638, %s640
      %p644 = scmp.eq.s32.totalorder %s48, 0
      %p645 = por %p643, %p644
      %p646 = scmp.ne.s32.totalorder %s638, %s640
      %p647 = scmp.eq.s32.totalorder %s53, 1
      %p648 = por %p646, %p647
      %p649 = scmp.ne.s32.totalorder %s640, %s641
      %p650 = scmp.eq.s32.totalorder %s53, 0
      %p651 = por %p649, %p650
      %p652 = scmp.ne.s32.totalorder %s640, %s641
      %p653 = scmp.eq.s32.totalorder %s54, 1
      %p654 = por %p652, %p653
      %p656 = scmp.ne.s32.totalorder %s641, %s655
      %p657 = scmp.eq.s32.totalorder %s54, 0
      %p658 = por %p656, %p657
      %s659 = ssub.s32 %s48, %s55
      %p660 = scmp.eq.s32.totalorder %s659, 0
      %s662 = sadd.s32 %s661, 1
      %s663 = scalar_select %p660, %s661, %s662
      %p666 = pneg %p660
      %p667 = scmp.eq.s32.totalorder %s48, 1
      %p668 = por %p666, %p667
      %p669 = scmp.ne.s32.totalorder %s661, %s664
      %p670 = scmp.eq.s32.totalorder %s48, 0
      %p671 = por %p669, %p670
      %p672 = scmp.ne.s32.totalorder %s661, %s664
      %p673 = scmp.eq.s32.totalorder %s53, 1
      %p674 = por %p672, %p673
      %p675 = scmp.ne.s32.totalorder %s664, %s665
      %p676 = scmp.eq.s32.totalorder %s53, 0
      %p677 = por %p675, %p676
      %p678 = scmp.ne.s32.totalorder %s664, %s665
      %p679 = scmp.eq.s32.totalorder %s54, 1
      %p680 = por %p678, %p679
      %p682 = scmp.ne.s32.totalorder %s665, %s681
      %p683 = scmp.eq.s32.totalorder %s54, 0
      %p684 = por %p682, %p683
      %p685 = scmp.le.s32.totalorder 1, %s48
      %p686 = scmp.lt.s32.totalorder %s48, 3
      %p687 = pnand %p685, %p686
      %p688 = pneg %p687
      // Predicated region
      $region9: #{tpu_custom_call.1} parent=5 // pred_check
        _
      $region10: #{tpu_custom_call.1} parent=5 // pred_check_branch
        %690 = sbr.rel (%p687) target = $region12
      $region11: #{tpu_custom_call.1} parent=5 // pred_region
        %s691 = ssub.s32 %s48, 1
        // Predicated region
        $region13: #{tpu_custom_call.1} parent=11 // pred_check
          %p692 = pneg %p147
        $region14: #{tpu_custom_call.1} parent=11 // pred_check_branch
          %694 = sbr.rel (%p692) target = $region16
        $region15: #{tpu_custom_call.1} parent=11 // pred_region
          %s696 = ssub.s32 384, 384
          %697 = vsyncadd [#allocation6], %s696
          %s698 = sshll.u32 [#allocation7], 4
          %s699 = int_to_ptr.vmem [resolvable:$true] %s698
          %704 = dma.hbm_to_vmem [thread:$0]  %s3, 384, %s699, [#allocation6], 128, 128, 8
        $region16: #{tpu_custom_call.1} parent=11 // pred_fallthru
          _
        // Predicated region
        $region17: #{tpu_custom_call.1} parent=11 // pred_check
          %p705 = pneg %p168
        $region18: #{tpu_custom_call.1} parent=11 // pred_check_branch
          %707 = sbr.rel (%p705) target = $region20
        $region19: #{tpu_custom_call.1} parent=11 // pred_region
          %s709 = ssub.s32 256, 256
          %710 = vsyncadd [#allocation9], %s709
          %s711 = sshll.u32 [#allocation8], 4
          %s712 = int_to_ptr.vmem [resolvable:$true] %s711
          %717 = dma.hbm_to_vmem [thread:$0]  %s4, 256, %s712, [#allocation9], 128, 128, 8
        $region20: #{tpu_custom_call.1} parent=11 // pred_fallthru
          _
        // Predicated region
        $region21: #{tpu_custom_call.1} parent=11 // pred_check
          %p718 = pneg %p189
        $region22: #{tpu_custom_call.1} parent=11 // pred_check_branch
          %720 = sbr.rel (%p718) target = $region24
        $region23: #{tpu_custom_call.1} parent=11 // pred_region
          _
        $region24: #{tpu_custom_call.1} parent=11 // pred_fallthru
          _
        // Predicated region
        $region25: #{tpu_custom_call.1} parent=11 // pred_check
          %p721 = pneg %p210
        $region26: #{tpu_custom_call.1} parent=11 // pred_check_branch
          %723 = sbr.rel (%p721) target = $region28
        $region27: #{tpu_custom_call.1} parent=11 // pred_region
          %s725 = ssub.s32 128, 128
          %726 = vsyncadd [#allocation9], %s725
          %s728 = sshll.u32 [#allocation10], 4
          %s729 = int_to_ptr.vmem [resolvable:$true] %s728
          %731 = dma.hbm_to_vmem [thread:$0]  %s6, 128, %s729, [#allocation9]
        $region28: #{tpu_custom_call.1} parent=11 // pred_fallthru
          _
        // Predicated region
        $region29: #{tpu_custom_call.1} parent=11 // pred_check
          %p732 = pneg %p231
        $region30: #{tpu_custom_call.1} parent=11 // pred_check_branch
          %734 = sbr.rel (%p732) target = $region32
        $region31: #{tpu_custom_call.1} parent=11 // pred_region
          %s736 = ssub.s32 16, 16
          %737 = vsyncadd [#allocation12], %s736
          %s739 = sshll.u32 [#allocation11], 4
          %s740 = int_to_ptr.vmem [resolvable:$true] %s739
          %742 = dma.hbm_to_vmem [thread:$0]  %s7, 16, %s740, [#allocation12]
        $region32: #{tpu_custom_call.1} parent=11 // pred_fallthru
          _
        // Predicated region
        $region33: #{tpu_custom_call.1} parent=11 // pred_check
          %p743 = pneg %p252
        $region34: #{tpu_custom_call.1} parent=11 // pred_check_branch
          %745 = sbr.rel (%p743) target = $region36
        $region35: #{tpu_custom_call.1} parent=11 // pred_region
          %s747 = ssub.s32 128, 128
          %748 = vsyncadd [#allocation12], %s747
          %s750 = sshll.u32 [#allocation13], 4
          %s751 = int_to_ptr.vmem [resolvable:$true] %s750
          %753 = dma.hbm_to_vmem [thread:$0]  %s8, 128, %s751, [#allocation12]
        $region36: #{tpu_custom_call.1} parent=11 // pred_fallthru
          _
        // Predicated region
        $region37: #{tpu_custom_call.1} parent=11 // pred_check
          %p754 = pneg %p273
        $region38: #{tpu_custom_call.1} parent=11 // pred_check_branch
          %756 = sbr.rel (%p754) target = $region40
        $region39: #{tpu_custom_call.1} parent=11 // pred_region
          %s758 = ssub.s32 16, 16
          %759 = vsyncadd [#allocation15], %s758
          %s761 = sshll.u32 [#allocation14], 4
          %s762 = int_to_ptr.vmem [resolvable:$true] %s761
          %764 = dma.hbm_to_vmem [thread:$0]  %s9, 16, %s762, [#allocation15]
        $region40: #{tpu_custom_call.1} parent=11 // pred_fallthru
          _
        // Predicated region
        $region41: #{tpu_custom_call.1} parent=11 // pred_check
          %p765 = pneg %p294
        $region42: #{tpu_custom_call.1} parent=11 // pred_check_branch
          %767 = sbr.rel (%p765) target = $region44
        $region43: #{tpu_custom_call.1} parent=11 // pred_region
          _
        $region44: #{tpu_custom_call.1} parent=11 // pred_fallthru
          _
        // Predicated region
        $region45: #{tpu_custom_call.1} parent=11 // pred_check
          %p768 = pneg %p315
        $region46: #{tpu_custom_call.1} parent=11 // pred_check_branch
          %770 = sbr.rel (%p768) target = $region48
        $region47: #{tpu_custom_call.1} parent=11 // pred_region
          _
        $region48: #{tpu_custom_call.1} parent=11 // pred_fallthru
          _
        // Predicated region
        $region49: #{tpu_custom_call.1} parent=11 // pred_check
          %p771 = pneg %p336
        $region50: #{tpu_custom_call.1} parent=11 // pred_check_branch
          %773 = sbr.rel (%p771) target = $region52
        $region51: #{tpu_custom_call.1} parent=11 // pred_region
          _
        $region52: #{tpu_custom_call.1} parent=11 // pred_fallthru
          _
        // Predicated region
        $region53: #{tpu_custom_call.1} parent=11 // pred_check
          %p774 = pneg %p357
        $region54: #{tpu_custom_call.1} parent=11 // pred_check_branch
          %776 = sbr.rel (%p774) target = $region56
        $region55: #{tpu_custom_call.1} parent=11 // pred_region
          _
        $region56: #{tpu_custom_call.1} parent=11 // pred_fallthru
          _
        // Predicated region
        $region57: #{tpu_custom_call.1} parent=11 // pred_check
          %p777 = pneg %p378
        $region58: #{tpu_custom_call.1} parent=11 // pred_check_branch
          %779 = sbr.rel (%p777) target = $region60
        $region59: #{tpu_custom_call.1} parent=11 // pred_region
          _
        $region60: #{tpu_custom_call.1} parent=11 // pred_fallthru
          _
        // Predicated region
        $region61: #{tpu_custom_call.1} parent=11 // pred_check
          %p780 = pneg %p399
        $region62: #{tpu_custom_call.1} parent=11 // pred_check_branch
          %782 = sbr.rel (%p780) target = $region64
        $region63: #{tpu_custom_call.1} parent=11 // pred_region
          _
        $region64: #{tpu_custom_call.1} parent=11 // pred_fallthru
          _
        // Predicated region
        $region65: #{tpu_custom_call.1} parent=11 // pred_check
          %p783 = pneg %p420
        $region66: #{tpu_custom_call.1} parent=11 // pred_check_branch
          %785 = sbr.rel (%p783) target = $region68
        $region67: #{tpu_custom_call.1} parent=11 // pred_region
          %s787 = ssub.s32 1024, 1024
          %788 = vsyncadd [#allocation15], %s787
          %s789 = sshll.u32 [#allocation16], 4
          %s790 = int_to_ptr.vmem [resolvable:$true] %s789
          %795 = dma.hbm_to_vmem [thread:$0]  %s16, 1024, %s790, [#allocation15], 128, 128, 8
        $region68: #{tpu_custom_call.1} parent=11 // pred_fallthru
          _
        // Predicated region
        $region69: #{tpu_custom_call.1} parent=11 // pred_check
          %p796 = pneg %p441
        $region70: #{tpu_custom_call.1} parent=11 // pred_check_branch
          %798 = sbr.rel (%p796) target = $region72
        $region71: #{tpu_custom_call.1} parent=11 // pred_region
          %s800 = ssub.s32 32, 32
          %801 = vsyncadd [#allocation18], %s800
          %s802 = sshll.u32 [#allocation17], 4
          %s803 = int_to_ptr.vmem [resolvable:$true] %s802
          %808 = dma.hbm_to_vmem [thread:$0]  %s17, 32, %s803, [#allocation18], 16, 16, 1
        $region72: #{tpu_custom_call.1} parent=11 // pred_fallthru
          _
        // Predicated region
        $region73: #{tpu_custom_call.1} parent=11 // pred_check
          %p809 = pneg %p462
        $region74: #{tpu_custom_call.1} parent=11 // pred_check_branch
          %811 = sbr.rel (%p809) target = $region76
        $region75: #{tpu_custom_call.1} parent=11 // pred_region
          %s813 = ssub.s32 1024, 1024
          %814 = vsyncadd [#allocation18], %s813
          %s815 = sshll.u32 [#allocation19], 4
          %s816 = int_to_ptr.vmem [resolvable:$true] %s815
          %821 = dma.hbm_to_vmem [thread:$0]  %s18, 1024, %s816, [#allocation18], 128, 128, 8
        $region76: #{tpu_custom_call.1} parent=11 // pred_fallthru
          _
        // Predicated region
        $region77: #{tpu_custom_call.1} parent=11 // pred_check
          %p822 = pneg %p483
        $region78: #{tpu_custom_call.1} parent=11 // pred_check_branch
          %824 = sbr.rel (%p822) target = $region80
        $region79: #{tpu_custom_call.1} parent=11 // pred_region
          %s826 = ssub.s32 32, 32
          %827 = vsyncadd [#allocation21], %s826
          %s828 = sshll.u32 [#allocation20], 4
          %s829 = int_to_ptr.vmem [resolvable:$true] %s828
          %834 = dma.hbm_to_vmem [thread:$0]  %s19, 32, %s829, [#allocation21], 16, 16, 1
        $region80: #{tpu_custom_call.1} parent=11 // pred_fallthru
          _
        // Predicated region
        $region81: #{tpu_custom_call.1} parent=11 // pred_check
          %p835 = pneg %p504
        $region82: #{tpu_custom_call.1} parent=11 // pred_check_branch
          %837 = sbr.rel (%p835) target = $region84
        $region83: #{tpu_custom_call.1} parent=11 // pred_region
          _
        $region84: #{tpu_custom_call.1} parent=11 // pred_fallthru
          _
        // Predicated region
        $region85: #{tpu_custom_call.1} parent=11 // pred_check
          %p838 = pneg %p525
        $region86: #{tpu_custom_call.1} parent=11 // pred_check_branch
          %840 = sbr.rel (%p838) target = $region88
        $region87: #{tpu_custom_call.1} parent=11 // pred_region
          _
        $region88: #{tpu_custom_call.1} parent=11 // pred_fallthru
          _
        // Predicated region
        $region89: #{tpu_custom_call.1} parent=11 // pred_check
          %p841 = pneg %p546
        $region90: #{tpu_custom_call.1} parent=11 // pred_check_branch
          %843 = sbr.rel (%p841) target = $region92
        $region91: #{tpu_custom_call.1} parent=11 // pred_region
          _
        $region92: #{tpu_custom_call.1} parent=11 // pred_fallthru
          _
        // Predicated region
        $region93: #{tpu_custom_call.1} parent=11 // pred_check
          %p844 = pneg %p567
        $region94: #{tpu_custom_call.1} parent=11 // pred_check_branch
          %846 = sbr.rel (%p844) target = $region96
        $region95: #{tpu_custom_call.1} parent=11 // pred_region
          _
        $region96: #{tpu_custom_call.1} parent=11 // pred_fallthru
          _
        // Predicated region
        $region97: #{tpu_custom_call.1} parent=11 // pred_check
          %p847 = pneg %p588
        $region98: #{tpu_custom_call.1} parent=11 // pred_check_branch
          %849 = sbr.rel (%p847) target = $region100
        $region99: #{tpu_custom_call.1} parent=11 // pred_region
          _
        $region100: #{tpu_custom_call.1} parent=11 // pred_fallthru
          _
        // Predicated region
        $region101: #{tpu_custom_call.1} parent=11 // pred_check
          %p850 = pneg %p609
        $region102: #{tpu_custom_call.1} parent=11 // pred_check_branch
          %852 = sbr.rel (%p850) target = $region104
        $region103: #{tpu_custom_call.1} parent=11 // pred_region
          _
        $region104: #{tpu_custom_call.1} parent=11 // pred_fallthru
          _
        // Predicated region
        $region105: #{tpu_custom_call.1} parent=11 // pred_check
          %p853 = pneg %p630
        $region106: #{tpu_custom_call.1} parent=11 // pred_check_branch
          %855 = sbr.rel (%p853) target = $region108
        $region107: #{tpu_custom_call.1} parent=11 // pred_region
          _
        $region108: #{tpu_custom_call.1} parent=11 // pred_fallthru
          _
        // Predicated region
        $region109: #{tpu_custom_call.1} parent=11 // pred_check
          %p856 = pneg %p651
        $region110: #{tpu_custom_call.1} parent=11 // pred_check_branch
          %858 = sbr.rel (%p856) target = $region112
        $region111: #{tpu_custom_call.1} parent=11 // pred_region
          _
        $region112: #{tpu_custom_call.1} parent=11 // pred_fallthru
          _
      $region12: #{tpu_custom_call.1} parent=5 // pred_fallthru
        _
      %p859 = scmp.lt.s32.totalorder %s48, 2
      // Predicated region
      $region113: #{tpu_custom_call.1} parent=5 // pred_check
        %p860 = pneg %p859
      $region114: #{tpu_custom_call.1} parent=5 // pred_check_branch
        %862 = sbr.rel (%p860) target = $region116
      $region115: #{tpu_custom_call.1} parent=5 // pred_region
        // Predicated region
        $region117: #{tpu_custom_call.1} parent=115 // pred_check
          %p863 = pneg %p68
        $region118: #{tpu_custom_call.1} parent=115 // pred_check_branch
          %865 = sbr.rel (%p863) target = $region120
        $region119: #{tpu_custom_call.1} parent=115 // pred_region
          %s866 = sand.u32 %s58, 1
          %s867 = scalar_lea.sflag [#allocation3], %s866
          %s868 = sand.u32 %s58, 1
          %s869 = smul.addr %s868, 8
          %s870 = scalar_lea.vmem [#allocation2], %s869
          %s872 = ssub.s32 128, 128
          %873 = vsyncadd %s867, %s872
          %s874 = smul.addr %s48, 128
          %s875 = scalar_lea.hbm %s0, %s874
          %s877 = sshll.u32 %s870, 4
          %s878 = int_to_ptr.vmem [resolvable:$true] %s877
          %880 = dma.hbm_to_vmem [thread:$0]  %s875, 128, %s878, %s867
        $region120: #{tpu_custom_call.1} parent=115 // pred_fallthru
          _
        // Predicated region
        $region121: #{tpu_custom_call.1} parent=115 // pred_check
          %p881 = pneg %p94
        $region122: #{tpu_custom_call.1} parent=115 // pred_check_branch
          %883 = sbr.rel (%p881) target = $region124
        $region123: #{tpu_custom_call.1} parent=115 // pred_region
          %p884 = scmp.lt.s32.totalorder %s48, 1
          %s885 = scalar_select %p884, %s48, 1
          %s886 = smul.addr %s885, 8
          %s887 = scalar_lea.vmem %s1, %s886
        $region124: #{tpu_custom_call.1} parent=115 // pred_fallthru
          _
        // Predicated region
        $region125: #{tpu_custom_call.1} parent=115 // pred_check
          %p888 = pneg %p120
        $region126: #{tpu_custom_call.1} parent=115 // pred_check_branch
          %890 = sbr.rel (%p888) target = $region128
        $region127: #{tpu_custom_call.1} parent=115 // pred_region
          %s891 = sand.u32 %s48, 1
          %s892 = scalar_lea.sflag [#allocation6], %s891
          %s893 = sand.u32 %s110, 1
          %s894 = smul.addr %s893, 8
          %s895 = scalar_lea.vmem [#allocation5], %s894
          %s897 = ssub.s32 128, 128
          %898 = vsyncadd %s892, %s897
          %s899 = smul.addr %s48, 128
          %s900 = scalar_lea.hbm %s2, %s899
          %s902 = sshll.u32 %s895, 4
          %s903 = int_to_ptr.vmem [resolvable:$true] %s902
          %905 = dma.hbm_to_vmem [thread:$0]  %s900, 128, %s903, %s892
        $region128: #{tpu_custom_call.1} parent=115 // pred_fallthru
          _
      $region116: #{tpu_custom_call.1} parent=5 // pred_fallthru
        _
      %p906 = scmp.le.s32.totalorder 1, %s48
      %p907 = scmp.lt.s32.totalorder %s48, 3
      %p908 = pnand %p906, %p907
      %p909 = pneg %p908
      // Predicated region
      $region129: #{tpu_custom_call.1} parent=5 // pred_check
        _
      $region130: #{tpu_custom_call.1} parent=5 // pred_check_branch
        %911 = sbr.rel (%p908) target = $region132
      $region131: #{tpu_custom_call.1} parent=5 // pred_region
        %s912 = ssub.s32 %s48, 1
        %s913 = sand.u32 %s61, 1
        %s914 = scalar_lea.sflag [#allocation3], %s913
        %s915 = sand.u32 %s61, 1
        %s916 = smul.addr %s915, 8
        %s917 = scalar_lea.vmem [#allocation2], %s916
        // Predicated region
        $region133: #{tpu_custom_call.1} parent=131 // pred_check
          %p918 = pneg %p74
        $region134: #{tpu_custom_call.1} parent=131 // pred_check_branch
          %920 = sbr.rel (%p918) target = $region136
        $region135: #{tpu_custom_call.1} parent=131 // pred_region
          %921 = dma.done %s914, 128
        $region136: #{tpu_custom_call.1} parent=131 // pred_fallthru
          _
        %s922 = sand.u32 %s53, 1
        %s923 = scalar_lea.sflag [#allocation6], %s922
        %s924 = sand.u32 %s113, 1
        %s925 = smul.addr %s924, 8
        %s926 = scalar_lea.vmem [#allocation5], %s925
        // Predicated region
        $region137: #{tpu_custom_call.1} parent=131 // pred_check
          %p927 = pneg %p126
        $region138: #{tpu_custom_call.1} parent=131 // pred_check_branch
          %929 = sbr.rel (%p927) target = $region140
        $region139: #{tpu_custom_call.1} parent=131 // pred_region
          %930 = dma.done %s923, 128
        $region140: #{tpu_custom_call.1} parent=131 // pred_fallthru
          _
        // Predicated region
        $region141: #{tpu_custom_call.1} parent=131 // pred_check
          %p931 = pneg %p147
        $region142: #{tpu_custom_call.1} parent=131 // pred_check_branch
          %933 = sbr.rel (%p931) target = $region144
        $region143: #{tpu_custom_call.1} parent=131 // pred_region
          %934 = dma.done [#allocation6], 384
        $region144: #{tpu_custom_call.1} parent=131 // pred_fallthru
          _
        // Predicated region
        $region145: #{tpu_custom_call.1} parent=131 // pred_check
          %p935 = pneg %p168
        $region146: #{tpu_custom_call.1} parent=131 // pred_check_branch
          %937 = sbr.rel (%p935) target = $region148
        $region147: #{tpu_custom_call.1} parent=131 // pred_region
          %938 = dma.done [#allocation9], 256
        $region148: #{tpu_custom_call.1} parent=131 // pred_fallthru
          _
        // Predicated region
        $region149: #{tpu_custom_call.1} parent=131 // pred_check
          %p939 = pneg %p210
        $region150: #{tpu_custom_call.1} parent=131 // pred_check_branch
          %941 = sbr.rel (%p939) target = $region152
        $region151: #{tpu_custom_call.1} parent=131 // pred_region
          %942 = dma.done [#allocation9], 128
        $region152: #{tpu_custom_call.1} parent=131 // pred_fallthru
          _
        // Predicated region
        $region153: #{tpu_custom_call.1} parent=131 // pred_check
          %p943 = pneg %p231
        $region154: #{tpu_custom_call.1} parent=131 // pred_check_branch
          %945 = sbr.rel (%p943) target = $region156
        $region155: #{tpu_custom_call.1} parent=131 // pred_region
          %946 = dma.done [#allocation12], 16
        $region156: #{tpu_custom_call.1} parent=131 // pred_fallthru
          _
        // Predicated region
        $region157: #{tpu_custom_call.1} parent=131 // pred_check
          %p947 = pneg %p252
        $region158: #{tpu_custom_call.1} parent=131 // pred_check_branch
          %949 = sbr.rel (%p947) target = $region160
        $region159: #{tpu_custom_call.1} parent=131 // pred_region
          %950 = dma.done [#allocation12], 128
        $region160: #{tpu_custom_call.1} parent=131 // pred_fallthru
          _
        // Predicated region
        $region161: #{tpu_custom_call.1} parent=131 // pred_check
          %p951 = pneg %p273
        $region162: #{tpu_custom_call.1} parent=131 // pred_check_branch
          %953 = sbr.rel (%p951) target = $region164
        $region163: #{tpu_custom_call.1} parent=131 // pred_region
          %954 = dma.done [#allocation15], 16
        $region164: #{tpu_custom_call.1} parent=131 // pred_fallthru
          _
        // Predicated region
        $region165: #{tpu_custom_call.1} parent=131 // pred_check
          %p955 = pneg %p420
        $region166: #{tpu_custom_call.1} parent=131 // pred_check_branch
          %957 = sbr.rel (%p955) target = $region168
        $region167: #{tpu_custom_call.1} parent=131 // pred_region
          %958 = dma.done [#allocation15], 1024
        $region168: #{tpu_custom_call.1} parent=131 // pred_fallthru
          _
        // Predicated region
        $region169: #{tpu_custom_call.1} parent=131 // pred_check
          %p959 = pneg %p441
        $region170: #{tpu_custom_call.1} parent=131 // pred_check_branch
          %961 = sbr.rel (%p959) target = $region172
        $region171: #{tpu_custom_call.1} parent=131 // pred_region
          %962 = dma.done [#allocation18], 32
        $region172: #{tpu_custom_call.1} parent=131 // pred_fallthru
          _
        // Predicated region
        $region173: #{tpu_custom_call.1} parent=131 // pred_check
          %p963 = pneg %p462
        $region174: #{tpu_custom_call.1} parent=131 // pred_check_branch
          %965 = sbr.rel (%p963) target = $region176
        $region175: #{tpu_custom_call.1} parent=131 // pred_region
          %966 = dma.done [#allocation18], 1024
        $region176: #{tpu_custom_call.1} parent=131 // pred_fallthru
          _
        // Predicated region
        $region177: #{tpu_custom_call.1} parent=131 // pred_check
          %p967 = pneg %p483
        $region178: #{tpu_custom_call.1} parent=131 // pred_check_branch
          %969 = sbr.rel (%p967) target = $region180
        $region179: #{tpu_custom_call.1} parent=131 // pred_region
          %970 = dma.done [#allocation21], 32
        $region180: #{tpu_custom_call.1} parent=131 // pred_fallthru
          _
        %s971 = sand.u32 %s61, 1
        %s972 = scalar_lea.sflag [#allocation3], %s971
        %s973 = sand.u32 %s61, 1
        %s974 = smul.addr %s973, 8
        %s975 = scalar_lea.vmem [#allocation2], %s974
        %p976 = pneg %p74
        %p977 = pneg %p71
        %p978 = scmp.lt.s32.totalorder %s53, 1
        %s979 = scalar_select %p978, %s53, 1
        %s980 = smul.addr %s979, 8
        %s981 = scalar_lea.vmem %s1, %s980
        %p982 = pneg %p100
        %p983 = pneg %p97
        %s984 = sand.u32 %s53, 1
        %s985 = scalar_lea.sflag [#allocation6], %s984
        %s986 = sand.u32 %s113, 1
        %s987 = smul.addr %s986, 8
        %s988 = scalar_lea.vmem [#allocation5], %s987
        %p989 = pneg %p126
        %p990 = pneg %p123
        %p991 = pneg %p147
        %p992 = pneg %p144
        %p993 = pneg %p168
        %p994 = pneg %p165
        %p995 = pneg %p189
        %p996 = pneg %p186
        %p997 = pneg %p210
        %p998 = pneg %p207
        %p999 = pneg %p231
        %p1000 = pneg %p228
        %p1001 = pneg %p252
        %p1002 = pneg %p249
        %p1003 = pneg %p273
        %p1004 = pneg %p270
        %p1005 = pneg %p294
        %p1006 = pneg %p291
        %p1007 = pneg %p315
        %p1008 = pneg %p312
        %p1009 = pneg %p336
        %p1010 = pneg %p333
        %p1011 = pneg %p357
        %p1012 = pneg %p354
        %p1013 = pneg %p378
        %p1014 = pneg %p375
        %p1015 = pneg %p399
        %p1016 = pneg %p396
        %p1017 = pneg %p420
        %p1018 = pneg %p417
        %p1019 = pneg %p441
        %p1020 = pneg %p438
        %p1021 = pneg %p462
        %p1022 = pneg %p459
        %p1023 = pneg %p483
        %p1024 = pneg %p480
        %p1025 = pneg %p504
        %p1026 = pneg %p501
        %p1027 = pneg %p525
        %p1028 = pneg %p522
        %p1029 = pneg %p546
        %p1030 = pneg %p543
        %p1031 = pneg %p567
        %p1032 = pneg %p564
        %p1033 = pneg %p588
        %p1034 = pneg %p585
        %p1035 = pneg %p609
        %p1036 = pneg %p606
        %p1037 = pneg %p630
        %p1038 = pneg %p627
        %p1039 = pneg %p651
        %p1040 = pneg %p648
        %p1041 = pneg %p677
        %p1042 = pneg %p674
        %s1043 = sand.u32 %s664, 1
        %s1044 = scalar_lea.sflag [#allocation4], %s1043
        %s1045 = sand.u32 %s664, 1
        %s1046 = smul.addr %s1045, 24
        %s1047 = scalar_lea.vmem [#allocation22], %s1046
        %p1048 = scmp.lt.s32.totalorder %s53, 1
        %s1049 = scalar_select %p1048, %s53, 1
        %s1050 = smul.addr %s1049, 8
        %s1051 = scalar_lea.vmem %s1, %s1050
        %v1052 = vld [vmem:[%s917] sm:$0xff]
        %v1053 = vld [vmem:[#allocation8] sm:$0xff]
        %v1054 = vld [vmem:[#allocation8 + $0x8] sm:$0xf]
        %v1055 = vld [vmem:[%s5] sm:$0x1]
        %v1057 = vlaneseq
        %v1058 = vshrl.u32 %v1057, 7
        %v1059 = vsub.s32 0, %v1058
        %v1060 = vrot.slane %v1055, %v1059
        %vm1062 = vcmask 97280
        %v1064 = vsel %vm1062, %v1052, 0
        %vm1066 = vcmask 1043456
        %v1068 = vsel %vm1066, %v1054, 0
        %1070 = vmatprep.subr.mxu0 0.0
        %1071 = vmatpush1.msra.mxu0 %v1053
        %1072 = vmatprep.subr.mxu0 0.0
        %1073 = vmatpush1.msra.mxu0 %v1068
        %1074 = vmatprep.subr.mxu0 0.0
        %1075 = vmatpush1.msra.mxu0 0.0
        %1076 = vmatprep.subr.mxu0 0.0
        %1077 = vmatpush1.msra.mxu0 0.0
        %1078 = vmatprep.subr.mxu0 0.0
        %1079 = vmatpush1.msra.mxu0 0.0
        %1080 = vmatprep.subr.mxu0 0.0
        %1081 = vmatpush1.msra.mxu0 0.0
        %1082 = vmatprep.subr.mxu0 0.0
        %1083 = vmatpush1.msra.mxu0 0.0
        %1084 = vmatprep.subr.mxu0 0.0
        %1085 = vmatpush1.msra.mxu0 0.0
        %1086 = vmatprep.subr.mxu0 0.0
        %1087 = vmatpush1.msra.mxu0 0.0
        %1088 = vmatprep.subr.mxu0 0.0
        %1089 = vmatpush1.msra.mxu0 0.0
        %1090 = vmatprep.subr.mxu0 0.0
        %1091 = vmatpush1.msra.mxu0 0.0
        %1092 = vmatprep.subr.mxu0 0.0
        %1093 = vmatpush1.msra.mxu0 0.0
        %1094 = vmatprep.subr.mxu0 0.0
        %1095 = vmatpush1.msra.mxu0 0.0
        %1096 = vmatprep.subr.mxu0 0.0
        %1097 = vmatpush1.msra.mxu0 0.0
        %1098 = vmatprep.subr.mxu0 0.0
        %1099 = vmatpush1.msra.mxu0 0.0
        %1100 = vmatprep.subr.mxu0 0.0
        %1101 = vmatpush1.msra.mxu0 0.0
        %1102 = vmatprep.subr.mxu0 0.0
        %1103 = vmatpush1.msra.mxu0 0.0
        %1104 = vmatprep.subr.mxu0 0.0
        %1105 = vmatpush1.msra.mxu0 0.0
        %1106 = vmatprep.subr.mxu0 0.0
        %1107 = vmatpush1.msra.mxu0 0.0
        %1108 = vmatprep.subr.mxu0 0.0
        %1109 = vmatpush1.msra.mxu0 0.0
        %1110 = vmatprep.subr.mxu0 0.0
        %1111 = vmatpush1.msra.mxu0 0.0
        %1112 = vmatprep.subr.mxu0 0.0
        %1113 = vmatpush1.msra.mxu0 0.0
        %1114 = vmatprep.subr.mxu0 0.0
        %1115 = vmatpush1.msra.mxu0 0.0
        %1116 = vmatprep.subr.mxu0 0.0
        %1117 = vmatpush1.msra.mxu0 0.0
        %1118 = vmatprep.subr.mxu0 0.0
        %1119 = vmatpush1.msra.mxu0 0.0
        %1120 = vmatprep.subr.mxu0 0.0
        %1121 = vmatpush1.msra.mxu0 0.0
        %1122 = vmatprep.subr.mxu0 0.0
        %1123 = vmatpush1.msra.mxu0 0.0
        %1124 = vmatprep.subr.mxu0 0.0
        %1125 = vmatpush1.msra.mxu0 0.0
        %1126 = vmatprep.subr.mxu0 0.0
        %1127 = vmatpush1.msra.mxu0 0.0
        %1128 = vmatprep.subr.mxu0 0.0
        %1129 = vmatpush1.msra.mxu0 0.0
        %1130 = vmatprep.subr.mxu0 0.0
        %1131 = vmatpush1.msra.mxu0 0.0
        %1132 = vmatprep.subr.mxu0 0.0
        %1133 = vmatpush1.msra.mxu0 0.0
        %1134 = vmatprep.mubr.f32.mxu0 0.0
        %1135 = vmatmul.mubr.f32.gmra.mrb[0].mxu0 %v1064
        %v1136 = vpop.f32.mrb[0].mxu0
        %v1137 = vadd.f32 %v1060, %v1136
        %v1138 = vpop.f32.mrb[0].mxu0
        %1139 = vdwg.mxu0
        %v1140 = vld [vmem:[%s1051] sm:$0xff]
        %v1141 = vld [vmem:[#allocation10] sm:$0x3f]
        %v1142 = vld [vmem:[#allocation11] sm:$0x1]
        %v1144 = vlaneseq
        %v1145 = vshrl.u32 %v1144, 7
        %v1146 = vsub.s32 0, %v1145
        %v1147 = vrot.slane %v1142, %v1146
        %vm1149 = vcmask 48128
        %v1151 = vsel %vm1149, %v1140, 0
        %vm1153 = vcmask 1045504
        %v1155 = vsel %vm1153, %v1141, 0
        %1157 = vmatprep.subr.mxu0 0.0
        %1158 = vmatpush1.msra.mxu0 %v1155
        %1159 = vmatprep.subr.mxu0 0.0
        %1160 = vmatpush1.msra.mxu0 0.0
        %1161 = vmatprep.subr.mxu0 0.0
        %1162 = vmatpush1.msra.mxu0 0.0
        %1163 = vmatprep.subr.mxu0 0.0
        %1164 = vmatpush1.msra.mxu0 0.0
        %1165 = vmatprep.subr.mxu0 0.0
        %1166 = vmatpush1.msra.mxu0 0.0
        %1167 = vmatprep.subr.mxu0 0.0
        %1168 = vmatpush1.msra.mxu0 0.0
        %1169 = vmatprep.subr.mxu0 0.0
        %1170 = vmatpush1.msra.mxu0 0.0
        %1171 = vmatprep.subr.mxu0 0.0
        %1172 = vmatpush1.msra.mxu0 0.0
        %1173 = vmatprep.subr.mxu0 0.0
        %1174 = vmatpush1.msra.mxu0 0.0
        %1175 = vmatprep.subr.mxu0 0.0
        %1176 = vmatpush1.msra.mxu0 0.0
        %1177 = vmatprep.subr.mxu0 0.0
        %1178 = vmatpush1.msra.mxu0 0.0
        %1179 = vmatprep.subr.mxu0 0.0
        %1180 = vmatpush1.msra.mxu0 0.0
        %1181 = vmatprep.subr.mxu0 0.0
        %1182 = vmatpush1.msra.mxu0 0.0
        %1183 = vmatprep.subr.mxu0 0.0
        %1184 = vmatpush1.msra.mxu0 0.0
        %1185 = vmatprep.subr.mxu0 0.0
        %1186 = vmatpush1.msra.mxu0 0.0
        %1187 = vmatprep.subr.mxu0 0.0
        %1188 = vmatpush1.msra.mxu0 0.0
        %1189 = vmatprep.subr.mxu0 0.0
        %1190 = vmatpush1.msra.mxu0 0.0
        %1191 = vmatprep.subr.mxu0 0.0
        %1192 = vmatpush1.msra.mxu0 0.0
        %1193 = vmatprep.subr.mxu0 0.0
        %1194 = vmatpush1.msra.mxu0 0.0
        %1195 = vmatprep.subr.mxu0 0.0
        %1196 = vmatpush1.msra.mxu0 0.0
        %1197 = vmatprep.subr.mxu0 0.0
        %1198 = vmatpush1.msra.mxu0 0.0
        %1199 = vmatprep.subr.mxu0 0.0
        %1200 = vmatpush1.msra.mxu0 0.0
        %1201 = vmatprep.subr.mxu0 0.0
        %1202 = vmatpush1.msra.mxu0 0.0
        %1203 = vmatprep.subr.mxu0 0.0
        %1204 = vmatpush1.msra.mxu0 0.0
        %1205 = vmatprep.subr.mxu0 0.0
        %1206 = vmatpush1.msra.mxu0 0.0
        %1207 = vmatprep.subr.mxu0 0.0
        %1208 = vmatpush1.msra.mxu0 0.0
        %1209 = vmatprep.subr.mxu0 0.0
        %1210 = vmatpush1.msra.mxu0 0.0
        %1211 = vmatprep.subr.mxu0 0.0
        %1212 = vmatpush1.msra.mxu0 0.0
        %1213 = vmatprep.subr.mxu0 0.0
        %1214 = vmatpush1.msra.mxu0 0.0
        %1215 = vmatprep.subr.mxu0 0.0
        %1216 = vmatpush1.msra.mxu0 0.0
        %1217 = vmatprep.subr.mxu0 0.0
        %1218 = vmatpush1.msra.mxu0 0.0
        %1219 = vmatprep.subr.mxu0 0.0
        %1220 = vmatpush1.msra.mxu0 0.0
        %1221 = vmatprep.mubr.f32.mxu0 0.0
        %1222 = vmatmul.mubr.f32.gmra.mrb[0].mxu0 %v1151
        %v1223 = vpop.f32.mrb[0].mxu0
        %v1224 = vadd.f32 %v1147, %v1223
        %v1225 = vpop.f32.mrb[0].mxu0
        %1226 = vdwg.mxu0
        %v1227 = vld [vmem:[%s926] sm:$0xff]
        %v1228 = vld [vmem:[#allocation13] sm:$0xff]
        %v1229 = vld [vmem:[#allocation14] sm:$0x1]
        %v1231 = vlaneseq
        %v1232 = vshrl.u32 %v1231, 7
        %v1233 = vsub.s32 0, %v1232
        %v1234 = vrot.slane %v1229, %v1233
        %vm1236 = vcmask 64512
        %v1238 = vsel %vm1236, %v1227, 0
        %1240 = vmatprep.subr.mxu0 0.0
        %1241 = vmatpush1.msra.mxu0 %v1228
        %1242 = vmatprep.subr.mxu0 0.0
        %1243 = vmatpush1.msra.mxu0 0.0
        %1244 = vmatprep.subr.mxu0 0.0
        %1245 = vmatpush1.msra.mxu0 0.0
        %1246 = vmatprep.subr.mxu0 0.0
        %1247 = vmatpush1.msra.mxu0 0.0
        %1248 = vmatprep.subr.mxu0 0.0
        %1249 = vmatpush1.msra.mxu0 0.0
        %1250 = vmatprep.subr.mxu0 0.0
        %1251 = vmatpush1.msra.mxu0 0.0
        %1252 = vmatprep.subr.mxu0 0.0
        %1253 = vmatpush1.msra.mxu0 0.0
        %1254 = vmatprep.subr.mxu0 0.0
        %1255 = vmatpush1.msra.mxu0 0.0
        %1256 = vmatprep.subr.mxu0 0.0
        %1257 = vmatpush1.msra.mxu0 0.0
        %1258 = vmatprep.subr.mxu0 0.0
        %1259 = vmatpush1.msra.mxu0 0.0
        %1260 = vmatprep.subr.mxu0 0.0
        %1261 = vmatpush1.msra.mxu0 0.0
        %1262 = vmatprep.subr.mxu0 0.0
        %1263 = vmatpush1.msra.mxu0 0.0
        %1264 = vmatprep.subr.mxu0 0.0
        %1265 = vmatpush1.msra.mxu0 0.0
        %1266 = vmatprep.subr.mxu0 0.0
        %1267 = vmatpush1.msra.mxu0 0.0
        %1268 = vmatprep.subr.mxu0 0.0
        %1269 = vmatpush1.msra.mxu0 0.0
        %1270 = vmatprep.subr.mxu0 0.0
        %1271 = vmatpush1.msra.mxu0 0.0
        %1272 = vmatprep.subr.mxu0 0.0
        %1273 = vmatpush1.msra.mxu0 0.0
        %1274 = vmatprep.subr.mxu0 0.0
        %1275 = vmatpush1.msra.mxu0 0.0
        %1276 = vmatprep.subr.mxu0 0.0
        %1277 = vmatpush1.msra.mxu0 0.0
        %1278 = vmatprep.subr.mxu0 0.0
        %1279 = vmatpush1.msra.mxu0 0.0
        %1280 = vmatprep.subr.mxu0 0.0
        %1281 = vmatpush1.msra.mxu0 0.0
        %1282 = vmatprep.subr.mxu0 0.0
        %1283 = vmatpush1.msra.mxu0 0.0
        %1284 = vmatprep.subr.mxu0 0.0
        %1285 = vmatpush1.msra.mxu0 0.0
        %1286 = vmatprep.subr.mxu0 0.0
        %1287 = vmatpush1.msra.mxu0 0.0
        %1288 = vmatprep.subr.mxu0 0.0
        %1289 = vmatpush1.msra.mxu0 0.0
        %1290 = vmatprep.subr.mxu0 0.0
        %1291 = vmatpush1.msra.mxu0 0.0
        %1292 = vmatprep.subr.mxu0 0.0
        %1293 = vmatpush1.msra.mxu0 0.0
        %1294 = vmatprep.subr.mxu0 0.0
        %1295 = vmatpush1.msra.mxu0 0.0
        %1296 = vmatprep.subr.mxu0 0.0
        %1297 = vmatpush1.msra.mxu0 0.0
        %1298 = vmatprep.subr.mxu0 0.0
        %1299 = vmatpush1.msra.mxu0 0.0
        %1300 = vmatprep.subr.mxu0 0.0
        %1301 = vmatpush1.msra.mxu0 0.0
        %1302 = vmatprep.subr.mxu0 0.0
        %1303 = vmatpush1.msra.mxu0 0.0
        %1304 = vmatprep.mubr.f32.mxu0 0.0
        %1305 = vmatmul.mubr.f32.gmra.mrb[0].mxu0 %v1238
        %v1306 = vpop.f32.mrb[0].mxu0
        %v1307 = vadd.f32 %v1234, %v1306
        %v1308 = vpop.f32.mrb[0].mxu0
        %1309 = vdwg.mxu0
        %v1310 = vld [vmem:[#allocation7] sm:$0xff]
        %v1311 = vld [vmem:[#allocation7 + $0x8] sm:$0xff]
        %v1312 = vld [vmem:[#allocation7 + $0x10] sm:$0xff]
        %v1313 = vadd.f32 %v1137, %v1310
        %v1314 = vadd.f32 %v1224, %v1311
        %v1315 = vadd.f32 %v1307, %v1312
        %v1316 = vlaneseq
        %v1317 = vand.u32 %v1316, 127
        %vm1318 = vcmp.ge.s32.totalorder %v1317, 0
        %vm1319 = vcmp.lt.s32.totalorder %v1317, 8
        %vm1320 = vmand %vm1318, %vm1319
        %v1321 = vsel %vm1320, 1, 0
        %v1322 = vcvt.s32.f32 %v1321
        %vm1323 = vcmp.ge.s32.totalorder %v1317, 8
        %vm1324 = vcmp.lt.s32.totalorder %v1317, 16
        %vm1325 = vmand %vm1323, %vm1324
        %v1326 = vsel %vm1325, 1, 0
        %v1327 = vcvt.s32.f32 %v1326
        %vm1328 = vcmp.ge.s32.totalorder %v1317, 16
        %vm1329 = vcmp.lt.s32.totalorder %v1317, 24
        %vm1330 = vmand %vm1328, %vm1329
        %v1331 = vsel %vm1330, 1, 0
        %v1332 = vcvt.s32.f32 %v1331
        %vm1333 = vcmp.ge.s32.totalorder %v1317, 24
        %vm1334 = vcmp.lt.s32.totalorder %v1317, 32
        %vm1335 = vmand %vm1333, %vm1334
        %v1336 = vsel %vm1335, 1, 0
        %v1337 = vcvt.s32.f32 %v1336
        %v1338 = vld [vmem:[%s10] sm:$0xff]
        %v1339 = vld [vmem:[%s10 + $0x8] sm:$0xff]
        %v1340 = vld [vmem:[%s10 + $0x10] sm:$0xff]
        %v1341 = vld [vmem:[%s10 + $0x18] sm:$0xff]
        %v1342 = vld [vmem:[%s11] sm:$0x1]
        %v1344 = vlaneseq
        %v1345 = vshrl.u32 %v1344, 7
        %v1346 = vsub.s32 0, %v1345
        %v1347 = vrot.slane %v1342, %v1346
        %vm1349 = vcmask 261120
        %v1351 = vsel %vm1349, %v1313, 0
        %v1354 = vsel %vm1349, %v1314, 0
        %v1357 = vsel %vm1349, %v1315, 0
        %1359 = vmatprep.subr.mxu0 0.0
        %1360 = vmatpush1.msra.mxu0 %v1338
        %1361 = vmatprep.subr.mxu0 0.0
        %1362 = vmatpush1.msra.mxu0 %v1339
        %1363 = vmatprep.subr.mxu0 0.0
        %1364 = vmatpush1.msra.mxu0 %v1340
        %1365 = vmatprep.subr.mxu0 0.0
        %1366 = vmatpush1.msra.mxu0 %v1341
        %1367 = vmatprep.subr.mxu0 0.0
        %1368 = vmatpush1.msra.mxu0 0.0
        %1369 = vmatprep.subr.mxu0 0.0
        %1370 = vmatpush1.msra.mxu0 0.0
        %1371 = vmatprep.subr.mxu0 0.0
        %1372 = vmatpush1.msra.mxu0 0.0
        %1373 = vmatprep.subr.mxu0 0.0
        %1374 = vmatpush1.msra.mxu0 0.0
        %1375 = vmatprep.subr.mxu0 0.0
        %1376 = vmatpush1.msra.mxu0 0.0
        %1377 = vmatprep.subr.mxu0 0.0
        %1378 = vmatpush1.msra.mxu0 0.0
        %1379 = vmatprep.subr.mxu0 0.0
        %1380 = vmatpush1.msra.mxu0 0.0
        %1381 = vmatprep.subr.mxu0 0.0
        %1382 = vmatpush1.msra.mxu0 0.0
        %1383 = vmatprep.subr.mxu0 0.0
        %1384 = vmatpush1.msra.mxu0 0.0
        %1385 = vmatprep.subr.mxu0 0.0
        %1386 = vmatpush1.msra.mxu0 0.0
        %1387 = vmatprep.subr.mxu0 0.0
        %1388 = vmatpush1.msra.mxu0 0.0
        %1389 = vmatprep.subr.mxu0 0.0
        %1390 = vmatpush1.msra.mxu0 0.0
        %1391 = vmatprep.subr.mxu0 0.0
        %1392 = vmatpush1.msra.mxu0 0.0
        %1393 = vmatprep.subr.mxu0 0.0
        %1394 = vmatpush1.msra.mxu0 0.0
        %1395 = vmatprep.subr.mxu0 0.0
        %1396 = vmatpush1.msra.mxu0 0.0
        %1397 = vmatprep.subr.mxu0 0.0
        %1398 = vmatpush1.msra.mxu0 0.0
        %1399 = vmatprep.subr.mxu0 0.0
        %1400 = vmatpush1.msra.mxu0 0.0
        %1401 = vmatprep.subr.mxu0 0.0
        %1402 = vmatpush1.msra.mxu0 0.0
        %1403 = vmatprep.subr.mxu0 0.0
        %1404 = vmatpush1.msra.mxu0 0.0
        %1405 = vmatprep.subr.mxu0 0.0
        %1406 = vmatpush1.msra.mxu0 0.0
        %1407 = vmatprep.subr.mxu0 0.0
        %1408 = vmatpush1.msra.mxu0 0.0
        %1409 = vmatprep.subr.mxu0 0.0
        %1410 = vmatpush1.msra.mxu0 0.0
        %1411 = vmatprep.subr.mxu0 0.0
        %1412 = vmatpush1.msra.mxu0 0.0
        %1413 = vmatprep.subr.mxu0 0.0
        %1414 = vmatpush1.msra.mxu0 0.0
        %1415 = vmatprep.subr.mxu0 0.0
        %1416 = vmatpush1.msra.mxu0 0.0
        %1417 = vmatprep.subr.mxu0 0.0
        %1418 = vmatpush1.msra.mxu0 0.0
        %1419 = vmatprep.subr.mxu0 0.0
        %1420 = vmatpush1.msra.mxu0 0.0
        %1421 = vmatprep.subr.mxu0 0.0
        %1422 = vmatpush1.msra.mxu0 0.0
        %1423 = vmatprep.mubr.f32.mxu0 0.0
        %1424 = vmatmul.mubr.f32.gmra.mrb[0].mxu0 %v1351
        %v1425 = vpop.f32.mrb[0].mxu0
        %v1426 = vadd.f32 %v1347, %v1425
        %v1427 = vpop.f32.mrb[0].mxu0
        %1428 = vmatprep.mubr.f32.mxu0 0.0
        %1429 = vmatmul.mubr.f32.gmra.mrb[0].mxu0 %v1354
        %v1430 = vpop.f32.mrb[0].mxu0
        %v1431 = vadd.f32 %v1347, %v1430
        %v1432 = vpop.f32.mrb[0].mxu0
        %1433 = vmatprep.mubr.f32.mxu0 0.0
        %1434 = vmatmul.mubr.f32.gmra.mrb[0].mxu0 %v1357
        %v1435 = vpop.f32.mrb[0].mxu0
        %v1436 = vadd.f32 %v1347, %v1435
        %v1437 = vpop.f32.mrb[0].mxu0
        %1438 = vdwg.mxu0
        %v1439 = vmul.f32 %v1426, 0.35355338
        %v1440 = vmul.f32 %v1431, 0.35355338
        %v1441 = vmul.f32 %v1436, 0.35355338
        %v1442 = vld [vmem:[%s12] sm:$0xff]
        %v1443 = vld [vmem:[%s12 + $0x8] sm:$0xff]
        %v1444 = vld [vmem:[%s12 + $0x10] sm:$0xff]
        %v1445 = vld [vmem:[%s12 + $0x18] sm:$0xff]
        %v1446 = vld [vmem:[%s13] sm:$0x1]
        %v1448 = vlaneseq
        %v1449 = vshrl.u32 %v1448, 7
        %v1450 = vsub.s32 0, %v1449
        %v1451 = vrot.slane %v1446, %v1450
        %1453 = vmatprep.subr.mxu0 0.0
        %1454 = vmatpush1.msra.mxu0 %v1442
        %1455 = vmatprep.subr.mxu0 0.0
        %1456 = vmatpush1.msra.mxu0 %v1443
        %1457 = vmatprep.subr.mxu0 0.0
        %1458 = vmatpush1.msra.mxu0 %v1444
        %1459 = vmatprep.subr.mxu0 0.0
        %1460 = vmatpush1.msra.mxu0 %v1445
        %1461 = vmatprep.subr.mxu0 0.0
        %1462 = vmatpush1.msra.mxu0 0.0
        %1463 = vmatprep.subr.mxu0 0.0
        %1464 = vmatpush1.msra.mxu0 0.0
        %1465 = vmatprep.subr.mxu0 0.0
        %1466 = vmatpush1.msra.mxu0 0.0
        %1467 = vmatprep.subr.mxu0 0.0
        %1468 = vmatpush1.msra.mxu0 0.0
        %1469 = vmatprep.subr.mxu0 0.0
        %1470 = vmatpush1.msra.mxu0 0.0
        %1471 = vmatprep.subr.mxu0 0.0
        %1472 = vmatpush1.msra.mxu0 0.0
        %1473 = vmatprep.subr.mxu0 0.0
        %1474 = vmatpush1.msra.mxu0 0.0
        %1475 = vmatprep.subr.mxu0 0.0
        %1476 = vmatpush1.msra.mxu0 0.0
        %1477 = vmatprep.subr.mxu0 0.0
        %1478 = vmatpush1.msra.mxu0 0.0
        %1479 = vmatprep.subr.mxu0 0.0
        %1480 = vmatpush1.msra.mxu0 0.0
        %1481 = vmatprep.subr.mxu0 0.0
        %1482 = vmatpush1.msra.mxu0 0.0
        %1483 = vmatprep.subr.mxu0 0.0
        %1484 = vmatpush1.msra.mxu0 0.0
        %1485 = vmatprep.subr.mxu0 0.0
        %1486 = vmatpush1.msra.mxu0 0.0
        %1487 = vmatprep.subr.mxu0 0.0
        %1488 = vmatpush1.msra.mxu0 0.0
        %1489 = vmatprep.subr.mxu0 0.0
        %1490 = vmatpush1.msra.mxu0 0.0
        %1491 = vmatprep.subr.mxu0 0.0
        %1492 = vmatpush1.msra.mxu0 0.0
        %1493 = vmatprep.subr.mxu0 0.0
        %1494 = vmatpush1.msra.mxu0 0.0
        %1495 = vmatprep.subr.mxu0 0.0
        %1496 = vmatpush1.msra.mxu0 0.0
        %1497 = vmatprep.subr.mxu0 0.0
        %1498 = vmatpush1.msra.mxu0 0.0
        %1499 = vmatprep.subr.mxu0 0.0
        %1500 = vmatpush1.msra.mxu0 0.0
        %1501 = vmatprep.subr.mxu0 0.0
        %1502 = vmatpush1.msra.mxu0 0.0
        %1503 = vmatprep.subr.mxu0 0.0
        %1504 = vmatpush1.msra.mxu0 0.0
        %1505 = vmatprep.subr.mxu0 0.0
        %1506 = vmatpush1.msra.mxu0 0.0
        %1507 = vmatprep.subr.mxu0 0.0
        %1508 = vmatpush1.msra.mxu0 0.0
        %1509 = vmatprep.subr.mxu0 0.0
        %1510 = vmatpush1.msra.mxu0 0.0
        %1511 = vmatprep.subr.mxu0 0.0
        %1512 = vmatpush1.msra.mxu0 0.0
        %1513 = vmatprep.subr.mxu0 0.0
        %1514 = vmatpush1.msra.mxu0 0.0
        %1515 = vmatprep.subr.mxu0 0.0
        %1516 = vmatpush1.msra.mxu0 0.0
        %1517 = vmatprep.mubr.f32.mxu0 0.0
        %1518 = vmatmul.mubr.f32.gmra.mrb[0].mxu0 %v1351
        %v1519 = vpop.f32.mrb[0].mxu0
        %v1520 = vadd.f32 %v1451, %v1519
        %v1521 = vpop.f32.mrb[0].mxu0
        %1522 = vmatprep.mubr.f32.mxu0 0.0
        %1523 = vmatmul.mubr.f32.gmra.mrb[0].mxu0 %v1354
        %v1524 = vpop.f32.mrb[0].mxu0
        %v1525 = vadd.f32 %v1451, %v1524
        %v1526 = vpop.f32.mrb[0].mxu0
        %1527 = vmatprep.mubr.f32.mxu0 0.0
        %1528 = vmatmul.mubr.f32.gmra.mrb[0].mxu0 %v1357
        %v1529 = vpop.f32.mrb[0].mxu0
        %v1530 = vadd.f32 %v1451, %v1529
        %v1531 = vpop.f32.mrb[0].mxu0
        %1532 = vdwg.mxu0
        %v1533 = vld [vmem:[%s14] sm:$0xff]
        %v1534 = vld [vmem:[%s14 + $0x8] sm:$0xff]
        %v1535 = vld [vmem:[%s14 + $0x10] sm:$0xff]
        %v1536 = vld [vmem:[%s14 + $0x18] sm:$0xff]
        %v1537 = vld [vmem:[%s15] sm:$0x1]
        %v1539 = vlaneseq
        %v1540 = vshrl.u32 %v1539, 7
        %v1541 = vsub.s32 0, %v1540
        %v1542 = vrot.slane %v1537, %v1541
        %1544 = vmatprep.subr.mxu0 0.0
        %1545 = vmatpush1.msra.mxu0 %v1533
        %1546 = vmatprep.subr.mxu0 0.0
        %1547 = vmatpush1.msra.mxu0 %v1534
        %1548 = vmatprep.subr.mxu0 0.0
        %1549 = vmatpush1.msra.mxu0 %v1535
        %1550 = vmatprep.subr.mxu0 0.0
        %1551 = vmatpush1.msra.mxu0 %v1536
        %1552 = vmatprep.subr.mxu0 0.0
        %1553 = vmatpush1.msra.mxu0 0.0
        %1554 = vmatprep.subr.mxu0 0.0
        %1555 = vmatpush1.msra.mxu0 0.0
        %1556 = vmatprep.subr.mxu0 0.0
        %1557 = vmatpush1.msra.mxu0 0.0
        %1558 = vmatprep.subr.mxu0 0.0
        %1559 = vmatpush1.msra.mxu0 0.0
        %1560 = vmatprep.subr.mxu0 0.0
        %1561 = vmatpush1.msra.mxu0 0.0
        %1562 = vmatprep.subr.mxu0 0.0
        %1563 = vmatpush1.msra.mxu0 0.0
        %1564 = vmatprep.subr.mxu0 0.0
        %1565 = vmatpush1.msra.mxu0 0.0
        %1566 = vmatprep.subr.mxu0 0.0
        %1567 = vmatpush1.msra.mxu0 0.0
        %1568 = vmatprep.subr.mxu0 0.0
        %1569 = vmatpush1.msra.mxu0 0.0
        %1570 = vmatprep.subr.mxu0 0.0
        %1571 = vmatpush1.msra.mxu0 0.0
        %1572 = vmatprep.subr.mxu0 0.0
        %1573 = vmatpush1.msra.mxu0 0.0
        %1574 = vmatprep.subr.mxu0 0.0
        %1575 = vmatpush1.msra.mxu0 0.0
        %1576 = vmatprep.subr.mxu0 0.0
        %1577 = vmatpush1.msra.mxu0 0.0
        %1578 = vmatprep.subr.mxu0 0.0
        %1579 = vmatpush1.msra.mxu0 0.0
        %1580 = vmatprep.subr.mxu0 0.0
        %1581 = vmatpush1.msra.mxu0 0.0
        %1582 = vmatprep.subr.mxu0 0.0
        %1583 = vmatpush1.msra.mxu0 0.0
        %1584 = vmatprep.subr.mxu0 0.0
        %1585 = vmatpush1.msra.mxu0 0.0
        %1586 = vmatprep.subr.mxu0 0.0
        %1587 = vmatpush1.msra.mxu0 0.0
        %1588 = vmatprep.subr.mxu0 0.0
        %1589 = vmatpush1.msra.mxu0 0.0
        %1590 = vmatprep.subr.mxu0 0.0
        %1591 = vmatpush1.msra.mxu0 0.0
        %1592 = vmatprep.subr.mxu0 0.0
        %1593 = vmatpush1.msra.mxu0 0.0
        %1594 = vmatprep.subr.mxu0 0.0
        %1595 = vmatpush1.msra.mxu0 0.0
        %1596 = vmatprep.subr.mxu0 0.0
        %1597 = vmatpush1.msra.mxu0 0.0
        %1598 = vmatprep.subr.mxu0 0.0
        %1599 = vmatpush1.msra.mxu0 0.0
        %1600 = vmatprep.subr.mxu0 0.0
        %1601 = vmatpush1.msra.mxu0 0.0
        %1602 = vmatprep.subr.mxu0 0.0
        %1603 = vmatpush1.msra.mxu0 0.0
        %1604 = vmatprep.subr.mxu0 0.0
        %1605 = vmatpush1.msra.mxu0 0.0
        %1606 = vmatprep.subr.mxu0 0.0
        %1607 = vmatpush1.msra.mxu0 0.0
        %1608 = vmatprep.mubr.f32.mxu0 0.0
        %1609 = vmatmul.mubr.f32.gmra.mrb[0].mxu0 %v1351
        %v1610 = vpop.f32.mrb[0].mxu0
        %v1611 = vadd.f32 %v1542, %v1610
        %v1612 = vpop.f32.mrb[0].mxu0
        %1613 = vmatprep.mubr.f32.mxu0 0.0
        %1614 = vmatmul.mubr.f32.gmra.mrb[0].mxu0 %v1354
        %v1615 = vpop.f32.mrb[0].mxu0
        %v1616 = vadd.f32 %v1542, %v1615
        %v1617 = vpop.f32.mrb[0].mxu0
        %1618 = vmatprep.mubr.f32.mxu0 0.0
        %1619 = vmatmul.mubr.f32.gmra.mrb[0].mxu0 %v1357
        %v1620 = vpop.f32.mrb[0].mxu0
        %v1621 = vadd.f32 %v1542, %v1620
        %v1622 = vpop.f32.mrb[0].mxu0
        %1623 = vdwg.mxu0
        %v1624 = vmul.f32 %v1439, %v1322
        %v1625 = vmul.f32 %v1440, %v1322
        %v1626 = vmul.f32 %v1441, %v1322
        %v1627 = vmul.f32 %v1439, %v1327
        %v1628 = vmul.f32 %v1440, %v1327
        %v1629 = vmul.f32 %v1441, %v1327
        %v1630 = vmul.f32 %v1439, %v1332
        %v1631 = vmul.f32 %v1440, %v1332
        %v1632 = vmul.f32 %v1441, %v1332
        %v1633 = vmul.f32 %v1439, %v1337
        %v1634 = vmul.f32 %v1440, %v1337
        %v1635 = vmul.f32 %v1441, %v1337
        %v1637 = vsel %vm1349, %v1624, 0
        %v1640 = vsel %vm1349, %v1625, 0
        %v1643 = vsel %vm1349, %v1626, 0
        %v1646 = vsel %vm1349, %v1627, 0
        %v1649 = vsel %vm1349, %v1628, 0
        %v1652 = vsel %vm1349, %v1629, 0
        %v1655 = vsel %vm1349, %v1630, 0
        %v1658 = vsel %vm1349, %v1631, 0
        %v1661 = vsel %vm1349, %v1632, 0
        %v1664 = vsel %vm1349, %v1633, 0
        %v1667 = vsel %vm1349, %v1634, 0
        %v1670 = vsel %vm1349, %v1635, 0
        %v1673 = vsel %vm1349, %v1520, 0
        %v1676 = vsel %vm1349, %v1525, 0
        %v1679 = vsel %vm1349, %v1530, 0
        %1681 = vmatprep.subr.mxu0 0.0
        %1682 = vmatpush1.xpose.msra.mxu0 %v1673
        %1683 = vmatprep.subr.mxu0 0.0
        %1684 = vmatpush1.xpose.msra.mxu0 %v1676
        %1685 = vmatprep.subr.mxu0 0.0
        %1686 = vmatpush1.xpose.msra.mxu0 %v1679
        %1687 = vmatprep.subr.mxu0 0.0
        %1688 = vmatpush1.xpose.msra.mxu0 0.0
        %1689 = vmatprep.subr.mxu0 0.0
        %1690 = vmatpush1.xpose.msra.mxu0 0.0
        %1691 = vmatprep.subr.mxu0 0.0
        %1692 = vmatpush1.xpose.msra.mxu0 0.0
        %1693 = vmatprep.subr.mxu0 0.0
        %1694 = vmatpush1.xpose.msra.mxu0 0.0
        %1695 = vmatprep.subr.mxu0 0.0
        %1696 = vmatpush1.xpose.msra.mxu0 0.0
        %1697 = vmatprep.subr.mxu0 0.0
        %1698 = vmatpush1.xpose.msra.mxu0 0.0
        %1699 = vmatprep.subr.mxu0 0.0
        %1700 = vmatpush1.xpose.msra.mxu0 0.0
        %1701 = vmatprep.subr.mxu0 0.0
        %1702 = vmatpush1.xpose.msra.mxu0 0.0
        %1703 = vmatprep.subr.mxu0 0.0
        %1704 = vmatpush1.xpose.msra.mxu0 0.0
        %1705 = vmatprep.subr.mxu0 0.0
        %1706 = vmatpush1.xpose.msra.mxu0 0.0
        %1707 = vmatprep.subr.mxu0 0.0
        %1708 = vmatpush1.xpose.msra.mxu0 0.0
        %1709 = vmatprep.subr.mxu0 0.0
        %1710 = vmatpush1.xpose.msra.mxu0 0.0
        %1711 = vmatprep.subr.mxu0 0.0
        %1712 = vmatpush1.xpose.msra.mxu0 0.0
        %1713 = vmatprep.subr.mxu0 0.0
        %1714 = vmatpush1.xpose.msra.mxu0 0.0
        %1715 = vmatprep.subr.mxu0 0.0
        %1716 = vmatpush1.xpose.msra.mxu0 0.0
        %1717 = vmatprep.subr.mxu0 0.0
        %1718 = vmatpush1.xpose.msra.mxu0 0.0
        %1719 = vmatprep.subr.mxu0 0.0
        %1720 = vmatpush1.xpose.msra.mxu0 0.0
        %1721 = vmatprep.subr.mxu0 0.0
        %1722 = vmatpush1.xpose.msra.mxu0 0.0
        %1723 = vmatprep.subr.mxu0 0.0
        %1724 = vmatpush1.xpose.msra.mxu0 0.0
        %1725 = vmatprep.subr.mxu0 0.0
        %1726 = vmatpush1.xpose.msra.mxu0 0.0
        %1727 = vmatprep.subr.mxu0 0.0
        %1728 = vmatpush1.xpose.msra.mxu0 0.0
        %1729 = vmatprep.subr.mxu0 0.0
        %1730 = vmatpush1.xpose.msra.mxu0 0.0
        %1731 = vmatprep.subr.mxu0 0.0
        %1732 = vmatpush1.xpose.msra.mxu0 0.0
        %1733 = vmatprep.subr.mxu0 0.0
        %1734 = vmatpush1.xpose.msra.mxu0 0.0
        %1735 = vmatprep.subr.mxu0 0.0
        %1736 = vmatpush1.xpose.msra.mxu0 0.0
        %1737 = vmatprep.subr.mxu0 0.0
        %1738 = vmatpush1.xpose.msra.mxu0 0.0
        %1739 = vmatprep.subr.mxu0 0.0
        %1740 = vmatpush1.xpose.msra.mxu0 0.0
        %1741 = vmatprep.subr.mxu0 0.0
        %1742 = vmatpush1.xpose.msra.mxu0 0.0
        %1743 = vmatprep.subr.mxu0 0.0
        %1744 = vmatpush1.xpose.msra.mxu0 0.0
        %1745 = vmatprep.mubr.f32.mxu0 0.0
        %1746 = vmatmul.mubr.f32.gmra.mrb[0].mxu0 %v1637
        %v1747 = vpop.f32.mrb[0].mxu0
        %v1748 = vadd.f32 0.0, %v1747
        %v1749 = vpop.f32.mrb[0].mxu0
        %1750 = vmatprep.mubr.f32.mxu0 0.0
        %1751 = vmatmul.mubr.f32.gmra.mrb[0].mxu0 %v1640
        %v1752 = vpop.f32.mrb[0].mxu0
        %v1753 = vadd.f32 0.0, %v1752
        %v1754 = vpop.f32.mrb[0].mxu0
        %1755 = vmatprep.mubr.f32.mxu0 0.0
        %1756 = vmatmul.mubr.f32.gmra.mrb[0].mxu0 %v1643
        %v1757 = vpop.f32.mrb[0].mxu0
        %v1758 = vadd.f32 0.0, %v1757
        %v1759 = vpop.f32.mrb[0].mxu0
        %1760 = vmatprep.mubr.f32.mxu0 0.0
        %1761 = vmatmul.mubr.f32.gmra.mrb[0].mxu0 %v1646
        %v1762 = vpop.f32.mrb[0].mxu0
        %v1763 = vadd.f32 0.0, %v1762
        %v1764 = vpop.f32.mrb[0].mxu0
        %1765 = vmatprep.mubr.f32.mxu0 0.0
        %1766 = vmatmul.mubr.f32.gmra.mrb[0].mxu0 %v1649
        %v1767 = vpop.f32.mrb[0].mxu0
        %v1768 = vadd.f32 0.0, %v1767
        %v1769 = vpop.f32.mrb[0].mxu0
        %1770 = vmatprep.mubr.f32.mxu0 0.0
        %1771 = vmatmul.mubr.f32.gmra.mrb[0].mxu0 %v1652
        %v1772 = vpop.f32.mrb[0].mxu0
        %v1773 = vadd.f32 0.0, %v1772
        %v1774 = vpop.f32.mrb[0].mxu0
        %1775 = vmatprep.mubr.f32.mxu0 0.0
        %1776 = vmatmul.mubr.f32.gmra.mrb[0].mxu0 %v1655
        %v1777 = vpop.f32.mrb[0].mxu0
        %v1778 = vadd.f32 0.0, %v1777
        %v1779 = vpop.f32.mrb[0].mxu0
        %1780 = vmatprep.mubr.f32.mxu0 0.0
        %1781 = vmatmul.mubr.f32.gmra.mrb[0].mxu0 %v1658
        %v1782 = vpop.f32.mrb[0].mxu0
        %v1783 = vadd.f32 0.0, %v1782
        %v1784 = vpop.f32.mrb[0].mxu0
        %1785 = vmatprep.mubr.f32.mxu0 0.0
        %1786 = vmatmul.mubr.f32.gmra.mrb[0].mxu0 %v1661
        %v1787 = vpop.f32.mrb[0].mxu0
        %v1788 = vadd.f32 0.0, %v1787
        %v1789 = vpop.f32.mrb[0].mxu0
        %1790 = vmatprep.mubr.f32.mxu0 0.0
        %1791 = vmatmul.mubr.f32.gmra.mrb[0].mxu0 %v1664
        %v1792 = vpop.f32.mrb[0].mxu0
        %v1793 = vadd.f32 0.0, %v1792
        %v1794 = vpop.f32.mrb[0].mxu0
        %1795 = vmatprep.mubr.f32.mxu0 0.0
        %1796 = vmatmul.mubr.f32.gmra.mrb[0].mxu0 %v1667
        %v1797 = vpop.f32.mrb[0].mxu0
        %v1798 = vadd.f32 0.0, %v1797
        %v1799 = vpop.f32.mrb[0].mxu0
        %1800 = vmatprep.mubr.f32.mxu0 0.0
        %1801 = vmatmul.mubr.f32.gmra.mrb[0].mxu0 %v1670
        %v1802 = vpop.f32.mrb[0].mxu0
        %v1803 = vadd.f32 0.0, %v1802
        %v1804 = vpop.f32.mrb[0].mxu0
        %1805 = vdwg.mxu0
        %vm1806 = vcmask 195584
        %v1807 = vsel %vm1806, %v1748, -inf
        %1808 = vmax.xlane.f32.xlu0 %v1807
        %v1809 = vpop.xlane.xlu0 %1808
        %v1810 = vsel %vm1806, %v1753, -inf
        %1811 = vmax.xlane.f32.xlu0 %v1810
        %v1812 = vpop.xlane.xlu0 %1811
        %v1813 = vsel %vm1806, %v1758, -inf
        %1814 = vmax.xlane.f32.xlu0 %v1813
        %v1815 = vpop.xlane.xlu0 %1814
        %v1816 = vsel %vm1806, %v1763, -inf
        %1817 = vmax.xlane.f32.xlu0 %v1816
        %v1818 = vpop.xlane.xlu0 %1817
        %v1819 = vsel %vm1806, %v1768, -inf
        %1820 = vmax.xlane.f32.xlu0 %v1819
        %v1821 = vpop.xlane.xlu0 %1820
        %v1822 = vsel %vm1806, %v1773, -inf
        %1823 = vmax.xlane.f32.xlu0 %v1822
        %v1824 = vpop.xlane.xlu0 %1823
        %v1825 = vsel %vm1806, %v1778, -inf
        %1826 = vmax.xlane.f32.xlu0 %v1825
        %v1827 = vpop.xlane.xlu0 %1826
        %v1828 = vsel %vm1806, %v1783, -inf
        %1829 = vmax.xlane.f32.xlu0 %v1828
        %v1830 = vpop.xlane.xlu0 %1829
        %v1831 = vsel %vm1806, %v1788, -inf
        %1832 = vmax.xlane.f32.xlu0 %v1831
        %v1833 = vpop.xlane.xlu0 %1832
        %v1834 = vsel %vm1806, %v1793, -inf
        %1835 = vmax.xlane.f32.xlu0 %v1834
        %v1836 = vpop.xlane.xlu0 %1835
        %v1837 = vsel %vm1806, %v1798, -inf
        %1838 = vmax.xlane.f32.xlu0 %v1837
        %v1839 = vpop.xlane.xlu0 %1838
        %v1840 = vsel %vm1806, %v1803, -inf
        %1841 = vmax.xlane.f32.xlu0 %v1840
        %v1842 = vpop.xlane.xlu0 %1841
        %v1843 = vsub.f32 %v1748, %v1809
        %v1844 = vsub.f32 %v1753, %v1812
        %v1845 = vsub.f32 %v1758, %v1815
        %v1846 = vsub.f32 %v1763, %v1818
        %v1847 = vsub.f32 %v1768, %v1821
        %v1848 = vsub.f32 %v1773, %v1824
        %v1849 = vsub.f32 %v1778, %v1827
        %v1850 = vsub.f32 %v1783, %v1830
        %v1851 = vsub.f32 %v1788, %v1833
        %v1852 = vsub.f32 %v1793, %v1836
        %v1853 = vsub.f32 %v1798, %v1839
        %v1854 = vsub.f32 %v1803, %v1842
        %v1855 = vmul.f32 %v1843, 1.442695
        %v1856 = vpow.pop %v1855
        %v1857 = vmul.f32 %v1844, 1.442695
        %v1858 = vpow.pop %v1857
        %v1859 = vmul.f32 %v1845, 1.442695
        %v1860 = vpow.pop %v1859
        %v1861 = vmul.f32 %v1846, 1.442695
        %v1862 = vpow.pop %v1861
        %v1863 = vmul.f32 %v1847, 1.442695
        %v1864 = vpow.pop %v1863
        %v1865 = vmul.f32 %v1848, 1.442695
        %v1866 = vpow.pop %v1865
        %v1867 = vmul.f32 %v1849, 1.442695
        %v1868 = vpow.pop %v1867
        %v1869 = vmul.f32 %v1850, 1.442695
        %v1870 = vpow.pop %v1869
        %v1871 = vmul.f32 %v1851, 1.442695
        %v1872 = vpow.pop %v1871
        %v1873 = vmul.f32 %v1852, 1.442695
        %v1874 = vpow.pop %v1873
        %v1875 = vmul.f32 %v1853, 1.442695
        %v1876 = vpow.pop %v1875
        %v1877 = vmul.f32 %v1854, 1.442695
        %v1878 = vpow.pop %v1877
        %v1879 = vsel %vm1806, %v1856, 0.0
        %1880 = vadd.xlane.f32.xlu0 %v1879
        %v1881 = vpop.xlane.xlu0 %1880
        %v1882 = vsel %vm1806, %v1858, 0.0
        %1883 = vadd.xlane.f32.xlu0 %v1882
        %v1884 = vpop.xlane.xlu0 %1883
        %v1885 = vsel %vm1806, %v1860, 0.0
        %1886 = vadd.xlane.f32.xlu0 %v1885
        %v1887 = vpop.xlane.xlu0 %1886
        %v1888 = vsel %vm1806, %v1862, 0.0
        %1889 = vadd.xlane.f32.xlu0 %v1888
        %v1890 = vpop.xlane.xlu0 %1889
        %v1891 = vsel %vm1806, %v1864, 0.0
        %1892 = vadd.xlane.f32.xlu0 %v1891
        %v1893 = vpop.xlane.xlu0 %1892
        %v1894 = vsel %vm1806, %v1866, 0.0
        %1895 = vadd.xlane.f32.xlu0 %v1894
        %v1896 = vpop.xlane.xlu0 %1895
        %v1897 = vsel %vm1806, %v1868, 0.0
        %1898 = vadd.xlane.f32.xlu0 %v1897
        %v1899 = vpop.xlane.xlu0 %1898
        %v1900 = vsel %vm1806, %v1870, 0.0
        %1901 = vadd.xlane.f32.xlu0 %v1900
        %v1902 = vpop.xlane.xlu0 %1901
        %v1903 = vsel %vm1806, %v1872, 0.0
        %1904 = vadd.xlane.f32.xlu0 %v1903
        %v1905 = vpop.xlane.xlu0 %1904
        %v1906 = vsel %vm1806, %v1874, 0.0
        %1907 = vadd.xlane.f32.xlu0 %v1906
        %v1908 = vpop.xlane.xlu0 %1907
        %v1909 = vsel %vm1806, %v1876, 0.0
        %1910 = vadd.xlane.f32.xlu0 %v1909
        %v1911 = vpop.xlane.xlu0 %1910
        %v1912 = vsel %vm1806, %v1878, 0.0
        %1913 = vadd.xlane.f32.xlu0 %v1912
        %v1914 = vpop.xlane.xlu0 %1913
        %v1915 = vrcp.pop %v1881
        %v1916 = vmul.f32 %v1856, %v1915
        %v1917 = vrcp.pop %v1884
        %v1918 = vmul.f32 %v1858, %v1917
        %v1919 = vrcp.pop %v1887
        %v1920 = vmul.f32 %v1860, %v1919
        %v1921 = vrcp.pop %v1890
        %v1922 = vmul.f32 %v1862, %v1921
        %v1923 = vrcp.pop %v1893
        %v1924 = vmul.f32 %v1864, %v1923
        %v1925 = vrcp.pop %v1896
        %v1926 = vmul.f32 %v1866, %v1925
        %v1927 = vrcp.pop %v1899
        %v1928 = vmul.f32 %v1868, %v1927
        %v1929 = vrcp.pop %v1902
        %v1930 = vmul.f32 %v1870, %v1929
        %v1931 = vrcp.pop %v1905
        %v1932 = vmul.f32 %v1872, %v1931
        %v1933 = vrcp.pop %v1908
        %v1934 = vmul.f32 %v1874, %v1933
        %v1935 = vrcp.pop %v1911
        %v1936 = vmul.f32 %v1876, %v1935
        %v1937 = vrcp.pop %v1914
        %v1938 = vmul.f32 %v1878, %v1937
        %v1940 = vsel %vm1806, %v1916, 0
        %v1943 = vsel %vm1806, %v1918, 0
        %v1946 = vsel %vm1806, %v1920, 0
        %v1949 = vsel %vm1806, %v1922, 0
        %v1952 = vsel %vm1806, %v1924, 0
        %v1955 = vsel %vm1806, %v1926, 0
        %v1958 = vsel %vm1806, %v1928, 0
        %v1961 = vsel %vm1806, %v1930, 0
        %v1964 = vsel %vm1806, %v1932, 0
        %v1967 = vsel %vm1806, %v1934, 0
        %v1970 = vsel %vm1806, %v1936, 0
        %v1973 = vsel %vm1806, %v1938, 0
        %1975 = vmatprep.subr.mxu0 0.0
        %1976 = vmatpush1.msra.mxu0 %v1611
        %1977 = vmatprep.subr.mxu0 0.0
        %1978 = vmatpush1.msra.mxu0 %v1616
        %1979 = vmatprep.subr.mxu0 0.0
        %1980 = vmatpush1.msra.mxu0 %v1621
        %1981 = vmatprep.subr.mxu0 0.0
        %1982 = vmatpush1.msra.mxu0 0.0
        %1983 = vmatprep.subr.mxu0 0.0
        %1984 = vmatpush1.msra.mxu0 0.0
        %1985 = vmatprep.subr.mxu0 0.0
        %1986 = vmatpush1.msra.mxu0 0.0
        %1987 = vmatprep.subr.mxu0 0.0
        %1988 = vmatpush1.msra.mxu0 0.0
        %1989 = vmatprep.subr.mxu0 0.0
        %1990 = vmatpush1.msra.mxu0 0.0
        %1991 = vmatprep.subr.mxu0 0.0
        %1992 = vmatpush1.msra.mxu0 0.0
        %1993 = vmatprep.subr.mxu0 0.0
        %1994 = vmatpush1.msra.mxu0 0.0
        %1995 = vmatprep.subr.mxu0 0.0
        %1996 = vmatpush1.msra.mxu0 0.0
        %1997 = vmatprep.subr.mxu0 0.0
        %1998 = vmatpush1.msra.mxu0 0.0
        %1999 = vmatprep.subr.mxu0 0.0
        %2000 = vmatpush1.msra.mxu0 0.0
        %2001 = vmatprep.subr.mxu0 0.0
        %2002 = vmatpush1.msra.mxu0 0.0
        %2003 = vmatprep.subr.mxu0 0.0
        %2004 = vmatpush1.msra.mxu0 0.0
        %2005 = vmatprep.subr.mxu0 0.0
        %2006 = vmatpush1.msra.mxu0 0.0
        %2007 = vmatprep.subr.mxu0 0.0
        %2008 = vmatpush1.msra.mxu0 0.0
        %2009 = vmatprep.subr.mxu0 0.0
        %2010 = vmatpush1.msra.mxu0 0.0
        %2011 = vmatprep.subr.mxu0 0.0
        %2012 = vmatpush1.msra.mxu0 0.0
        %2013 = vmatprep.subr.mxu0 0.0
        %2014 = vmatpush1.msra.mxu0 0.0
        %2015 = vmatprep.subr.mxu0 0.0
        %2016 = vmatpush1.msra.mxu0 0.0
        %2017 = vmatprep.subr.mxu0 0.0
        %2018 = vmatpush1.msra.mxu0 0.0
        %2019 = vmatprep.subr.mxu0 0.0
        %2020 = vmatpush1.msra.mxu0 0.0
        %2021 = vmatprep.subr.mxu0 0.0
        %2022 = vmatpush1.msra.mxu0 0.0
        %2023 = vmatprep.subr.mxu0 0.0
        %2024 = vmatpush1.msra.mxu0 0.0
        %2025 = vmatprep.subr.mxu0 0.0
        %2026 = vmatpush1.msra.mxu0 0.0
        %2027 = vmatprep.subr.mxu0 0.0
        %2028 = vmatpush1.msra.mxu0 0.0
        %2029 = vmatprep.subr.mxu0 0.0
        %2030 = vmatpush1.msra.mxu0 0.0
        %2031 = vmatprep.subr.mxu0 0.0
        %2032 = vmatpush1.msra.mxu0 0.0
        %2033 = vmatprep.subr.mxu0 0.0
        %2034 = vmatpush1.msra.mxu0 0.0
        %2035 = vmatprep.subr.mxu0 0.0
        %2036 = vmatpush1.msra.mxu0 0.0
        %2037 = vmatprep.subr.mxu0 0.0
        %2038 = vmatpush1.msra.mxu0 0.0
        %2039 = vmatprep.mubr.f32.mxu0 0.0
        %2040 = vmatmul.mubr.f32.gmra.mrb[0].mxu0 %v1940
        %v2041 = vpop.f32.mrb[0].mxu0
        %v2042 = vadd.f32 0.0, %v2041
        %v2043 = vpop.f32.mrb[0].mxu0
        %2044 = vmatprep.mubr.f32.mxu0 0.0
        %2045 = vmatmul.mubr.f32.gmra.mrb[0].mxu0 %v1943
        %v2046 = vpop.f32.mrb[0].mxu0
        %v2047 = vadd.f32 0.0, %v2046
        %v2048 = vpop.f32.mrb[0].mxu0
        %2049 = vmatprep.mubr.f32.mxu0 0.0
        %2050 = vmatmul.mubr.f32.gmra.mrb[0].mxu0 %v1946
        %v2051 = vpop.f32.mrb[0].mxu0
        %v2052 = vadd.f32 0.0, %v2051
        %v2053 = vpop.f32.mrb[0].mxu0
        %2054 = vmatprep.mubr.f32.mxu0 0.0
        %2055 = vmatmul.mubr.f32.gmra.mrb[0].mxu0 %v1949
        %v2056 = vpop.f32.mrb[0].mxu0
        %v2057 = vadd.f32 0.0, %v2056
        %v2058 = vpop.f32.mrb[0].mxu0
        %2059 = vmatprep.mubr.f32.mxu0 0.0
        %2060 = vmatmul.mubr.f32.gmra.mrb[0].mxu0 %v1952
        %v2061 = vpop.f32.mrb[0].mxu0
        %v2062 = vadd.f32 0.0, %v2061
        %v2063 = vpop.f32.mrb[0].mxu0
        %2064 = vmatprep.mubr.f32.mxu0 0.0
        %2065 = vmatmul.mubr.f32.gmra.mrb[0].mxu0 %v1955
        %v2066 = vpop.f32.mrb[0].mxu0
        %v2067 = vadd.f32 0.0, %v2066
        %v2068 = vpop.f32.mrb[0].mxu0
        %2069 = vmatprep.mubr.f32.mxu0 0.0
        %2070 = vmatmul.mubr.f32.gmra.mrb[0].mxu0 %v1958
        %v2071 = vpop.f32.mrb[0].mxu0
        %v2072 = vadd.f32 0.0, %v2071
        %v2073 = vpop.f32.mrb[0].mxu0
        %2074 = vmatprep.mubr.f32.mxu0 0.0
        %2075 = vmatmul.mubr.f32.gmra.mrb[0].mxu0 %v1961
        %v2076 = vpop.f32.mrb[0].mxu0
        %v2077 = vadd.f32 0.0, %v2076
        %v2078 = vpop.f32.mrb[0].mxu0
        %2079 = vmatprep.mubr.f32.mxu0 0.0
        %2080 = vmatmul.mubr.f32.gmra.mrb[0].mxu0 %v1964
        %v2081 = vpop.f32.mrb[0].mxu0
        %v2082 = vadd.f32 0.0, %v2081
        %v2083 = vpop.f32.mrb[0].mxu0
        %2084 = vmatprep.mubr.f32.mxu0 0.0
        %2085 = vmatmul.mubr.f32.gmra.mrb[0].mxu0 %v1967
        %v2086 = vpop.f32.mrb[0].mxu0
        %v2087 = vadd.f32 0.0, %v2086
        %v2088 = vpop.f32.mrb[0].mxu0
        %2089 = vmatprep.mubr.f32.mxu0 0.0
        %2090 = vmatmul.mubr.f32.gmra.mrb[0].mxu0 %v1970
        %v2091 = vpop.f32.mrb[0].mxu0
        %v2092 = vadd.f32 0.0, %v2091
        %v2093 = vpop.f32.mrb[0].mxu0
        %2094 = vmatprep.mubr.f32.mxu0 0.0
        %2095 = vmatmul.mubr.f32.gmra.mrb[0].mxu0 %v1973
        %v2096 = vpop.f32.mrb[0].mxu0
        %v2097 = vadd.f32 0.0, %v2096
        %v2098 = vpop.f32.mrb[0].mxu0
        %2099 = vdwg.mxu0
        %v2100 = vmul.f32 %v2042, %v1322
        %v2101 = vmul.f32 %v2047, %v1322
        %v2102 = vmul.f32 %v2052, %v1322
        %v2103 = vmul.f32 %v2057, %v1327
        %v2104 = vmul.f32 %v2062, %v1327
        %v2105 = vmul.f32 %v2067, %v1327
        %v2106 = vadd.f32 %v2100, %v2103
        %v2107 = vadd.f32 %v2101, %v2104
        %v2108 = vadd.f32 %v2102, %v2105
        %v2109 = vmul.f32 %v2072, %v1332
        %v2110 = vmul.f32 %v2077, %v1332
        %v2111 = vmul.f32 %v2082, %v1332
        %v2112 = vadd.f32 %v2106, %v2109
        %v2113 = vadd.f32 %v2107, %v2110
        %v2114 = vadd.f32 %v2108, %v2111
        %v2115 = vmul.f32 %v2087, %v1337
        %v2116 = vmul.f32 %v2092, %v1337
        %v2117 = vmul.f32 %v2097, %v1337
        %v2118 = vadd.f32 %v2112, %v2115
        %v2119 = vadd.f32 %v2113, %v2116
        %v2120 = vadd.f32 %v2114, %v2117
        %v2121 = vld [vmem:[#allocation16] sm:$0xff]
        %v2122 = vld [vmem:[#allocation16 + $0x8] sm:$0xff]
        %v2123 = vld [vmem:[#allocation16 + $0x10] sm:$0xff]
        %v2124 = vld [vmem:[#allocation16 + $0x18] sm:$0xff]
        %v2125 = vld [vmem:[#allocation17] sm:$0x1]
        %v2127 = vlaneseq
        %v2128 = vshrl.u32 %v2127, 7
        %v2129 = vsub.s32 0, %v2128
        %v2130 = vrot.slane %v2125, %v2129
        %v2133 = vsel %vm1349, %v2118, 0
        %v2136 = vsel %vm1349, %v2119, 0
        %v2139 = vsel %vm1349, %v2120, 0
        %2141 = vmatprep.subr.mxu0 0.0
        %2142 = vmatpush1.msra.mxu0 %v2121
        %2143 = vmatprep.subr.mxu0 0.0
        %2144 = vmatpush1.msra.mxu0 %v2122
        %2145 = vmatprep.subr.mxu0 0.0
        %2146 = vmatpush1.msra.mxu0 %v2123
        %2147 = vmatprep.subr.mxu0 0.0
        %2148 = vmatpush1.msra.mxu0 %v2124
        %2149 = vmatprep.subr.mxu0 0.0
        %2150 = vmatpush1.msra.mxu0 0.0
        %2151 = vmatprep.subr.mxu0 0.0
        %2152 = vmatpush1.msra.mxu0 0.0
        %2153 = vmatprep.subr.mxu0 0.0
        %2154 = vmatpush1.msra.mxu0 0.0
        %2155 = vmatprep.subr.mxu0 0.0
        %2156 = vmatpush1.msra.mxu0 0.0
        %2157 = vmatprep.subr.mxu0 0.0
        %2158 = vmatpush1.msra.mxu0 0.0
        %2159 = vmatprep.subr.mxu0 0.0
        %2160 = vmatpush1.msra.mxu0 0.0
        %2161 = vmatprep.subr.mxu0 0.0
        %2162 = vmatpush1.msra.mxu0 0.0
        %2163 = vmatprep.subr.mxu0 0.0
        %2164 = vmatpush1.msra.mxu0 0.0
        %2165 = vmatprep.subr.mxu0 0.0
        %2166 = vmatpush1.msra.mxu0 0.0
        %2167 = vmatprep.subr.mxu0 0.0
        %2168 = vmatpush1.msra.mxu0 0.0
        %2169 = vmatprep.subr.mxu0 0.0
        %2170 = vmatpush1.msra.mxu0 0.0
        %2171 = vmatprep.subr.mxu0 0.0
        %2172 = vmatpush1.msra.mxu0 0.0
        %2173 = vmatprep.subr.mxu0 0.0
        %2174 = vmatpush1.msra.mxu0 0.0
        %2175 = vmatprep.subr.mxu0 0.0
        %2176 = vmatpush1.msra.mxu0 0.0
        %2177 = vmatprep.subr.mxu0 0.0
        %2178 = vmatpush1.msra.mxu0 0.0
        %2179 = vmatprep.subr.mxu0 0.0
        %2180 = vmatpush1.msra.mxu0 0.0
        %2181 = vmatprep.subr.mxu0 0.0
        %2182 = vmatpush1.msra.mxu0 0.0
        %2183 = vmatprep.subr.mxu0 0.0
        %2184 = vmatpush1.msra.mxu0 0.0
        %2185 = vmatprep.subr.mxu0 0.0
        %2186 = vmatpush1.msra.mxu0 0.0
        %2187 = vmatprep.subr.mxu0 0.0
        %2188 = vmatpush1.msra.mxu0 0.0
        %2189 = vmatprep.subr.mxu0 0.0
        %2190 = vmatpush1.msra.mxu0 0.0
        %2191 = vmatprep.subr.mxu0 0.0
        %2192 = vmatpush1.msra.mxu0 0.0
        %2193 = vmatprep.subr.mxu0 0.0
        %2194 = vmatpush1.msra.mxu0 0.0
        %2195 = vmatprep.subr.mxu0 0.0
        %2196 = vmatpush1.msra.mxu0 0.0
        %2197 = vmatprep.subr.mxu0 0.0
        %2198 = vmatpush1.msra.mxu0 0.0
        %2199 = vmatprep.subr.mxu0 0.0
        %2200 = vmatpush1.msra.mxu0 0.0
        %2201 = vmatprep.subr.mxu0 0.0
        %2202 = vmatpush1.msra.mxu0 0.0
        %2203 = vmatprep.subr.mxu0 0.0
        %2204 = vmatpush1.msra.mxu0 0.0
        %2205 = vmatprep.mubr.f32.mxu0 0.0
        %2206 = vmatmul.mubr.f32.gmra.mrb[0].mxu0 %v2133
        %v2207 = vpop.f32.mrb[0].mxu0
        %v2208 = vadd.f32 %v2130, %v2207
        %v2209 = vpop.f32.mrb[0].mxu0
        %2210 = vmatprep.mubr.f32.mxu0 0.0
        %2211 = vmatmul.mubr.f32.gmra.mrb[0].mxu0 %v2136
        %v2212 = vpop.f32.mrb[0].mxu0
        %v2213 = vadd.f32 %v2130, %v2212
        %v2214 = vpop.f32.mrb[0].mxu0
        %2215 = vmatprep.mubr.f32.mxu0 0.0
        %2216 = vmatmul.mubr.f32.gmra.mrb[0].mxu0 %v2139
        %v2217 = vpop.f32.mrb[0].mxu0
        %v2218 = vadd.f32 %v2130, %v2217
        %v2219 = vpop.f32.mrb[0].mxu0
        %2220 = vdwg.mxu0
        %v2221 = vadd.f32 %v1313, %v2208
        %v2222 = vadd.f32 %v1314, %v2213
        %v2223 = vadd.f32 %v1315, %v2218
        %v2224 = vld [vmem:[%s22] sm:$0x1]
        %v2225 = vld [vmem:[%s23] sm:$0x1]
        %v2226 = vsel %vm1349, %v2221, 0.0
        %2227 = vadd.xlane.f32.xlu0 %v2226
        %v2228 = vpop.xlane.xlu0 %2227
        %v2229 = vsel %vm1349, %v2222, 0.0
        %2230 = vadd.xlane.f32.xlu0 %v2229
        %v2231 = vpop.xlane.xlu0 %2230
        %v2232 = vsel %vm1349, %v2223, 0.0
        %2233 = vadd.xlane.f32.xlu0 %v2232
        %v2234 = vpop.xlane.xlu0 %2233
        %v2235 = vrcp.pop 32.0
        %v2236 = vmul.f32 %v2228, %v2235
        %v2237 = vmul.f32 %v2231, %v2235
        %v2238 = vmul.f32 %v2234, %v2235
        %v2239 = vsub.f32 %v2221, %v2236
        %v2240 = vsub.f32 %v2222, %v2237
        %v2241 = vsub.f32 %v2223, %v2238
        %v2242 = vmul.f32 %v2239, %v2239
        %v2243 = vmul.f32 %v2240, %v2240
        %v2244 = vmul.f32 %v2241, %v2241
        %v2245 = vsel %vm1349, %v2242, 0.0
        %2246 = vadd.xlane.f32.xlu0 %v2245
        %v2247 = vpop.xlane.xlu0 %2246
        %v2248 = vsel %vm1349, %v2243, 0.0
        %2249 = vadd.xlane.f32.xlu0 %v2248
        %v2250 = vpop.xlane.xlu0 %2249
        %v2251 = vsel %vm1349, %v2244, 0.0
        %2252 = vadd.xlane.f32.xlu0 %v2251
        %v2253 = vpop.xlane.xlu0 %2252
        %v2254 = vmul.f32 %v2247, %v2235
        %v2255 = vmul.f32 %v2250, %v2235
        %v2256 = vmul.f32 %v2253, %v2235
        %v2257 = vadd.f32 %v2254, 1e-05
        %v2258 = vadd.f32 %v2255, 1e-05
        %v2259 = vadd.f32 %v2256, 1e-05
        %v2260 = vrsqrt.pop %v2257
        %v2261 = vrsqrt.pop %v2258
        %v2262 = vrsqrt.pop %v2259
        %v2263 = vmul.f32 %v2239, %v2260
        %v2264 = vmul.f32 %v2240, %v2261
        %v2265 = vmul.f32 %v2241, %v2262
        %v2267 = vlaneseq
        %v2268 = vshrl.u32 %v2267, 7
        %v2269 = vsub.s32 0, %v2268
        %v2270 = vrot.slane %v2224, %v2269
        %v2272 = vmul.f32 %v2263, %v2270
        %v2273 = vmul.f32 %v2264, %v2270
        %v2274 = vmul.f32 %v2265, %v2270
        %v2276 = vlaneseq
        %v2277 = vshrl.u32 %v2276, 7
        %v2278 = vsub.s32 0, %v2277
        %v2279 = vrot.slane %v2225, %v2278
        %v2281 = vadd.f32 %v2272, %v2279
        %v2282 = vadd.f32 %v2273, %v2279
        %v2283 = vadd.f32 %v2274, %v2279
        %v2284 = vld [vmem:[#allocation19] sm:$0xff]
        %v2285 = vld [vmem:[#allocation19 + $0x8] sm:$0xff]
        %v2286 = vld [vmem:[#allocation19 + $0x10] sm:$0xff]
        %v2287 = vld [vmem:[#allocation19 + $0x18] sm:$0xff]
        %v2288 = vld [vmem:[#allocation20] sm:$0x1]
        %v2290 = vlaneseq
        %v2291 = vshrl.u32 %v2290, 7
        %v2292 = vsub.s32 0, %v2291
        %v2293 = vrot.slane %v2288, %v2292
        %v2296 = vsel %vm1349, %v2281, 0
        %v2299 = vsel %vm1349, %v2282, 0
        %v2302 = vsel %vm1349, %v2283, 0
        %2304 = vmatprep.subr.mxu0 0.0
        %2305 = vmatpush1.msra.mxu0 %v2284
        %2306 = vmatprep.subr.mxu0 0.0
        %2307 = vmatpush1.msra.mxu0 %v2285
        %2308 = vmatprep.subr.mxu0 0.0
        %2309 = vmatpush1.msra.mxu0 %v2286
        %2310 = vmatprep.subr.mxu0 0.0
        %2311 = vmatpush1.msra.mxu0 %v2287
        %2312 = vmatprep.subr.mxu0 0.0
        %2313 = vmatpush1.msra.mxu0 0.0
        %2314 = vmatprep.subr.mxu0 0.0
        %2315 = vmatpush1.msra.mxu0 0.0
        %2316 = vmatprep.subr.mxu0 0.0
        %2317 = vmatpush1.msra.mxu0 0.0
        %2318 = vmatprep.subr.mxu0 0.0
        %2319 = vmatpush1.msra.mxu0 0.0
        %2320 = vmatprep.subr.mxu0 0.0
        %2321 = vmatpush1.msra.mxu0 0.0
        %2322 = vmatprep.subr.mxu0 0.0
        %2323 = vmatpush1.msra.mxu0 0.0
        %2324 = vmatprep.subr.mxu0 0.0
        %2325 = vmatpush1.msra.mxu0 0.0
        %2326 = vmatprep.subr.mxu0 0.0
        %2327 = vmatpush1.msra.mxu0 0.0
        %2328 = vmatprep.subr.mxu0 0.0
        %2329 = vmatpush1.msra.mxu0 0.0
        %2330 = vmatprep.subr.mxu0 0.0
        %2331 = vmatpush1.msra.mxu0 0.0
        %2332 = vmatprep.subr.mxu0 0.0
        %2333 = vmatpush1.msra.mxu0 0.0
        %2334 = vmatprep.subr.mxu0 0.0
        %2335 = vmatpush1.msra.mxu0 0.0
        %2336 = vmatprep.subr.mxu0 0.0
        %2337 = vmatpush1.msra.mxu0 0.0
        %2338 = vmatprep.subr.mxu0 0.0
        %2339 = vmatpush1.msra.mxu0 0.0
        %2340 = vmatprep.subr.mxu0 0.0
        %2341 = vmatpush1.msra.mxu0 0.0
        %2342 = vmatprep.subr.mxu0 0.0
        %2343 = vmatpush1.msra.mxu0 0.0
        %2344 = vmatprep.subr.mxu0 0.0
        %2345 = vmatpush1.msra.mxu0 0.0
        %2346 = vmatprep.subr.mxu0 0.0
        %2347 = vmatpush1.msra.mxu0 0.0
        %2348 = vmatprep.subr.mxu0 0.0
        %2349 = vmatpush1.msra.mxu0 0.0
        %2350 = vmatprep.subr.mxu0 0.0
        %2351 = vmatpush1.msra.mxu0 0.0
        %2352 = vmatprep.subr.mxu0 0.0
        %2353 = vmatpush1.msra.mxu0 0.0
        %2354 = vmatprep.subr.mxu0 0.0
        %2355 = vmatpush1.msra.mxu0 0.0
        %2356 = vmatprep.subr.mxu0 0.0
        %2357 = vmatpush1.msra.mxu0 0.0
        %2358 = vmatprep.subr.mxu0 0.0
        %2359 = vmatpush1.msra.mxu0 0.0
        %2360 = vmatprep.subr.mxu0 0.0
        %2361 = vmatpush1.msra.mxu0 0.0
        %2362 = vmatprep.subr.mxu0 0.0
        %2363 = vmatpush1.msra.mxu0 0.0
        %2364 = vmatprep.subr.mxu0 0.0
        %2365 = vmatpush1.msra.mxu0 0.0
        %2366 = vmatprep.subr.mxu0 0.0
        %2367 = vmatpush1.msra.mxu0 0.0
        %2368 = vmatprep.mubr.f32.mxu0 0.0
        %2369 = vmatmul.mubr.f32.gmra.mrb[0].mxu0 %v2296
        %v2370 = vpop.f32.mrb[0].mxu0
        %v2371 = vadd.f32 %v2293, %v2370
        %v2372 = vpop.f32.mrb[0].mxu0
        %2373 = vmatprep.mubr.f32.mxu0 0.0
        %2374 = vmatmul.mubr.f32.gmra.mrb[0].mxu0 %v2299
        %v2375 = vpop.f32.mrb[0].mxu0
        %v2376 = vadd.f32 %v2293, %v2375
        %v2377 = vpop.f32.mrb[0].mxu0
        %2378 = vmatprep.mubr.f32.mxu0 0.0
        %2379 = vmatmul.mubr.f32.gmra.mrb[0].mxu0 %v2302
        %v2380 = vpop.f32.mrb[0].mxu0
        %v2381 = vadd.f32 %v2293, %v2380
        %v2382 = vpop.f32.mrb[0].mxu0
        %2383 = vdwg.mxu0
        %v2384 = vmul.f32 %v2371, 0.5
        %v2385 = vmul.f32 %v2376, 0.5
        %v2386 = vmul.f32 %v2381, 0.5
        %v2387 = vmul.f32 %v2371, 0.70710677
        %v2388 = vmul.f32 %v2376, 0.70710677
        %v2389 = vmul.f32 %v2381, 0.70710677
        %v2390 = vand.u32 2147483647, %v2387
        %v2391 = vand.u32 2147483647, %v2388
        %v2392 = vand.u32 2147483647, %v2389
        %v2393 = vmul.f32 %v2390, 0.3275911
        %v2394 = vmul.f32 %v2391, 0.3275911
        %v2395 = vmul.f32 %v2392, 0.3275911
        %v2396 = vadd.f32 %v2393, 1.0
        %v2397 = vadd.f32 %v2394, 1.0
        %v2398 = vadd.f32 %v2395, 1.0
        %v2399 = vrcp.pop %v2396
        %v2400 = vmul.f32 1.0, %v2399
        %v2401 = vrcp.pop %v2397
        %v2402 = vmul.f32 1.0, %v2401
        %v2403 = vrcp.pop %v2398
        %v2404 = vmul.f32 1.0, %v2403
        %v2405 = vmul.f32 %v2400, 1.0614054
        %v2406 = vmul.f32 %v2402, 1.0614054
        %v2407 = vmul.f32 %v2404, 1.0614054
        %v2408 = vadd.f32 %v2405, -1.4531521
        %v2409 = vadd.f32 %v2406, -1.4531521
        %v2410 = vadd.f32 %v2407, -1.4531521
        %v2411 = vmul.f32 %v2408, %v2400
        %v2412 = vmul.f32 %v2409, %v2402
        %v2413 = vmul.f32 %v2410, %v2404
        %v2414 = vadd.f32 %v2411, 1.4214138
        %v2415 = vadd.f32 %v2412, 1.4214138
        %v2416 = vadd.f32 %v2413, 1.4214138
        %v2417 = vmul.f32 %v2414, %v2400
        %v2418 = vmul.f32 %v2415, %v2402
        %v2419 = vmul.f32 %v2416, %v2404
        %v2420 = vadd.f32 %v2417, -0.28449672
        %v2421 = vadd.f32 %v2418, -0.28449672
        %v2422 = vadd.f32 %v2419, -0.28449672
        %v2423 = vmul.f32 %v2420, %v2400
        %v2424 = vmul.f32 %v2421, %v2402
        %v2425 = vmul.f32 %v2422, %v2404
        %v2426 = vadd.f32 %v2423, 0.2548296
        %v2427 = vadd.f32 %v2424, 0.2548296
        %v2428 = vadd.f32 %v2425, 0.2548296
        %v2429 = vmul.f32 %v2426, %v2400
        %v2430 = vmul.f32 %v2427, %v2402
        %v2431 = vmul.f32 %v2428, %v2404
        %v2432 = vmul.f32 %v2390, %v2390
        %v2433 = vmul.f32 %v2391, %v2391
        %v2434 = vmul.f32 %v2392, %v2392
        %v2435 = vsub.f32 0.0, %v2432
        %v2436 = vsub.f32 0.0, %v2433
        %v2437 = vsub.f32 0.0, %v2434
        %v2438 = vmul.f32 %v2435, 1.442695
        %v2439 = vpow.pop %v2438
        %v2440 = vmul.f32 %v2436, 1.442695
        %v2441 = vpow.pop %v2440
        %v2442 = vmul.f32 %v2437, 1.442695
        %v2443 = vpow.pop %v2442
        %v2444 = vmul.f32 %v2429, %v2439
        %v2445 = vmul.f32 %v2430, %v2441
        %v2446 = vmul.f32 %v2431, %v2443
        %v2447 = vsub.f32 1.0, %v2444
        %v2448 = vsub.f32 1.0, %v2445
        %v2449 = vsub.f32 1.0, %v2446
        %vm2450 = vcmp.ge.f32.partialorder %v2387, 0.0
        %vm2451 = vcmp.ge.f32.partialorder %v2388, 0.0
        %vm2452 = vcmp.ge.f32.partialorder %v2389, 0.0
        %v2453 = vsub.f32 0.0, %v2447
        %v2454 = vsub.f32 0.0, %v2448
        %v2455 = vsub.f32 0.0, %v2449
        %v2456 = vsel %vm2450, %v2447, %v2453
        %v2457 = vsel %vm2451, %v2448, %v2454
        %v2458 = vsel %vm2452, %v2449, %v2455
        %v2459 = vadd.f32 %v2456, 1.0
        %v2460 = vadd.f32 %v2457, 1.0
        %v2461 = vadd.f32 %v2458, 1.0
        %v2462 = vmul.f32 %v2384, %v2459
        %v2463 = vmul.f32 %v2385, %v2460
        %v2464 = vmul.f32 %v2386, %v2461
        %v2465 = vld [vmem:[%s20] sm:$0xff]
        %v2466 = vld [vmem:[%s20 + $0x8] sm:$0xff]
        %v2467 = vld [vmem:[%s20 + $0x10] sm:$0xff]
        %v2468 = vld [vmem:[%s20 + $0x18] sm:$0xff]
        %v2469 = vld [vmem:[%s20 + $0x20] sm:$0xff]
        %v2470 = vld [vmem:[%s20 + $0x28] sm:$0xff]
        %v2471 = vld [vmem:[%s20 + $0x30] sm:$0xff]
        %v2472 = vld [vmem:[%s20 + $0x38] sm:$0xff]
        %v2473 = vld [vmem:[%s21] sm:$0x1]
        %v2475 = vlaneseq
        %v2476 = vshrl.u32 %v2475, 7
        %v2477 = vsub.s32 0, %v2476
        %v2478 = vrot.slane %v2473, %v2477
        %vm2480 = vcmask 523264
        %v2482 = vsel %vm2480, %v2462, 0
        %v2485 = vsel %vm2480, %v2463, 0
        %v2488 = vsel %vm2480, %v2464, 0
        %2490 = vmatprep.subr.mxu0 0.0
        %2491 = vmatpush1.msra.mxu0 %v2465
        %2492 = vmatprep.subr.mxu0 0.0
        %2493 = vmatpush1.msra.mxu0 %v2466
        %2494 = vmatprep.subr.mxu0 0.0
        %2495 = vmatpush1.msra.mxu0 %v2467
        %2496 = vmatprep.subr.mxu0 0.0
        %2497 = vmatpush1.msra.mxu0 %v2468
        %2498 = vmatprep.subr.mxu0 0.0
        %2499 = vmatpush1.msra.mxu0 %v2469
        %2500 = vmatprep.subr.mxu0 0.0
        %2501 = vmatpush1.msra.mxu0 %v2470
        %2502 = vmatprep.subr.mxu0 0.0
        %2503 = vmatpush1.msra.mxu0 %v2471
        %2504 = vmatprep.subr.mxu0 0.0
        %2505 = vmatpush1.msra.mxu0 %v2472
        %2506 = vmatprep.subr.mxu0 0.0
        %2507 = vmatpush1.msra.mxu0 0.0
        %2508 = vmatprep.subr.mxu0 0.0
        %2509 = vmatpush1.msra.mxu0 0.0
        %2510 = vmatprep.subr.mxu0 0.0
        %2511 = vmatpush1.msra.mxu0 0.0
        %2512 = vmatprep.subr.mxu0 0.0
        %2513 = vmatpush1.msra.mxu0 0.0
        %2514 = vmatprep.subr.mxu0 0.0
        %2515 = vmatpush1.msra.mxu0 0.0
        %2516 = vmatprep.subr.mxu0 0.0
        %2517 = vmatpush1.msra.mxu0 0.0
        %2518 = vmatprep.subr.mxu0 0.0
        %2519 = vmatpush1.msra.mxu0 0.0
        %2520 = vmatprep.subr.mxu0 0.0
        %2521 = vmatpush1.msra.mxu0 0.0
        %2522 = vmatprep.subr.mxu0 0.0
        %2523 = vmatpush1.msra.mxu0 0.0
        %2524 = vmatprep.subr.mxu0 0.0
        %2525 = vmatpush1.msra.mxu0 0.0
        %2526 = vmatprep.subr.mxu0 0.0
        %2527 = vmatpush1.msra.mxu0 0.0
        %2528 = vmatprep.subr.mxu0 0.0
        %2529 = vmatpush1.msra.mxu0 0.0
        %2530 = vmatprep.subr.mxu0 0.0
        %2531 = vmatpush1.msra.mxu0 0.0
        %2532 = vmatprep.subr.mxu0 0.0
        %2533 = vmatpush1.msra.mxu0 0.0
        %2534 = vmatprep.subr.mxu0 0.0
        %2535 = vmatpush1.msra.mxu0 0.0
        %2536 = vmatprep.subr.mxu0 0.0
        %2537 = vmatpush1.msra.mxu0 0.0
        %2538 = vmatprep.subr.mxu0 0.0
        %2539 = vmatpush1.msra.mxu0 0.0
        %2540 = vmatprep.subr.mxu0 0.0
        %2541 = vmatpush1.msra.mxu0 0.0
        %2542 = vmatprep.subr.mxu0 0.0
        %2543 = vmatpush1.msra.mxu0 0.0
        %2544 = vmatprep.subr.mxu0 0.0
        %2545 = vmatpush1.msra.mxu0 0.0
        %2546 = vmatprep.subr.mxu0 0.0
        %2547 = vmatpush1.msra.mxu0 0.0
        %2548 = vmatprep.subr.mxu0 0.0
        %2549 = vmatpush1.msra.mxu0 0.0
        %2550 = vmatprep.subr.mxu0 0.0
        %2551 = vmatpush1.msra.mxu0 0.0
        %2552 = vmatprep.subr.mxu0 0.0
        %2553 = vmatpush1.msra.mxu0 0.0
        %2554 = vmatprep.mubr.f32.mxu0 0.0
        %2555 = vmatmul.mubr.f32.gmra.mrb[0].mxu0 %v2482
        %v2556 = vpop.f32.mrb[0].mxu0
        %v2557 = vadd.f32 %v2478, %v2556
        %v2558 = vpop.f32.mrb[0].mxu0
        %2559 = vmatprep.mubr.f32.mxu0 0.0
        %2560 = vmatmul.mubr.f32.gmra.mrb[0].mxu0 %v2485
        %v2561 = vpop.f32.mrb[0].mxu0
        %v2562 = vadd.f32 %v2478, %v2561
        %v2563 = vpop.f32.mrb[0].mxu0
        %2564 = vmatprep.mubr.f32.mxu0 0.0
        %2565 = vmatmul.mubr.f32.gmra.mrb[0].mxu0 %v2488
        %v2566 = vpop.f32.mrb[0].mxu0
        %v2567 = vadd.f32 %v2478, %v2566
        %v2568 = vpop.f32.mrb[0].mxu0
        %2569 = vdwg.mxu0
        %v2570 = vadd.f32 %v2281, %v2557
        %v2571 = vadd.f32 %v2282, %v2562
        %v2572 = vadd.f32 %v2283, %v2567
        %v2573 = vld [vmem:[%s24] sm:$0x1]
        %v2574 = vld [vmem:[%s25] sm:$0x1]
        %v2575 = vsel %vm1349, %v2570, 0.0
        %2576 = vadd.xlane.f32.xlu0 %v2575
        %v2577 = vpop.xlane.xlu0 %2576
        %v2578 = vsel %vm1349, %v2571, 0.0
        %2579 = vadd.xlane.f32.xlu0 %v2578
        %v2580 = vpop.xlane.xlu0 %2579
        %v2581 = vsel %vm1349, %v2572, 0.0
        %2582 = vadd.xlane.f32.xlu0 %v2581
        %v2583 = vpop.xlane.xlu0 %2582
        %v2584 = vmul.f32 %v2577, %v2235
        %v2585 = vmul.f32 %v2580, %v2235
        %v2586 = vmul.f32 %v2583, %v2235
        %v2587 = vsub.f32 %v2570, %v2584
        %v2588 = vsub.f32 %v2571, %v2585
        %v2589 = vsub.f32 %v2572, %v2586
        %v2590 = vmul.f32 %v2587, %v2587
        %v2591 = vmul.f32 %v2588, %v2588
        %v2592 = vmul.f32 %v2589, %v2589
        %v2593 = vsel %vm1349, %v2590, 0.0
        %2594 = vadd.xlane.f32.xlu0 %v2593
        %v2595 = vpop.xlane.xlu0 %2594
        %v2596 = vsel %vm1349, %v2591, 0.0
        %2597 = vadd.xlane.f32.xlu0 %v2596
        %v2598 = vpop.xlane.xlu0 %2597
        %v2599 = vsel %vm1349, %v2592, 0.0
        %2600 = vadd.xlane.f32.xlu0 %v2599
        %v2601 = vpop.xlane.xlu0 %2600
        %v2602 = vmul.f32 %v2595, %v2235
        %v2603 = vmul.f32 %v2598, %v2235
        %v2604 = vmul.f32 %v2601, %v2235
        %v2605 = vadd.f32 %v2602, 1e-05
        %v2606 = vadd.f32 %v2603, 1e-05
        %v2607 = vadd.f32 %v2604, 1e-05
        %v2608 = vrsqrt.pop %v2605
        %v2609 = vrsqrt.pop %v2606
        %v2610 = vrsqrt.pop %v2607
        %v2611 = vmul.f32 %v2587, %v2608
        %v2612 = vmul.f32 %v2588, %v2609
        %v2613 = vmul.f32 %v2589, %v2610
        %v2615 = vlaneseq
        %v2616 = vshrl.u32 %v2615, 7
        %v2617 = vsub.s32 0, %v2616
        %v2618 = vrot.slane %v2573, %v2617
        %v2620 = vmul.f32 %v2611, %v2618
        %v2621 = vmul.f32 %v2612, %v2618
        %v2622 = vmul.f32 %v2613, %v2618
        %v2624 = vlaneseq
        %v2625 = vshrl.u32 %v2624, 7
        %v2626 = vsub.s32 0, %v2625
        %v2627 = vrot.slane %v2574, %v2626
        %v2629 = vadd.f32 %v2620, %v2627
        %v2630 = vadd.f32 %v2621, %v2627
        %v2631 = vadd.f32 %v2622, %v2627
        %s2632 = scalar_lea.vmem %s10, 32
        %v2633 = vld [vmem:[%s2632] sm:$0xff]
        %v2634 = vld [vmem:[%s2632 + $0x8] sm:$0xff]
        %v2635 = vld [vmem:[%s2632 + $0x10] sm:$0xff]
        %v2636 = vld [vmem:[%s2632 + $0x18] sm:$0xff]
        %s2637 = scalar_lea.vmem %s11, 1
        %v2638 = vld [vmem:[%s2637] sm:$0x1]
        %v2640 = vlaneseq
        %v2641 = vshrl.u32 %v2640, 7
        %v2642 = vsub.s32 0, %v2641
        %v2643 = vrot.slane %v2638, %v2642
        %v2646 = vsel %vm1349, %v2629, 0
        %v2649 = vsel %vm1349, %v2630, 0
        %v2652 = vsel %vm1349, %v2631, 0
        %2654 = vmatprep.subr.mxu0 0.0
        %2655 = vmatpush1.msra.mxu0 %v2633
        %2656 = vmatprep.subr.mxu0 0.0
        %2657 = vmatpush1.msra.mxu0 %v2634
        %2658 = vmatprep.subr.mxu0 0.0
        %2659 = vmatpush1.msra.mxu0 %v2635
        %2660 = vmatprep.subr.mxu0 0.0
        %2661 = vmatpush1.msra.mxu0 %v2636
        %2662 = vmatprep.subr.mxu0 0.0
        %2663 = vmatpush1.msra.mxu0 0.0
        %2664 = vmatprep.subr.mxu0 0.0
        %2665 = vmatpush1.msra.mxu0 0.0
        %2666 = vmatprep.subr.mxu0 0.0
        %2667 = vmatpush1.msra.mxu0 0.0
        %2668 = vmatprep.subr.mxu0 0.0
        %2669 = vmatpush1.msra.mxu0 0.0
        %2670 = vmatprep.subr.mxu0 0.0
        %2671 = vmatpush1.msra.mxu0 0.0
        %2672 = vmatprep.subr.mxu0 0.0
        %2673 = vmatpush1.msra.mxu0 0.0
        %2674 = vmatprep.subr.mxu0 0.0
        %2675 = vmatpush1.msra.mxu0 0.0
        %2676 = vmatprep.subr.mxu0 0.0
        %2677 = vmatpush1.msra.mxu0 0.0
        %2678 = vmatprep.subr.mxu0 0.0
        %2679 = vmatpush1.msra.mxu0 0.0
        %2680 = vmatprep.subr.mxu0 0.0
        %2681 = vmatpush1.msra.mxu0 0.0
        %2682 = vmatprep.subr.mxu0 0.0
        %2683 = vmatpush1.msra.mxu0 0.0
        %2684 = vmatprep.subr.mxu0 0.0
        %2685 = vmatpush1.msra.mxu0 0.0
        %2686 = vmatprep.subr.mxu0 0.0
        %2687 = vmatpush1.msra.mxu0 0.0
        %2688 = vmatprep.subr.mxu0 0.0
        %2689 = vmatpush1.msra.mxu0 0.0
        %2690 = vmatprep.subr.mxu0 0.0
        %2691 = vmatpush1.msra.mxu0 0.0
        %2692 = vmatprep.subr.mxu0 0.0
        %2693 = vmatpush1.msra.mxu0 0.0
        %2694 = vmatprep.subr.mxu0 0.0
        %2695 = vmatpush1.msra.mxu0 0.0
        %2696 = vmatprep.subr.mxu0 0.0
        %2697 = vmatpush1.msra.mxu0 0.0
        %2698 = vmatprep.subr.mxu0 0.0
        %2699 = vmatpush1.msra.mxu0 0.0
        %2700 = vmatprep.subr.mxu0 0.0
        %2701 = vmatpush1.msra.mxu0 0.0
        %2702 = vmatprep.subr.mxu0 0.0
        %2703 = vmatpush1.msra.mxu0 0.0
        %2704 = vmatprep.subr.mxu0 0.0
        %2705 = vmatpush1.msra.mxu0 0.0
        %2706 = vmatprep.subr.mxu0 0.0
        %2707 = vmatpush1.msra.mxu0 0.0
        %2708 = vmatprep.subr.mxu0 0.0
        %2709 = vmatpush1.msra.mxu0 0.0
        %2710 = vmatprep.subr.mxu0 0.0
        %2711 = vmatpush1.msra.mxu0 0.0
        %2712 = vmatprep.subr.mxu0 0.0
        %2713 = vmatpush1.msra.mxu0 0.0
        %2714 = vmatprep.subr.mxu0 0.0
        %2715 = vmatpush1.msra.mxu0 0.0
        %2716 = vmatprep.subr.mxu0 0.0
        %2717 = vmatpush1.msra.mxu0 0.0
        %2718 = vmatprep.mubr.f32.mxu0 0.0
        %2719 = vmatmul.mubr.f32.gmra.mrb[0].mxu0 %v2646
        %v2720 = vpop.f32.mrb[0].mxu0
        %v2721 = vadd.f32 %v2643, %v2720
        %v2722 = vpop.f32.mrb[0].mxu0
        %2723 = vmatprep.mubr.f32.mxu0 0.0
        %2724 = vmatmul.mubr.f32.gmra.mrb[0].mxu0 %v2649
        %v2725 = vpop.f32.mrb[0].mxu0
        %v2726 = vadd.f32 %v2643, %v2725
        %v2727 = vpop.f32.mrb[0].mxu0
        %2728 = vmatprep.mubr.f32.mxu0 0.0
        %2729 = vmatmul.mubr.f32.gmra.mrb[0].mxu0 %v2652
        %v2730 = vpop.f32.mrb[0].mxu0
        %v2731 = vadd.f32 %v2643, %v2730
        %v2732 = vpop.f32.mrb[0].mxu0
        %2733 = vdwg.mxu0
        %v2734 = vmul.f32 %v2721, 0.35355338
        %v2735 = vmul.f32 %v2726, 0.35355338
        %v2736 = vmul.f32 %v2731, 0.35355338
        %s2737 = scalar_lea.vmem %s12, 32
        %v2738 = vld [vmem:[%s2737] sm:$0xff]
        %v2739 = vld [vmem:[%s2737 + $0x8] sm:$0xff]
        %v2740 = vld [vmem:[%s2737 + $0x10] sm:$0xff]
        %v2741 = vld [vmem:[%s2737 + $0x18] sm:$0xff]
        %s2742 = scalar_lea.vmem %s13, 1
        %v2743 = vld [vmem:[%s2742] sm:$0x1]
        %v2745 = vlaneseq
        %v2746 = vshrl.u32 %v2745, 7
        %v2747 = vsub.s32 0, %v2746
        %v2748 = vrot.slane %v2743, %v2747
        %2750 = vmatprep.subr.mxu0 0.0
        %2751 = vmatpush1.msra.mxu0 %v2738
        %2752 = vmatprep.subr.mxu0 0.0
        %2753 = vmatpush1.msra.mxu0 %v2739
        %2754 = vmatprep.subr.mxu0 0.0
        %2755 = vmatpush1.msra.mxu0 %v2740
        %2756 = vmatprep.subr.mxu0 0.0
        %2757 = vmatpush1.msra.mxu0 %v2741
        %2758 = vmatprep.subr.mxu0 0.0
        %2759 = vmatpush1.msra.mxu0 0.0
        %2760 = vmatprep.subr.mxu0 0.0
        %2761 = vmatpush1.msra.mxu0 0.0
        %2762 = vmatprep.subr.mxu0 0.0
        %2763 = vmatpush1.msra.mxu0 0.0
        %2764 = vmatprep.subr.mxu0 0.0
        %2765 = vmatpush1.msra.mxu0 0.0
        %2766 = vmatprep.subr.mxu0 0.0
        %2767 = vmatpush1.msra.mxu0 0.0
        %2768 = vmatprep.subr.mxu0 0.0
        %2769 = vmatpush1.msra.mxu0 0.0
        %2770 = vmatprep.subr.mxu0 0.0
        %2771 = vmatpush1.msra.mxu0 0.0
        %2772 = vmatprep.subr.mxu0 0.0
        %2773 = vmatpush1.msra.mxu0 0.0
        %2774 = vmatprep.subr.mxu0 0.0
        %2775 = vmatpush1.msra.mxu0 0.0
        %2776 = vmatprep.subr.mxu0 0.0
        %2777 = vmatpush1.msra.mxu0 0.0
        %2778 = vmatprep.subr.mxu0 0.0
        %2779 = vmatpush1.msra.mxu0 0.0
        %2780 = vmatprep.subr.mxu0 0.0
        %2781 = vmatpush1.msra.mxu0 0.0
        %2782 = vmatprep.subr.mxu0 0.0
        %2783 = vmatpush1.msra.mxu0 0.0
        %2784 = vmatprep.subr.mxu0 0.0
        %2785 = vmatpush1.msra.mxu0 0.0
        %2786 = vmatprep.subr.mxu0 0.0
        %2787 = vmatpush1.msra.mxu0 0.0
        %2788 = vmatprep.subr.mxu0 0.0
        %2789 = vmatpush1.msra.mxu0 0.0
        %2790 = vmatprep.subr.mxu0 0.0
        %2791 = vmatpush1.msra.mxu0 0.0
        %2792 = vmatprep.subr.mxu0 0.0
        %2793 = vmatpush1.msra.mxu0 0.0
        %2794 = vmatprep.subr.mxu0 0.0
        %2795 = vmatpush1.msra.mxu0 0.0
        %2796 = vmatprep.subr.mxu0 0.0
        %2797 = vmatpush1.msra.mxu0 0.0
        %2798 = vmatprep.subr.mxu0 0.0
        %2799 = vmatpush1.msra.mxu0 0.0
        %2800 = vmatprep.subr.mxu0 0.0
        %2801 = vmatpush1.msra.mxu0 0.0
        %2802 = vmatprep.subr.mxu0 0.0
        %2803 = vmatpush1.msra.mxu0 0.0
        %2804 = vmatprep.subr.mxu0 0.0
        %2805 = vmatpush1.msra.mxu0 0.0
        %2806 = vmatprep.subr.mxu0 0.0
        %2807 = vmatpush1.msra.mxu0 0.0
        %2808 = vmatprep.subr.mxu0 0.0
        %2809 = vmatpush1.msra.mxu0 0.0
        %2810 = vmatprep.subr.mxu0 0.0
        %2811 = vmatpush1.msra.mxu0 0.0
        %2812 = vmatprep.subr.mxu0 0.0
        %2813 = vmatpush1.msra.mxu0 0.0
        %2814 = vmatprep.mubr.f32.mxu0 0.0
        %2815 = vmatmul.mubr.f32.gmra.mrb[0].mxu0 %v2646
        %v2816 = vpop.f32.mrb[0].mxu0
        %v2817 = vadd.f32 %v2748, %v2816
        %v2818 = vpop.f32.mrb[0].mxu0
        %2819 = vmatprep.mubr.f32.mxu0 0.0
        %2820 = vmatmul.mubr.f32.gmra.mrb[0].mxu0 %v2649
        %v2821 = vpop.f32.mrb[0].mxu0
        %v2822 = vadd.f32 %v2748, %v2821
        %v2823 = vpop.f32.mrb[0].mxu0
        %2824 = vmatprep.mubr.f32.mxu0 0.0
        %2825 = vmatmul.mubr.f32.gmra.mrb[0].mxu0 %v2652
        %v2826 = vpop.f32.mrb[0].mxu0
        %v2827 = vadd.f32 %v2748, %v2826
        %v2828 = vpop.f32.mrb[0].mxu0
        %2829 = vdwg.mxu0
        %s2830 = scalar_lea.vmem %s14, 32
        %v2831 = vld [vmem:[%s2830] sm:$0xff]
        %v2832 = vld [vmem:[%s2830 + $0x8] sm:$0xff]
        %v2833 = vld [vmem:[%s2830 + $0x10] sm:$0xff]
        %v2834 = vld [vmem:[%s2830 + $0x18] sm:$0xff]
        %s2835 = scalar_lea.vmem %s15, 1
        %v2836 = vld [vmem:[%s2835] sm:$0x1]
        %v2838 = vlaneseq
        %v2839 = vshrl.u32 %v2838, 7
        %v2840 = vsub.s32 0, %v2839
        %v2841 = vrot.slane %v2836, %v2840
        %2843 = vmatprep.subr.mxu0 0.0
        %2844 = vmatpush1.msra.mxu0 %v2831
        %2845 = vmatprep.subr.mxu0 0.0
        %2846 = vmatpush1.msra.mxu0 %v2832
        %2847 = vmatprep.subr.mxu0 0.0
        %2848 = vmatpush1.msra.mxu0 %v2833
        %2849 = vmatprep.subr.mxu0 0.0
        %2850 = vmatpush1.msra.mxu0 %v2834
        %2851 = vmatprep.subr.mxu0 0.0
        %2852 = vmatpush1.msra.mxu0 0.0
        %2853 = vmatprep.subr.mxu0 0.0
        %2854 = vmatpush1.msra.mxu0 0.0
        %2855 = vmatprep.subr.mxu0 0.0
        %2856 = vmatpush1.msra.mxu0 0.0
        %2857 = vmatprep.subr.mxu0 0.0
        %2858 = vmatpush1.msra.mxu0 0.0
        %2859 = vmatprep.subr.mxu0 0.0
        %2860 = vmatpush1.msra.mxu0 0.0
        %2861 = vmatprep.subr.mxu0 0.0
        %2862 = vmatpush1.msra.mxu0 0.0
        %2863 = vmatprep.subr.mxu0 0.0
        %2864 = vmatpush1.msra.mxu0 0.0
        %2865 = vmatprep.subr.mxu0 0.0
        %2866 = vmatpush1.msra.mxu0 0.0
        %2867 = vmatprep.subr.mxu0 0.0
        %2868 = vmatpush1.msra.mxu0 0.0
        %2869 = vmatprep.subr.mxu0 0.0
        %2870 = vmatpush1.msra.mxu0 0.0
        %2871 = vmatprep.subr.mxu0 0.0
        %2872 = vmatpush1.msra.mxu0 0.0
        %2873 = vmatprep.subr.mxu0 0.0
        %2874 = vmatpush1.msra.mxu0 0.0
        %2875 = vmatprep.subr.mxu0 0.0
        %2876 = vmatpush1.msra.mxu0 0.0
        %2877 = vmatprep.subr.mxu0 0.0
        %2878 = vmatpush1.msra.mxu0 0.0
        %2879 = vmatprep.subr.mxu0 0.0
        %2880 = vmatpush1.msra.mxu0 0.0
        %2881 = vmatprep.subr.mxu0 0.0
        %2882 = vmatpush1.msra.mxu0 0.0
        %2883 = vmatprep.subr.mxu0 0.0
        %2884 = vmatpush1.msra.mxu0 0.0
        %2885 = vmatprep.subr.mxu0 0.0
        %2886 = vmatpush1.msra.mxu0 0.0
        %2887 = vmatprep.subr.mxu0 0.0
        %2888 = vmatpush1.msra.mxu0 0.0
        %2889 = vmatprep.subr.mxu0 0.0
        %2890 = vmatpush1.msra.mxu0 0.0
        %2891 = vmatprep.subr.mxu0 0.0
        %2892 = vmatpush1.msra.mxu0 0.0
        %2893 = vmatprep.subr.mxu0 0.0
        %2894 = vmatpush1.msra.mxu0 0.0
        %2895 = vmatprep.subr.mxu0 0.0
        %2896 = vmatpush1.msra.mxu0 0.0
        %2897 = vmatprep.subr.mxu0 0.0
        %2898 = vmatpush1.msra.mxu0 0.0
        %2899 = vmatprep.subr.mxu0 0.0
        %2900 = vmatpush1.msra.mxu0 0.0
        %2901 = vmatprep.subr.mxu0 0.0
        %2902 = vmatpush1.msra.mxu0 0.0
        %2903 = vmatprep.subr.mxu0 0.0
        %2904 = vmatpush1.msra.mxu0 0.0
        %2905 = vmatprep.subr.mxu0 0.0
        %2906 = vmatpush1.msra.mxu0 0.0
        %2907 = vmatprep.mubr.f32.mxu0 0.0
        %2908 = vmatmul.mubr.f32.gmra.mrb[0].mxu0 %v2646
        %v2909 = vpop.f32.mrb[0].mxu0
        %v2910 = vadd.f32 %v2841, %v2909
        %v2911 = vpop.f32.mrb[0].mxu0
        %2912 = vmatprep.mubr.f32.mxu0 0.0
        %2913 = vmatmul.mubr.f32.gmra.mrb[0].mxu0 %v2649
        %v2914 = vpop.f32.mrb[0].mxu0
        %v2915 = vadd.f32 %v2841, %v2914
        %v2916 = vpop.f32.mrb[0].mxu0
        %2917 = vmatprep.mubr.f32.mxu0 0.0
        %2918 = vmatmul.mubr.f32.gmra.mrb[0].mxu0 %v2652
        %v2919 = vpop.f32.mrb[0].mxu0
        %v2920 = vadd.f32 %v2841, %v2919
        %v2921 = vpop.f32.mrb[0].mxu0
        %2922 = vdwg.mxu0
        %v2923 = vmul.f32 %v2734, %v1322
        %v2924 = vmul.f32 %v2735, %v1322
        %v2925 = vmul.f32 %v2736, %v1322
        %v2926 = vmul.f32 %v2734, %v1327
        %v2927 = vmul.f32 %v2735, %v1327
        %v2928 = vmul.f32 %v2736, %v1327
        %v2929 = vmul.f32 %v2734, %v1332
        %v2930 = vmul.f32 %v2735, %v1332
        %v2931 = vmul.f32 %v2736, %v1332
        %v2932 = vmul.f32 %v2734, %v1337
        %v2933 = vmul.f32 %v2735, %v1337
        %v2934 = vmul.f32 %v2736, %v1337
        %v2936 = vsel %vm1349, %v2923, 0
        %v2939 = vsel %vm1349, %v2924, 0
        %v2942 = vsel %vm1349, %v2925, 0
        %v2945 = vsel %vm1349, %v2926, 0
        %v2948 = vsel %vm1349, %v2927, 0
        %v2951 = vsel %vm1349, %v2928, 0
        %v2954 = vsel %vm1349, %v2929, 0
        %v2957 = vsel %vm1349, %v2930, 0
        %v2960 = vsel %vm1349, %v2931, 0
        %v2963 = vsel %vm1349, %v2932, 0
        %v2966 = vsel %vm1349, %v2933, 0
        %v2969 = vsel %vm1349, %v2934, 0
        %v2972 = vsel %vm1349, %v2817, 0
        %v2975 = vsel %vm1349, %v2822, 0
        %v2978 = vsel %vm1349, %v2827, 0
        %2980 = vmatprep.subr.mxu0 0.0
        %2981 = vmatpush1.xpose.msra.mxu0 %v2972
        %2982 = vmatprep.subr.mxu0 0.0
        %2983 = vmatpush1.xpose.msra.mxu0 %v2975
        %2984 = vmatprep.subr.mxu0 0.0
        %2985 = vmatpush1.xpose.msra.mxu0 %v2978
        %2986 = vmatprep.subr.mxu0 0.0
        %2987 = vmatpush1.xpose.msra.mxu0 0.0
        %2988 = vmatprep.subr.mxu0 0.0
        %2989 = vmatpush1.xpose.msra.mxu0 0.0
        %2990 = vmatprep.subr.mxu0 0.0
        %2991 = vmatpush1.xpose.msra.mxu0 0.0
        %2992 = vmatprep.subr.mxu0 0.0
        %2993 = vmatpush1.xpose.msra.mxu0 0.0
        %2994 = vmatprep.subr.mxu0 0.0
        %2995 = vmatpush1.xpose.msra.mxu0 0.0
        %2996 = vmatprep.subr.mxu0 0.0
        %2997 = vmatpush1.xpose.msra.mxu0 0.0
        %2998 = vmatprep.subr.mxu0 0.0
        %2999 = vmatpush1.xpose.msra.mxu0 0.0
        %3000 = vmatprep.subr.mxu0 0.0
        %3001 = vmatpush1.xpose.msra.mxu0 0.0
        %3002 = vmatprep.subr.mxu0 0.0
        %3003 = vmatpush1.xpose.msra.mxu0 0.0
        %3004 = vmatprep.subr.mxu0 0.0
        %3005 = vmatpush1.xpose.msra.mxu0 0.0
        %3006 = vmatprep.subr.mxu0 0.0
        %3007 = vmatpush1.xpose.msra.mxu0 0.0
        %3008 = vmatprep.subr.mxu0 0.0
        %3009 = vmatpush1.xpose.msra.mxu0 0.0
        %3010 = vmatprep.subr.mxu0 0.0
        %3011 = vmatpush1.xpose.msra.mxu0 0.0
        %3012 = vmatprep.subr.mxu0 0.0
        %3013 = vmatpush1.xpose.msra.mxu0 0.0
        %3014 = vmatprep.subr.mxu0 0.0
        %3015 = vmatpush1.xpose.msra.mxu0 0.0
        %3016 = vmatprep.subr.mxu0 0.0
        %3017 = vmatpush1.xpose.msra.mxu0 0.0
        %3018 = vmatprep.subr.mxu0 0.0
        %3019 = vmatpush1.xpose.msra.mxu0 0.0
        %3020 = vmatprep.subr.mxu0 0.0
        %3021 = vmatpush1.xpose.msra.mxu0 0.0
        %3022 = vmatprep.subr.mxu0 0.0
        %3023 = vmatpush1.xpose.msra.mxu0 0.0
        %3024 = vmatprep.subr.mxu0 0.0
        %3025 = vmatpush1.xpose.msra.mxu0 0.0
        %3026 = vmatprep.subr.mxu0 0.0
        %3027 = vmatpush1.xpose.msra.mxu0 0.0
        %3028 = vmatprep.subr.mxu0 0.0
        %3029 = vmatpush1.xpose.msra.mxu0 0.0
        %3030 = vmatprep.subr.mxu0 0.0
        %3031 = vmatpush1.xpose.msra.mxu0 0.0
        %3032 = vmatprep.subr.mxu0 0.0
        %3033 = vmatpush1.xpose.msra.mxu0 0.0
        %3034 = vmatprep.subr.mxu0 0.0
        %3035 = vmatpush1.xpose.msra.mxu0 0.0
        %3036 = vmatprep.subr.mxu0 0.0
        %3037 = vmatpush1.xpose.msra.mxu0 0.0
        %3038 = vmatprep.subr.mxu0 0.0
        %3039 = vmatpush1.xpose.msra.mxu0 0.0
        %3040 = vmatprep.subr.mxu0 0.0
        %3041 = vmatpush1.xpose.msra.mxu0 0.0
        %3042 = vmatprep.subr.mxu0 0.0
        %3043 = vmatpush1.xpose.msra.mxu0 0.0
        %3044 = vmatprep.mubr.f32.mxu0 0.0
        %3045 = vmatmul.mubr.f32.gmra.mrb[0].mxu0 %v2936
        %v3046 = vpop.f32.mrb[0].mxu0
        %v3047 = vadd.f32 0.0, %v3046
        %v3048 = vpop.f32.mrb[0].mxu0
        %3049 = vmatprep.mubr.f32.mxu0 0.0
        %3050 = vmatmul.mubr.f32.gmra.mrb[0].mxu0 %v2939
        %v3051 = vpop.f32.mrb[0].mxu0
        %v3052 = vadd.f32 0.0, %v3051
        %v3053 = vpop.f32.mrb[0].mxu0
        %3054 = vmatprep.mubr.f32.mxu0 0.0
        %3055 = vmatmul.mubr.f32.gmra.mrb[0].mxu0 %v2942
        %v3056 = vpop.f32.mrb[0].mxu0
        %v3057 = vadd.f32 0.0, %v3056
        %v3058 = vpop.f32.mrb[0].mxu0
        %3059 = vmatprep.mubr.f32.mxu0 0.0
        %3060 = vmatmul.mubr.f32.gmra.mrb[0].mxu0 %v2945
        %v3061 = vpop.f32.mrb[0].mxu0
        %v3062 = vadd.f32 0.0, %v3061
        %v3063 = vpop.f32.mrb[0].mxu0
        %3064 = vmatprep.mubr.f32.mxu0 0.0
        %3065 = vmatmul.mubr.f32.gmra.mrb[0].mxu0 %v2948
        %v3066 = vpop.f32.mrb[0].mxu0
        %v3067 = vadd.f32 0.0, %v3066
        %v3068 = vpop.f32.mrb[0].mxu0
        %3069 = vmatprep.mubr.f32.mxu0 0.0
        %3070 = vmatmul.mubr.f32.gmra.mrb[0].mxu0 %v2951
        %v3071 = vpop.f32.mrb[0].mxu0
        %v3072 = vadd.f32 0.0, %v3071
        %v3073 = vpop.f32.mrb[0].mxu0
        %3074 = vmatprep.mubr.f32.mxu0 0.0
        %3075 = vmatmul.mubr.f32.gmra.mrb[0].mxu0 %v2954
        %v3076 = vpop.f32.mrb[0].mxu0
        %v3077 = vadd.f32 0.0, %v3076
        %v3078 = vpop.f32.mrb[0].mxu0
        %3079 = vmatprep.mubr.f32.mxu0 0.0
        %3080 = vmatmul.mubr.f32.gmra.mrb[0].mxu0 %v2957
        %v3081 = vpop.f32.mrb[0].mxu0
        %v3082 = vadd.f32 0.0, %v3081
        %v3083 = vpop.f32.mrb[0].mxu0
        %3084 = vmatprep.mubr.f32.mxu0 0.0
        %3085 = vmatmul.mubr.f32.gmra.mrb[0].mxu0 %v2960
        %v3086 = vpop.f32.mrb[0].mxu0
        %v3087 = vadd.f32 0.0, %v3086
        %v3088 = vpop.f32.mrb[0].mxu0
        %3089 = vmatprep.mubr.f32.mxu0 0.0
        %3090 = vmatmul.mubr.f32.gmra.mrb[0].mxu0 %v2963
        %v3091 = vpop.f32.mrb[0].mxu0
        %v3092 = vadd.f32 0.0, %v3091
        %v3093 = vpop.f32.mrb[0].mxu0
        %3094 = vmatprep.mubr.f32.mxu0 0.0
        %3095 = vmatmul.mubr.f32.gmra.mrb[0].mxu0 %v2966
        %v3096 = vpop.f32.mrb[0].mxu0
        %v3097 = vadd.f32 0.0, %v3096
        %v3098 = vpop.f32.mrb[0].mxu0
        %3099 = vmatprep.mubr.f32.mxu0 0.0
        %3100 = vmatmul.mubr.f32.gmra.mrb[0].mxu0 %v2969
        %v3101 = vpop.f32.mrb[0].mxu0
        %v3102 = vadd.f32 0.0, %v3101
        %v3103 = vpop.f32.mrb[0].mxu0
        %3104 = vdwg.mxu0
        %v3105 = vsel %vm1806, %v3047, -inf
        %3106 = vmax.xlane.f32.xlu0 %v3105
        %v3107 = vpop.xlane.xlu0 %3106
        %v3108 = vsel %vm1806, %v3052, -inf
        %3109 = vmax.xlane.f32.xlu0 %v3108
        %v3110 = vpop.xlane.xlu0 %3109
        %v3111 = vsel %vm1806, %v3057, -inf
        %3112 = vmax.xlane.f32.xlu0 %v3111
        %v3113 = vpop.xlane.xlu0 %3112
        %v3114 = vsel %vm1806, %v3062, -inf
        %3115 = vmax.xlane.f32.xlu0 %v3114
        %v3116 = vpop.xlane.xlu0 %3115
        %v3117 = vsel %vm1806, %v3067, -inf
        %3118 = vmax.xlane.f32.xlu0 %v3117
        %v3119 = vpop.xlane.xlu0 %3118
        %v3120 = vsel %vm1806, %v3072, -inf
        %3121 = vmax.xlane.f32.xlu0 %v3120
        %v3122 = vpop.xlane.xlu0 %3121
        %v3123 = vsel %vm1806, %v3077, -inf
        %3124 = vmax.xlane.f32.xlu0 %v3123
        %v3125 = vpop.xlane.xlu0 %3124
        %v3126 = vsel %vm1806, %v3082, -inf
        %3127 = vmax.xlane.f32.xlu0 %v3126
        %v3128 = vpop.xlane.xlu0 %3127
        %v3129 = vsel %vm1806, %v3087, -inf
        %3130 = vmax.xlane.f32.xlu0 %v3129
        %v3131 = vpop.xlane.xlu0 %3130
        %v3132 = vsel %vm1806, %v3092, -inf
        %3133 = vmax.xlane.f32.xlu0 %v3132
        %v3134 = vpop.xlane.xlu0 %3133
        %v3135 = vsel %vm1806, %v3097, -inf
        %3136 = vmax.xlane.f32.xlu0 %v3135
        %v3137 = vpop.xlane.xlu0 %3136
        %v3138 = vsel %vm1806, %v3102, -inf
        %3139 = vmax.xlane.f32.xlu0 %v3138
        %v3140 = vpop.xlane.xlu0 %3139
        %v3141 = vsub.f32 %v3047, %v3107
        %v3142 = vsub.f32 %v3052, %v3110
        %v3143 = vsub.f32 %v3057, %v3113
        %v3144 = vsub.f32 %v3062, %v3116
        %v3145 = vsub.f32 %v3067, %v3119
        %v3146 = vsub.f32 %v3072, %v3122
        %v3147 = vsub.f32 %v3077, %v3125
        %v3148 = vsub.f32 %v3082, %v3128
        %v3149 = vsub.f32 %v3087, %v3131
        %v3150 = vsub.f32 %v3092, %v3134
        %v3151 = vsub.f32 %v3097, %v3137
        %v3152 = vsub.f32 %v3102, %v3140
        %v3153 = vmul.f32 %v3141, 1.442695
        %v3154 = vpow.pop %v3153
        %v3155 = vmul.f32 %v3142, 1.442695
        %v3156 = vpow.pop %v3155
        %v3157 = vmul.f32 %v3143, 1.442695
        %v3158 = vpow.pop %v3157
        %v3159 = vmul.f32 %v3144, 1.442695
        %v3160 = vpow.pop %v3159
        %v3161 = vmul.f32 %v3145, 1.442695
        %v3162 = vpow.pop %v3161
        %v3163 = vmul.f32 %v3146, 1.442695
        %v3164 = vpow.pop %v3163
        %v3165 = vmul.f32 %v3147, 1.442695
        %v3166 = vpow.pop %v3165
        %v3167 = vmul.f32 %v3148, 1.442695
        %v3168 = vpow.pop %v3167
        %v3169 = vmul.f32 %v3149, 1.442695
        %v3170 = vpow.pop %v3169
        %v3171 = vmul.f32 %v3150, 1.442695
        %v3172 = vpow.pop %v3171
        %v3173 = vmul.f32 %v3151, 1.442695
        %v3174 = vpow.pop %v3173
        %v3175 = vmul.f32 %v3152, 1.442695
        %v3176 = vpow.pop %v3175
        %v3177 = vsel %vm1806, %v3154, 0.0
        %3178 = vadd.xlane.f32.xlu0 %v3177
        %v3179 = vpop.xlane.xlu0 %3178
        %v3180 = vsel %vm1806, %v3156, 0.0
        %3181 = vadd.xlane.f32.xlu0 %v3180
        %v3182 = vpop.xlane.xlu0 %3181
        %v3183 = vsel %vm1806, %v3158, 0.0
        %3184 = vadd.xlane.f32.xlu0 %v3183
        %v3185 = vpop.xlane.xlu0 %3184
        %v3186 = vsel %vm1806, %v3160, 0.0
        %3187 = vadd.xlane.f32.xlu0 %v3186
        %v3188 = vpop.xlane.xlu0 %3187
        %v3189 = vsel %vm1806, %v3162, 0.0
        %3190 = vadd.xlane.f32.xlu0 %v3189
        %v3191 = vpop.xlane.xlu0 %3190
        %v3192 = vsel %vm1806, %v3164, 0.0
        %3193 = vadd.xlane.f32.xlu0 %v3192
        %v3194 = vpop.xlane.xlu0 %3193
        %v3195 = vsel %vm1806, %v3166, 0.0
        %3196 = vadd.xlane.f32.xlu0 %v3195
        %v3197 = vpop.xlane.xlu0 %3196
        %v3198 = vsel %vm1806, %v3168, 0.0
        %3199 = vadd.xlane.f32.xlu0 %v3198
        %v3200 = vpop.xlane.xlu0 %3199
        %v3201 = vsel %vm1806, %v3170, 0.0
        %3202 = vadd.xlane.f32.xlu0 %v3201
        %v3203 = vpop.xlane.xlu0 %3202
        %v3204 = vsel %vm1806, %v3172, 0.0
        %3205 = vadd.xlane.f32.xlu0 %v3204
        %v3206 = vpop.xlane.xlu0 %3205
        %v3207 = vsel %vm1806, %v3174, 0.0
        %3208 = vadd.xlane.f32.xlu0 %v3207
        %v3209 = vpop.xlane.xlu0 %3208
        %v3210 = vsel %vm1806, %v3176, 0.0
        %3211 = vadd.xlane.f32.xlu0 %v3210
        %v3212 = vpop.xlane.xlu0 %3211
        %v3213 = vrcp.pop %v3179
        %v3214 = vmul.f32 %v3154, %v3213
        %v3215 = vrcp.pop %v3182
        %v3216 = vmul.f32 %v3156, %v3215
        %v3217 = vrcp.pop %v3185
        %v3218 = vmul.f32 %v3158, %v3217
        %v3219 = vrcp.pop %v3188
        %v3220 = vmul.f32 %v3160, %v3219
        %v3221 = vrcp.pop %v3191
        %v3222 = vmul.f32 %v3162, %v3221
        %v3223 = vrcp.pop %v3194
        %v3224 = vmul.f32 %v3164, %v3223
        %v3225 = vrcp.pop %v3197
        %v3226 = vmul.f32 %v3166, %v3225
        %v3227 = vrcp.pop %v3200
        %v3228 = vmul.f32 %v3168, %v3227
        %v3229 = vrcp.pop %v3203
        %v3230 = vmul.f32 %v3170, %v3229
        %v3231 = vrcp.pop %v3206
        %v3232 = vmul.f32 %v3172, %v3231
        %v3233 = vrcp.pop %v3209
        %v3234 = vmul.f32 %v3174, %v3233
        %v3235 = vrcp.pop %v3212
        %v3236 = vmul.f32 %v3176, %v3235
        %v3238 = vsel %vm1806, %v3214, 0
        %v3241 = vsel %vm1806, %v3216, 0
        %v3244 = vsel %vm1806, %v3218, 0
        %v3247 = vsel %vm1806, %v3220, 0
        %v3250 = vsel %vm1806, %v3222, 0
        %v3253 = vsel %vm1806, %v3224, 0
        %v3256 = vsel %vm1806, %v3226, 0
        %v3259 = vsel %vm1806, %v3228, 0
        %v3262 = vsel %vm1806, %v3230, 0
        %v3265 = vsel %vm1806, %v3232, 0
        %v3268 = vsel %vm1806, %v3234, 0
        %v3271 = vsel %vm1806, %v3236, 0
        %3273 = vmatprep.subr.mxu0 0.0
        %3274 = vmatpush1.msra.mxu0 %v2910
        %3275 = vmatprep.subr.mxu0 0.0
        %3276 = vmatpush1.msra.mxu0 %v2915
        %3277 = vmatprep.subr.mxu0 0.0
        %3278 = vmatpush1.msra.mxu0 %v2920
        %3279 = vmatprep.subr.mxu0 0.0
        %3280 = vmatpush1.msra.mxu0 0.0
        %3281 = vmatprep.subr.mxu0 0.0
        %3282 = vmatpush1.msra.mxu0 0.0
        %3283 = vmatprep.subr.mxu0 0.0
        %3284 = vmatpush1.msra.mxu0 0.0
        %3285 = vmatprep.subr.mxu0 0.0
        %3286 = vmatpush1.msra.mxu0 0.0
        %3287 = vmatprep.subr.mxu0 0.0
        %3288 = vmatpush1.msra.mxu0 0.0
        %3289 = vmatprep.subr.mxu0 0.0
        %3290 = vmatpush1.msra.mxu0 0.0
        %3291 = vmatprep.subr.mxu0 0.0
        %3292 = vmatpush1.msra.mxu0 0.0
        %3293 = vmatprep.subr.mxu0 0.0
        %3294 = vmatpush1.msra.mxu0 0.0
        %3295 = vmatprep.subr.mxu0 0.0
        %3296 = vmatpush1.msra.mxu0 0.0
        %3297 = vmatprep.subr.mxu0 0.0
        %3298 = vmatpush1.msra.mxu0 0.0
        %3299 = vmatprep.subr.mxu0 0.0
        %3300 = vmatpush1.msra.mxu0 0.0
        %3301 = vmatprep.subr.mxu0 0.0
        %3302 = vmatpush1.msra.mxu0 0.0
        %3303 = vmatprep.subr.mxu0 0.0
        %3304 = vmatpush1.msra.mxu0 0.0
        %3305 = vmatprep.subr.mxu0 0.0
        %3306 = vmatpush1.msra.mxu0 0.0
        %3307 = vmatprep.subr.mxu0 0.0
        %3308 = vmatpush1.msra.mxu0 0.0
        %3309 = vmatprep.subr.mxu0 0.0
        %3310 = vmatpush1.msra.mxu0 0.0
        %3311 = vmatprep.subr.mxu0 0.0
        %3312 = vmatpush1.msra.mxu0 0.0
        %3313 = vmatprep.subr.mxu0 0.0
        %3314 = vmatpush1.msra.mxu0 0.0
        %3315 = vmatprep.subr.mxu0 0.0
        %3316 = vmatpush1.msra.mxu0 0.0
        %3317 = vmatprep.subr.mxu0 0.0
        %3318 = vmatpush1.msra.mxu0 0.0
        %3319 = vmatprep.subr.mxu0 0.0
        %3320 = vmatpush1.msra.mxu0 0.0
        %3321 = vmatprep.subr.mxu0 0.0
        %3322 = vmatpush1.msra.mxu0 0.0
        %3323 = vmatprep.subr.mxu0 0.0
        %3324 = vmatpush1.msra.mxu0 0.0
        %3325 = vmatprep.subr.mxu0 0.0
        %3326 = vmatpush1.msra.mxu0 0.0
        %3327 = vmatprep.subr.mxu0 0.0
        %3328 = vmatpush1.msra.mxu0 0.0
        %3329 = vmatprep.subr.mxu0 0.0
        %3330 = vmatpush1.msra.mxu0 0.0
        %3331 = vmatprep.subr.mxu0 0.0
        %3332 = vmatpush1.msra.mxu0 0.0
        %3333 = vmatprep.subr.mxu0 0.0
        %3334 = vmatpush1.msra.mxu0 0.0
        %3335 = vmatprep.subr.mxu0 0.0
        %3336 = vmatpush1.msra.mxu0 0.0
        %3337 = vmatprep.mubr.f32.mxu0 0.0
        %3338 = vmatmul.mubr.f32.gmra.mrb[0].mxu0 %v3238
        %v3339 = vpop.f32.mrb[0].mxu0
        %v3340 = vadd.f32 0.0, %v3339
        %v3341 = vpop.f32.mrb[0].mxu0
        %3342 = vmatprep.mubr.f32.mxu0 0.0
        %3343 = vmatmul.mubr.f32.gmra.mrb[0].mxu0 %v3241
        %v3344 = vpop.f32.mrb[0].mxu0
        %v3345 = vadd.f32 0.0, %v3344
        %v3346 = vpop.f32.mrb[0].mxu0
        %3347 = vmatprep.mubr.f32.mxu0 0.0
        %3348 = vmatmul.mubr.f32.gmra.mrb[0].mxu0 %v3244
        %v3349 = vpop.f32.mrb[0].mxu0
        %v3350 = vadd.f32 0.0, %v3349
        %v3351 = vpop.f32.mrb[0].mxu0
        %3352 = vmatprep.mubr.f32.mxu0 0.0
        %3353 = vmatmul.mubr.f32.gmra.mrb[0].mxu0 %v3247
        %v3354 = vpop.f32.mrb[0].mxu0
        %v3355 = vadd.f32 0.0, %v3354
        %v3356 = vpop.f32.mrb[0].mxu0
        %3357 = vmatprep.mubr.f32.mxu0 0.0
        %3358 = vmatmul.mubr.f32.gmra.mrb[0].mxu0 %v3250
        %v3359 = vpop.f32.mrb[0].mxu0
        %v3360 = vadd.f32 0.0, %v3359
        %v3361 = vpop.f32.mrb[0].mxu0
        %3362 = vmatprep.mubr.f32.mxu0 0.0
        %3363 = vmatmul.mubr.f32.gmra.mrb[0].mxu0 %v3253
        %v3364 = vpop.f32.mrb[0].mxu0
        %v3365 = vadd.f32 0.0, %v3364
        %v3366 = vpop.f32.mrb[0].mxu0
        %3367 = vmatprep.mubr.f32.mxu0 0.0
        %3368 = vmatmul.mubr.f32.gmra.mrb[0].mxu0 %v3256
        %v3369 = vpop.f32.mrb[0].mxu0
        %v3370 = vadd.f32 0.0, %v3369
        %v3371 = vpop.f32.mrb[0].mxu0
        %3372 = vmatprep.mubr.f32.mxu0 0.0
        %3373 = vmatmul.mubr.f32.gmra.mrb[0].mxu0 %v3259
        %v3374 = vpop.f32.mrb[0].mxu0
        %v3375 = vadd.f32 0.0, %v3374
        %v3376 = vpop.f32.mrb[0].mxu0
        %3377 = vmatprep.mubr.f32.mxu0 0.0
        %3378 = vmatmul.mubr.f32.gmra.mrb[0].mxu0 %v3262
        %v3379 = vpop.f32.mrb[0].mxu0
        %v3380 = vadd.f32 0.0, %v3379
        %v3381 = vpop.f32.mrb[0].mxu0
        %3382 = vmatprep.mubr.f32.mxu0 0.0
        %3383 = vmatmul.mubr.f32.gmra.mrb[0].mxu0 %v3265
        %v3384 = vpop.f32.mrb[0].mxu0
        %v3385 = vadd.f32 0.0, %v3384
        %v3386 = vpop.f32.mrb[0].mxu0
        %3387 = vmatprep.mubr.f32.mxu0 0.0
        %3388 = vmatmul.mubr.f32.gmra.mrb[0].mxu0 %v3268
        %v3389 = vpop.f32.mrb[0].mxu0
        %v3390 = vadd.f32 0.0, %v3389
        %v3391 = vpop.f32.mrb[0].mxu0
        %3392 = vmatprep.mubr.f32.mxu0 0.0
        %3393 = vmatmul.mubr.f32.gmra.mrb[0].mxu0 %v3271
        %v3394 = vpop.f32.mrb[0].mxu0
        %v3395 = vadd.f32 0.0, %v3394
        %v3396 = vpop.f32.mrb[0].mxu0
        %3397 = vdwg.mxu0
        %v3398 = vmul.f32 %v3340, %v1322
        %v3399 = vmul.f32 %v3345, %v1322
        %v3400 = vmul.f32 %v3350, %v1322
        %v3401 = vmul.f32 %v3355, %v1327
        %v3402 = vmul.f32 %v3360, %v1327
        %v3403 = vmul.f32 %v3365, %v1327
        %v3404 = vadd.f32 %v3398, %v3401
        %v3405 = vadd.f32 %v3399, %v3402
        %v3406 = vadd.f32 %v3400, %v3403
        %v3407 = vmul.f32 %v3370, %v1332
        %v3408 = vmul.f32 %v3375, %v1332
        %v3409 = vmul.f32 %v3380, %v1332
        %v3410 = vadd.f32 %v3404, %v3407
        %v3411 = vadd.f32 %v3405, %v3408
        %v3412 = vadd.f32 %v3406, %v3409
        %v3413 = vmul.f32 %v3385, %v1337
        %v3414 = vmul.f32 %v3390, %v1337
        %v3415 = vmul.f32 %v3395, %v1337
        %v3416 = vadd.f32 %v3410, %v3413
        %v3417 = vadd.f32 %v3411, %v3414
        %v3418 = vadd.f32 %v3412, %v3415
        %s3419 = scalar_lea.vmem [#allocation16], 32
        %v3420 = vld [vmem:[%s3419] sm:$0xff]
        %v3421 = vld [vmem:[%s3419 + $0x8] sm:$0xff]
        %v3422 = vld [vmem:[%s3419 + $0x10] sm:$0xff]
        %v3423 = vld [vmem:[%s3419 + $0x18] sm:$0xff]
        %s3424 = scalar_lea.vmem [#allocation17], 1
        %v3425 = vld [vmem:[%s3424] sm:$0x1]
        %v3427 = vlaneseq
        %v3428 = vshrl.u32 %v3427, 7
        %v3429 = vsub.s32 0, %v3428
        %v3430 = vrot.slane %v3425, %v3429
        %v3433 = vsel %vm1349, %v3416, 0
        %v3436 = vsel %vm1349, %v3417, 0
        %v3439 = vsel %vm1349, %v3418, 0
        %3441 = vmatprep.subr.mxu0 0.0
        %3442 = vmatpush1.msra.mxu0 %v3420
        %3443 = vmatprep.subr.mxu0 0.0
        %3444 = vmatpush1.msra.mxu0 %v3421
        %3445 = vmatprep.subr.mxu0 0.0
        %3446 = vmatpush1.msra.mxu0 %v3422
        %3447 = vmatprep.subr.mxu0 0.0
        %3448 = vmatpush1.msra.mxu0 %v3423
        %3449 = vmatprep.subr.mxu0 0.0
        %3450 = vmatpush1.msra.mxu0 0.0
        %3451 = vmatprep.subr.mxu0 0.0
        %3452 = vmatpush1.msra.mxu0 0.0
        %3453 = vmatprep.subr.mxu0 0.0
        %3454 = vmatpush1.msra.mxu0 0.0
        %3455 = vmatprep.subr.mxu0 0.0
        %3456 = vmatpush1.msra.mxu0 0.0
        %3457 = vmatprep.subr.mxu0 0.0
        %3458 = vmatpush1.msra.mxu0 0.0
        %3459 = vmatprep.subr.mxu0 0.0
        %3460 = vmatpush1.msra.mxu0 0.0
        %3461 = vmatprep.subr.mxu0 0.0
        %3462 = vmatpush1.msra.mxu0 0.0
        %3463 = vmatprep.subr.mxu0 0.0
        %3464 = vmatpush1.msra.mxu0 0.0
        %3465 = vmatprep.subr.mxu0 0.0
        %3466 = vmatpush1.msra.mxu0 0.0
        %3467 = vmatprep.subr.mxu0 0.0
        %3468 = vmatpush1.msra.mxu0 0.0
        %3469 = vmatprep.subr.mxu0 0.0
        %3470 = vmatpush1.msra.mxu0 0.0
        %3471 = vmatprep.subr.mxu0 0.0
        %3472 = vmatpush1.msra.mxu0 0.0
        %3473 = vmatprep.subr.mxu0 0.0
        %3474 = vmatpush1.msra.mxu0 0.0
        %3475 = vmatprep.subr.mxu0 0.0
        %3476 = vmatpush1.msra.mxu0 0.0
        %3477 = vmatprep.subr.mxu0 0.0
        %3478 = vmatpush1.msra.mxu0 0.0
        %3479 = vmatprep.subr.mxu0 0.0
        %3480 = vmatpush1.msra.mxu0 0.0
        %3481 = vmatprep.subr.mxu0 0.0
        %3482 = vmatpush1.msra.mxu0 0.0
        %3483 = vmatprep.subr.mxu0 0.0
        %3484 = vmatpush1.msra.mxu0 0.0
        %3485 = vmatprep.subr.mxu0 0.0
        %3486 = vmatpush1.msra.mxu0 0.0
        %3487 = vmatprep.subr.mxu0 0.0
        %3488 = vmatpush1.msra.mxu0 0.0
        %3489 = vmatprep.subr.mxu0 0.0
        %3490 = vmatpush1.msra.mxu0 0.0
        %3491 = vmatprep.subr.mxu0 0.0
        %3492 = vmatpush1.msra.mxu0 0.0
        %3493 = vmatprep.subr.mxu0 0.0
        %3494 = vmatpush1.msra.mxu0 0.0
        %3495 = vmatprep.subr.mxu0 0.0
        %3496 = vmatpush1.msra.mxu0 0.0
        %3497 = vmatprep.subr.mxu0 0.0
        %3498 = vmatpush1.msra.mxu0 0.0
        %3499 = vmatprep.subr.mxu0 0.0
        %3500 = vmatpush1.msra.mxu0 0.0
        %3501 = vmatprep.subr.mxu0 0.0
        %3502 = vmatpush1.msra.mxu0 0.0
        %3503 = vmatprep.subr.mxu0 0.0
        %3504 = vmatpush1.msra.mxu0 0.0
        %3505 = vmatprep.mubr.f32.mxu0 0.0
        %3506 = vmatmul.mubr.f32.gmra.mrb[0].mxu0 %v3433
        %v3507 = vpop.f32.mrb[0].mxu0
        %v3508 = vadd.f32 %v3430, %v3507
        %v3509 = vpop.f32.mrb[0].mxu0
        %3510 = vmatprep.mubr.f32.mxu0 0.0
        %3511 = vmatmul.mubr.f32.gmra.mrb[0].mxu0 %v3436
        %v3512 = vpop.f32.mrb[0].mxu0
        %v3513 = vadd.f32 %v3430, %v3512
        %v3514 = vpop.f32.mrb[0].mxu0
        %3515 = vmatprep.mubr.f32.mxu0 0.0
        %3516 = vmatmul.mubr.f32.gmra.mrb[0].mxu0 %v3439
        %v3517 = vpop.f32.mrb[0].mxu0
        %v3518 = vadd.f32 %v3430, %v3517
        %v3519 = vpop.f32.mrb[0].mxu0
        %3520 = vdwg.mxu0
        %v3521 = vadd.f32 %v2629, %v3508
        %v3522 = vadd.f32 %v2630, %v3513
        %v3523 = vadd.f32 %v2631, %v3518
        %s3524 = scalar_lea.vmem %s22, 1
        %v3525 = vld [vmem:[%s3524] sm:$0x1]
        %s3526 = scalar_lea.vmem %s23, 1
        %v3527 = vld [vmem:[%s3526] sm:$0x1]
        %v3528 = vsel %vm1349, %v3521, 0.0
        %3529 = vadd.xlane.f32.xlu0 %v3528
        %v3530 = vpop.xlane.xlu0 %3529
        %v3531 = vsel %vm1349, %v3522, 0.0
        %3532 = vadd.xlane.f32.xlu0 %v3531
        %v3533 = vpop.xlane.xlu0 %3532
        %v3534 = vsel %vm1349, %v3523, 0.0
        %3535 = vadd.xlane.f32.xlu0 %v3534
        %v3536 = vpop.xlane.xlu0 %3535
        %v3537 = vmul.f32 %v3530, %v2235
        %v3538 = vmul.f32 %v3533, %v2235
        %v3539 = vmul.f32 %v3536, %v2235
        %v3540 = vsub.f32 %v3521, %v3537
        %v3541 = vsub.f32 %v3522, %v3538
        %v3542 = vsub.f32 %v3523, %v3539
        %v3543 = vmul.f32 %v3540, %v3540
        %v3544 = vmul.f32 %v3541, %v3541
        %v3545 = vmul.f32 %v3542, %v3542
        %v3546 = vsel %vm1349, %v3543, 0.0
        %3547 = vadd.xlane.f32.xlu0 %v3546
        %v3548 = vpop.xlane.xlu0 %3547
        %v3549 = vsel %vm1349, %v3544, 0.0
        %3550 = vadd.xlane.f32.xlu0 %v3549
        %v3551 = vpop.xlane.xlu0 %3550
        %v3552 = vsel %vm1349, %v3545, 0.0
        %3553 = vadd.xlane.f32.xlu0 %v3552
        %v3554 = vpop.xlane.xlu0 %3553
        %v3555 = vmul.f32 %v3548, %v2235
        %v3556 = vmul.f32 %v3551, %v2235
        %v3557 = vmul.f32 %v3554, %v2235
        %v3558 = vadd.f32 %v3555, 1e-05
        %v3559 = vadd.f32 %v3556, 1e-05
        %v3560 = vadd.f32 %v3557, 1e-05
        %v3561 = vrsqrt.pop %v3558
        %v3562 = vrsqrt.pop %v3559
        %v3563 = vrsqrt.pop %v3560
        %v3564 = vmul.f32 %v3540, %v3561
        %v3565 = vmul.f32 %v3541, %v3562
        %v3566 = vmul.f32 %v3542, %v3563
        %v3568 = vlaneseq
        %v3569 = vshrl.u32 %v3568, 7
        %v3570 = vsub.s32 0, %v3569
        %v3571 = vrot.slane %v3525, %v3570
        %v3573 = vmul.f32 %v3564, %v3571
        %v3574 = vmul.f32 %v3565, %v3571
        %v3575 = vmul.f32 %v3566, %v3571
        %v3577 = vlaneseq
        %v3578 = vshrl.u32 %v3577, 7
        %v3579 = vsub.s32 0, %v3578
        %v3580 = vrot.slane %v3527, %v3579
        %v3582 = vadd.f32 %v3573, %v3580
        %v3583 = vadd.f32 %v3574, %v3580
        %v3584 = vadd.f32 %v3575, %v3580
        %s3585 = scalar_lea.vmem [#allocation19], 32
        %v3586 = vld [vmem:[%s3585] sm:$0xff]
        %v3587 = vld [vmem:[%s3585 + $0x8] sm:$0xff]
        %v3588 = vld [vmem:[%s3585 + $0x10] sm:$0xff]
        %v3589 = vld [vmem:[%s3585 + $0x18] sm:$0xff]
        %s3590 = scalar_lea.vmem [#allocation20], 1
        %v3591 = vld [vmem:[%s3590] sm:$0x1]
        %v3593 = vlaneseq
        %v3594 = vshrl.u32 %v3593, 7
        %v3595 = vsub.s32 0, %v3594
        %v3596 = vrot.slane %v3591, %v3595
        %v3599 = vsel %vm1349, %v3582, 0
        %v3602 = vsel %vm1349, %v3583, 0
        %v3605 = vsel %vm1349, %v3584, 0
        %3607 = vmatprep.subr.mxu0 0.0
        %3608 = vmatpush1.msra.mxu0 %v3586
        %3609 = vmatprep.subr.mxu0 0.0
        %3610 = vmatpush1.msra.mxu0 %v3587
        %3611 = vmatprep.subr.mxu0 0.0
        %3612 = vmatpush1.msra.mxu0 %v3588
        %3613 = vmatprep.subr.mxu0 0.0
        %3614 = vmatpush1.msra.mxu0 %v3589
        %3615 = vmatprep.subr.mxu0 0.0
        %3616 = vmatpush1.msra.mxu0 0.0
        %3617 = vmatprep.subr.mxu0 0.0
        %3618 = vmatpush1.msra.mxu0 0.0
        %3619 = vmatprep.subr.mxu0 0.0
        %3620 = vmatpush1.msra.mxu0 0.0
        %3621 = vmatprep.subr.mxu0 0.0
        %3622 = vmatpush1.msra.mxu0 0.0
        %3623 = vmatprep.subr.mxu0 0.0
        %3624 = vmatpush1.msra.mxu0 0.0
        %3625 = vmatprep.subr.mxu0 0.0
        %3626 = vmatpush1.msra.mxu0 0.0
        %3627 = vmatprep.subr.mxu0 0.0
        %3628 = vmatpush1.msra.mxu0 0.0
        %3629 = vmatprep.subr.mxu0 0.0
        %3630 = vmatpush1.msra.mxu0 0.0
        %3631 = vmatprep.subr.mxu0 0.0
        %3632 = vmatpush1.msra.mxu0 0.0
        %3633 = vmatprep.subr.mxu0 0.0
        %3634 = vmatpush1.msra.mxu0 0.0
        %3635 = vmatprep.subr.mxu0 0.0
        %3636 = vmatpush1.msra.mxu0 0.0
        %3637 = vmatprep.subr.mxu0 0.0
        %3638 = vmatpush1.msra.mxu0 0.0
        %3639 = vmatprep.subr.mxu0 0.0
        %3640 = vmatpush1.msra.mxu0 0.0
        %3641 = vmatprep.subr.mxu0 0.0
        %3642 = vmatpush1.msra.mxu0 0.0
        %3643 = vmatprep.subr.mxu0 0.0
        %3644 = vmatpush1.msra.mxu0 0.0
        %3645 = vmatprep.subr.mxu0 0.0
        %3646 = vmatpush1.msra.mxu0 0.0
        %3647 = vmatprep.subr.mxu0 0.0
        %3648 = vmatpush1.msra.mxu0 0.0
        %3649 = vmatprep.subr.mxu0 0.0
        %3650 = vmatpush1.msra.mxu0 0.0
        %3651 = vmatprep.subr.mxu0 0.0
        %3652 = vmatpush1.msra.mxu0 0.0
        %3653 = vmatprep.subr.mxu0 0.0
        %3654 = vmatpush1.msra.mxu0 0.0
        %3655 = vmatprep.subr.mxu0 0.0
        %3656 = vmatpush1.msra.mxu0 0.0
        %3657 = vmatprep.subr.mxu0 0.0
        %3658 = vmatpush1.msra.mxu0 0.0
        %3659 = vmatprep.subr.mxu0 0.0
        %3660 = vmatpush1.msra.mxu0 0.0
        %3661 = vmatprep.subr.mxu0 0.0
        %3662 = vmatpush1.msra.mxu0 0.0
        %3663 = vmatprep.subr.mxu0 0.0
        %3664 = vmatpush1.msra.mxu0 0.0
        %3665 = vmatprep.subr.mxu0 0.0
        %3666 = vmatpush1.msra.mxu0 0.0
        %3667 = vmatprep.subr.mxu0 0.0
        %3668 = vmatpush1.msra.mxu0 0.0
        %3669 = vmatprep.subr.mxu0 0.0
        %3670 = vmatpush1.msra.mxu0 0.0
        %3671 = vmatprep.mubr.f32.mxu0 0.0
        %3672 = vmatmul.mubr.f32.gmra.mrb[0].mxu0 %v3599
        %v3673 = vpop.f32.mrb[0].mxu0
        %v3674 = vadd.f32 %v3596, %v3673
        %v3675 = vpop.f32.mrb[0].mxu0
        %3676 = vmatprep.mubr.f32.mxu0 0.0
        %3677 = vmatmul.mubr.f32.gmra.mrb[0].mxu0 %v3602
        %v3678 = vpop.f32.mrb[0].mxu0
        %v3679 = vadd.f32 %v3596, %v3678
        %v3680 = vpop.f32.mrb[0].mxu0
        %3681 = vmatprep.mubr.f32.mxu0 0.0
        %3682 = vmatmul.mubr.f32.gmra.mrb[0].mxu0 %v3605
        %v3683 = vpop.f32.mrb[0].mxu0
        %v3684 = vadd.f32 %v3596, %v3683
        %v3685 = vpop.f32.mrb[0].mxu0
        %3686 = vdwg.mxu0
        %v3687 = vmul.f32 %v3674, 0.5
        %v3688 = vmul.f32 %v3679, 0.5
        %v3689 = vmul.f32 %v3684, 0.5
        %v3690 = vmul.f32 %v3674, 0.70710677
        %v3691 = vmul.f32 %v3679, 0.70710677
        %v3692 = vmul.f32 %v3684, 0.70710677
        %v3693 = vand.u32 2147483647, %v3690
        %v3694 = vand.u32 2147483647, %v3691
        %v3695 = vand.u32 2147483647, %v3692
        %v3696 = vmul.f32 %v3693, 0.3275911
        %v3697 = vmul.f32 %v3694, 0.3275911
        %v3698 = vmul.f32 %v3695, 0.3275911
        %v3699 = vadd.f32 %v3696, 1.0
        %v3700 = vadd.f32 %v3697, 1.0
        %v3701 = vadd.f32 %v3698, 1.0
        %v3702 = vrcp.pop %v3699
        %v3703 = vmul.f32 1.0, %v3702
        %v3704 = vrcp.pop %v3700
        %v3705 = vmul.f32 1.0, %v3704
        %v3706 = vrcp.pop %v3701
        %v3707 = vmul.f32 1.0, %v3706
        %v3708 = vmul.f32 %v3703, 1.0614054
        %v3709 = vmul.f32 %v3705, 1.0614054
        %v3710 = vmul.f32 %v3707, 1.0614054
        %v3711 = vadd.f32 %v3708, -1.4531521
        %v3712 = vadd.f32 %v3709, -1.4531521
        %v3713 = vadd.f32 %v3710, -1.4531521
        %v3714 = vmul.f32 %v3711, %v3703
        %v3715 = vmul.f32 %v3712, %v3705
        %v3716 = vmul.f32 %v3713, %v3707
        %v3717 = vadd.f32 %v3714, 1.4214138
        %v3718 = vadd.f32 %v3715, 1.4214138
        %v3719 = vadd.f32 %v3716, 1.4214138
        %v3720 = vmul.f32 %v3717, %v3703
        %v3721 = vmul.f32 %v3718, %v3705
        %v3722 = vmul.f32 %v3719, %v3707
        %v3723 = vadd.f32 %v3720, -0.28449672
        %v3724 = vadd.f32 %v3721, -0.28449672
        %v3725 = vadd.f32 %v3722, -0.28449672
        %v3726 = vmul.f32 %v3723, %v3703
        %v3727 = vmul.f32 %v3724, %v3705
        %v3728 = vmul.f32 %v3725, %v3707
        %v3729 = vadd.f32 %v3726, 0.2548296
        %v3730 = vadd.f32 %v3727, 0.2548296
        %v3731 = vadd.f32 %v3728, 0.2548296
        %v3732 = vmul.f32 %v3729, %v3703
        %v3733 = vmul.f32 %v3730, %v3705
        %v3734 = vmul.f32 %v3731, %v3707
        %v3735 = vmul.f32 %v3693, %v3693
        %v3736 = vmul.f32 %v3694, %v3694
        %v3737 = vmul.f32 %v3695, %v3695
        %v3738 = vsub.f32 0.0, %v3735
        %v3739 = vsub.f32 0.0, %v3736
        %v3740 = vsub.f32 0.0, %v3737
        %v3741 = vmul.f32 %v3738, 1.442695
        %v3742 = vpow.pop %v3741
        %v3743 = vmul.f32 %v3739, 1.442695
        %v3744 = vpow.pop %v3743
        %v3745 = vmul.f32 %v3740, 1.442695
        %v3746 = vpow.pop %v3745
        %v3747 = vmul.f32 %v3732, %v3742
        %v3748 = vmul.f32 %v3733, %v3744
        %v3749 = vmul.f32 %v3734, %v3746
        %v3750 = vsub.f32 1.0, %v3747
        %v3751 = vsub.f32 1.0, %v3748
        %v3752 = vsub.f32 1.0, %v3749
        %vm3753 = vcmp.ge.f32.partialorder %v3690, 0.0
        %vm3754 = vcmp.ge.f32.partialorder %v3691, 0.0
        %vm3755 = vcmp.ge.f32.partialorder %v3692, 0.0
        %v3756 = vsub.f32 0.0, %v3750
        %v3757 = vsub.f32 0.0, %v3751
        %v3758 = vsub.f32 0.0, %v3752
        %v3759 = vsel %vm3753, %v3750, %v3756
        %v3760 = vsel %vm3754, %v3751, %v3757
        %v3761 = vsel %vm3755, %v3752, %v3758
        %v3762 = vadd.f32 %v3759, 1.0
        %v3763 = vadd.f32 %v3760, 1.0
        %v3764 = vadd.f32 %v3761, 1.0
        %v3765 = vmul.f32 %v3687, %v3762
        %v3766 = vmul.f32 %v3688, %v3763
        %v3767 = vmul.f32 %v3689, %v3764
        %s3768 = scalar_lea.vmem %s20, 64
        %v3769 = vld [vmem:[%s3768] sm:$0xff]
        %v3770 = vld [vmem:[%s3768 + $0x8] sm:$0xff]
        %v3771 = vld [vmem:[%s3768 + $0x10] sm:$0xff]
        %v3772 = vld [vmem:[%s3768 + $0x18] sm:$0xff]
        %v3773 = vld [vmem:[%s3768 + $0x20] sm:$0xff]
        %v3774 = vld [vmem:[%s3768 + $0x28] sm:$0xff]
        %v3775 = vld [vmem:[%s3768 + $0x30] sm:$0xff]
        %v3776 = vld [vmem:[%s3768 + $0x38] sm:$0xff]
        %s3777 = scalar_lea.vmem %s21, 1
        %v3778 = vld [vmem:[%s3777] sm:$0x1]
        %v3780 = vlaneseq
        %v3781 = vshrl.u32 %v3780, 7
        %v3782 = vsub.s32 0, %v3781
        %v3783 = vrot.slane %v3778, %v3782
        %v3786 = vsel %vm2480, %v3765, 0
        %v3789 = vsel %vm2480, %v3766, 0
        %v3792 = vsel %vm2480, %v3767, 0
        %3794 = vmatprep.subr.mxu0 0.0
        %3795 = vmatpush1.msra.mxu0 %v3769
        %3796 = vmatprep.subr.mxu0 0.0
        %3797 = vmatpush1.msra.mxu0 %v3770
        %3798 = vmatprep.subr.mxu0 0.0
        %3799 = vmatpush1.msra.mxu0 %v3771
        %3800 = vmatprep.subr.mxu0 0.0
        %3801 = vmatpush1.msra.mxu0 %v3772
        %3802 = vmatprep.subr.mxu0 0.0
        %3803 = vmatpush1.msra.mxu0 %v3773
        %3804 = vmatprep.subr.mxu0 0.0
        %3805 = vmatpush1.msra.mxu0 %v3774
        %3806 = vmatprep.subr.mxu0 0.0
        %3807 = vmatpush1.msra.mxu0 %v3775
        %3808 = vmatprep.subr.mxu0 0.0
        %3809 = vmatpush1.msra.mxu0 %v3776
        %3810 = vmatprep.subr.mxu0 0.0
        %3811 = vmatpush1.msra.mxu0 0.0
        %3812 = vmatprep.subr.mxu0 0.0
        %3813 = vmatpush1.msra.mxu0 0.0
        %3814 = vmatprep.subr.mxu0 0.0
        %3815 = vmatpush1.msra.mxu0 0.0
        %3816 = vmatprep.subr.mxu0 0.0
        %3817 = vmatpush1.msra.mxu0 0.0
        %3818 = vmatprep.subr.mxu0 0.0
        %3819 = vmatpush1.msra.mxu0 0.0
        %3820 = vmatprep.subr.mxu0 0.0
        %3821 = vmatpush1.msra.mxu0 0.0
        %3822 = vmatprep.subr.mxu0 0.0
        %3823 = vmatpush1.msra.mxu0 0.0
        %3824 = vmatprep.subr.mxu0 0.0
        %3825 = vmatpush1.msra.mxu0 0.0
        %3826 = vmatprep.subr.mxu0 0.0
        %3827 = vmatpush1.msra.mxu0 0.0
        %3828 = vmatprep.subr.mxu0 0.0
        %3829 = vmatpush1.msra.mxu0 0.0
        %3830 = vmatprep.subr.mxu0 0.0
        %3831 = vmatpush1.msra.mxu0 0.0
        %3832 = vmatprep.subr.mxu0 0.0
        %3833 = vmatpush1.msra.mxu0 0.0
        %3834 = vmatprep.subr.mxu0 0.0
        %3835 = vmatpush1.msra.mxu0 0.0
        %3836 = vmatprep.subr.mxu0 0.0
        %3837 = vmatpush1.msra.mxu0 0.0
        %3838 = vmatprep.subr.mxu0 0.0
        %3839 = vmatpush1.msra.mxu0 0.0
        %3840 = vmatprep.subr.mxu0 0.0
        %3841 = vmatpush1.msra.mxu0 0.0
        %3842 = vmatprep.subr.mxu0 0.0
        %3843 = vmatpush1.msra.mxu0 0.0
        %3844 = vmatprep.subr.mxu0 0.0
        %3845 = vmatpush1.msra.mxu0 0.0
        %3846 = vmatprep.subr.mxu0 0.0
        %3847 = vmatpush1.msra.mxu0 0.0
        %3848 = vmatprep.subr.mxu0 0.0
        %3849 = vmatpush1.msra.mxu0 0.0
        %3850 = vmatprep.subr.mxu0 0.0
        %3851 = vmatpush1.msra.mxu0 0.0
        %3852 = vmatprep.subr.mxu0 0.0
        %3853 = vmatpush1.msra.mxu0 0.0
        %3854 = vmatprep.subr.mxu0 0.0
        %3855 = vmatpush1.msra.mxu0 0.0
        %3856 = vmatprep.subr.mxu0 0.0
        %3857 = vmatpush1.msra.mxu0 0.0
        %3858 = vmatprep.mubr.f32.mxu0 0.0
        %3859 = vmatmul.mubr.f32.gmra.mrb[0].mxu0 %v3786
        %v3860 = vpop.f32.mrb[0].mxu0
        %v3861 = vadd.f32 %v3783, %v3860
        %v3862 = vpop.f32.mrb[0].mxu0
        %3863 = vmatprep.mubr.f32.mxu0 0.0
        %3864 = vmatmul.mubr.f32.gmra.mrb[0].mxu0 %v3789
        %v3865 = vpop.f32.mrb[0].mxu0
        %v3866 = vadd.f32 %v3783, %v3865
        %v3867 = vpop.f32.mrb[0].mxu0
        %3868 = vmatprep.mubr.f32.mxu0 0.0
        %3869 = vmatmul.mubr.f32.gmra.mrb[0].mxu0 %v3792
        %v3870 = vpop.f32.mrb[0].mxu0
        %v3871 = vadd.f32 %v3783, %v3870
        %v3872 = vpop.f32.mrb[0].mxu0
        %3873 = vdwg.mxu0
        %v3874 = vadd.f32 %v3582, %v3861
        %v3875 = vadd.f32 %v3583, %v3866
        %v3876 = vadd.f32 %v3584, %v3871
        %s3877 = scalar_lea.vmem %s24, 1
        %v3878 = vld [vmem:[%s3877] sm:$0x1]
        %s3879 = scalar_lea.vmem %s25, 1
        %v3880 = vld [vmem:[%s3879] sm:$0x1]
        %v3881 = vsel %vm1349, %v3874, 0.0
        %3882 = vadd.xlane.f32.xlu0 %v3881
        %v3883 = vpop.xlane.xlu0 %3882
        %v3884 = vsel %vm1349, %v3875, 0.0
        %3885 = vadd.xlane.f32.xlu0 %v3884
        %v3886 = vpop.xlane.xlu0 %3885
        %v3887 = vsel %vm1349, %v3876, 0.0
        %3888 = vadd.xlane.f32.xlu0 %v3887
        %v3889 = vpop.xlane.xlu0 %3888
        %v3890 = vmul.f32 %v3883, %v2235
        %v3891 = vmul.f32 %v3886, %v2235
        %v3892 = vmul.f32 %v3889, %v2235
        %v3893 = vsub.f32 %v3874, %v3890
        %v3894 = vsub.f32 %v3875, %v3891
        %v3895 = vsub.f32 %v3876, %v3892
        %v3896 = vmul.f32 %v3893, %v3893
        %v3897 = vmul.f32 %v3894, %v3894
        %v3898 = vmul.f32 %v3895, %v3895
        %v3899 = vsel %vm1349, %v3896, 0.0
        %3900 = vadd.xlane.f32.xlu0 %v3899
        %v3901 = vpop.xlane.xlu0 %3900
        %v3902 = vsel %vm1349, %v3897, 0.0
        %3903 = vadd.xlane.f32.xlu0 %v3902
        %v3904 = vpop.xlane.xlu0 %3903
        %v3905 = vsel %vm1349, %v3898, 0.0
        %3906 = vadd.xlane.f32.xlu0 %v3905
        %v3907 = vpop.xlane.xlu0 %3906
        %v3908 = vmul.f32 %v3901, %v2235
        %v3909 = vmul.f32 %v3904, %v2235
        %v3910 = vmul.f32 %v3907, %v2235
        %v3911 = vadd.f32 %v3908, 1e-05
        %v3912 = vadd.f32 %v3909, 1e-05
        %v3913 = vadd.f32 %v3910, 1e-05
        %v3914 = vrsqrt.pop %v3911
        %v3915 = vrsqrt.pop %v3912
        %v3916 = vrsqrt.pop %v3913
        %v3917 = vmul.f32 %v3893, %v3914
        %v3918 = vmul.f32 %v3894, %v3915
        %v3919 = vmul.f32 %v3895, %v3916
        %v3921 = vlaneseq
        %v3922 = vshrl.u32 %v3921, 7
        %v3923 = vsub.s32 0, %v3922
        %v3924 = vrot.slane %v3878, %v3923
        %v3926 = vmul.f32 %v3917, %v3924
        %v3927 = vmul.f32 %v3918, %v3924
        %v3928 = vmul.f32 %v3919, %v3924
        %v3930 = vlaneseq
        %v3931 = vshrl.u32 %v3930, 7
        %v3932 = vsub.s32 0, %v3931
        %v3933 = vrot.slane %v3880, %v3932
        %v3935 = vadd.f32 %v3926, %v3933
        %v3936 = vadd.f32 %v3927, %v3933
        %v3937 = vadd.f32 %v3928, %v3933
        %v3938 = vld [vmem:[%s26] sm:$0xff]
        %v3939 = vld [vmem:[%s26 + $0x8] sm:$0xff]
        %v3940 = vld [vmem:[%s26 + $0x10] sm:$0xff]
        %v3941 = vld [vmem:[%s26 + $0x18] sm:$0xff]
        %v3942 = vld [vmem:[%s27] sm:$0x1]
        %v3944 = vlaneseq
        %v3945 = vshrl.u32 %v3944, 7
        %v3946 = vsub.s32 0, %v3945
        %v3947 = vrot.slane %v3942, %v3946
        %v3950 = vsel %vm1349, %v3935, 0
        %v3953 = vsel %vm1349, %v3936, 0
        %v3956 = vsel %vm1349, %v3937, 0
        %3958 = vmatprep.subr.mxu0 0.0
        %3959 = vmatpush1.msra.mxu0 %v3938
        %3960 = vmatprep.subr.mxu0 0.0
        %3961 = vmatpush1.msra.mxu0 %v3939
        %3962 = vmatprep.subr.mxu0 0.0
        %3963 = vmatpush1.msra.mxu0 %v3940
        %3964 = vmatprep.subr.mxu0 0.0
        %3965 = vmatpush1.msra.mxu0 %v3941
        %3966 = vmatprep.subr.mxu0 0.0
        %3967 = vmatpush1.msra.mxu0 0.0
        %3968 = vmatprep.subr.mxu0 0.0
        %3969 = vmatpush1.msra.mxu0 0.0
        %3970 = vmatprep.subr.mxu0 0.0
        %3971 = vmatpush1.msra.mxu0 0.0
        %3972 = vmatprep.subr.mxu0 0.0
        %3973 = vmatpush1.msra.mxu0 0.0
        %3974 = vmatprep.subr.mxu0 0.0
        %3975 = vmatpush1.msra.mxu0 0.0
        %3976 = vmatprep.subr.mxu0 0.0
        %3977 = vmatpush1.msra.mxu0 0.0
        %3978 = vmatprep.subr.mxu0 0.0
        %3979 = vmatpush1.msra.mxu0 0.0
        %3980 = vmatprep.subr.mxu0 0.0
        %3981 = vmatpush1.msra.mxu0 0.0
        %3982 = vmatprep.subr.mxu0 0.0
        %3983 = vmatpush1.msra.mxu0 0.0
        %3984 = vmatprep.subr.mxu0 0.0
        %3985 = vmatpush1.msra.mxu0 0.0
        %3986 = vmatprep.subr.mxu0 0.0
        %3987 = vmatpush1.msra.mxu0 0.0
        %3988 = vmatprep.subr.mxu0 0.0
        %3989 = vmatpush1.msra.mxu0 0.0
        %3990 = vmatprep.subr.mxu0 0.0
        %3991 = vmatpush1.msra.mxu0 0.0
        %3992 = vmatprep.subr.mxu0 0.0
        %3993 = vmatpush1.msra.mxu0 0.0
        %3994 = vmatprep.subr.mxu0 0.0
        %3995 = vmatpush1.msra.mxu0 0.0
        %3996 = vmatprep.subr.mxu0 0.0
        %3997 = vmatpush1.msra.mxu0 0.0
        %3998 = vmatprep.subr.mxu0 0.0
        %3999 = vmatpush1.msra.mxu0 0.0
        %4000 = vmatprep.subr.mxu0 0.0
        %4001 = vmatpush1.msra.mxu0 0.0
        %4002 = vmatprep.subr.mxu0 0.0
        %4003 = vmatpush1.msra.mxu0 0.0
        %4004 = vmatprep.subr.mxu0 0.0
        %4005 = vmatpush1.msra.mxu0 0.0
        %4006 = vmatprep.subr.mxu0 0.0
        %4007 = vmatpush1.msra.mxu0 0.0
        %4008 = vmatprep.subr.mxu0 0.0
        %4009 = vmatpush1.msra.mxu0 0.0
        %4010 = vmatprep.subr.mxu0 0.0
        %4011 = vmatpush1.msra.mxu0 0.0
        %4012 = vmatprep.subr.mxu0 0.0
        %4013 = vmatpush1.msra.mxu0 0.0
        %4014 = vmatprep.subr.mxu0 0.0
        %4015 = vmatpush1.msra.mxu0 0.0
        %4016 = vmatprep.subr.mxu0 0.0
        %4017 = vmatpush1.msra.mxu0 0.0
        %4018 = vmatprep.subr.mxu0 0.0
        %4019 = vmatpush1.msra.mxu0 0.0
        %4020 = vmatprep.subr.mxu0 0.0
        %4021 = vmatpush1.msra.mxu0 0.0
        %4022 = vmatprep.mubr.f32.mxu0 0.0
        %4023 = vmatmul.mubr.f32.gmra.mrb[0].mxu0 %v3950
        %v4024 = vpop.f32.mrb[0].mxu0
        %v4025 = vadd.f32 %v3947, %v4024
        %v4026 = vpop.f32.mrb[0].mxu0
        %4027 = vmatprep.mubr.f32.mxu0 0.0
        %4028 = vmatmul.mubr.f32.gmra.mrb[0].mxu0 %v3953
        %v4029 = vpop.f32.mrb[0].mxu0
        %v4030 = vadd.f32 %v3947, %v4029
        %v4031 = vpop.f32.mrb[0].mxu0
        %4032 = vmatprep.mubr.f32.mxu0 0.0
        %4033 = vmatmul.mubr.f32.gmra.mrb[0].mxu0 %v3956
        %v4034 = vpop.f32.mrb[0].mxu0
        %v4035 = vadd.f32 %v3947, %v4034
        %v4036 = vpop.f32.mrb[0].mxu0
        %4037 = vdwg.mxu0
        %4038 = vst [vmem:[%s1047] sm:$0xff] %v4025
        %4039 = vst [vmem:[%s1047 + $0x8] sm:$0xff] %v4030
        %4040 = vst [vmem:[%s1047 + $0x10] sm:$0xff] %v4035
        %s4041 = sand.u32 %s664, 1
        %s4042 = scalar_lea.sflag [#allocation4], %s4041
        %s4043 = sand.u32 %s664, 1
        %s4044 = smul.addr %s4043, 24
        %s4045 = scalar_lea.vmem [#allocation22], %s4044
        // Predicated region
        $region181: #{tpu_custom_call.1} parent=131 // pred_check
          %p4046 = pneg %p674
        $region182: #{tpu_custom_call.1} parent=131 // pred_check_branch
          %4048 = sbr.rel (%p4046) target = $region184
        $region183: #{tpu_custom_call.1} parent=131 // pred_region
          %s4050 = ssub.s32 384, 384
          %4051 = vsyncadd %s4042, %s4050
          %s4052 = smul.addr %s53, 3
          %s4053 = smul.addr %s4052, 128
          %s4054 = scalar_lea.hbm %s28, %s4053
          %s4055 = sshll.u32 %s4045, 4
          %s4056 = int_to_ptr.vmem [resolvable:$true] %s4055
          %4061 = dma.vmem_to_hbm [thread:$0]  %s4056, 384, %s4054, %s4042, 128, 128, 8
        $region184: #{tpu_custom_call.1} parent=131 // pred_fallthru
          _
      $region132: #{tpu_custom_call.1} parent=5 // pred_fallthru
        _
      %p4062 = scmp.le.s32.totalorder 2, %s48
      // Predicated region
      $region185: #{tpu_custom_call.1} parent=5 // pred_check
        %p4063 = pneg %p4062
      $region186: #{tpu_custom_call.1} parent=5 // pred_check_branch
        %4065 = sbr.rel (%p4063) target = $region188
      $region187: #{tpu_custom_call.1} parent=5 // pred_region
        %s4066 = ssub.s32 %s48, 2
        // Predicated region
        $region189: #{tpu_custom_call.1} parent=187 // pred_check
          %p4067 = pneg %p680
        $region190: #{tpu_custom_call.1} parent=187 // pred_check_branch
          %4069 = sbr.rel (%p4067) target = $region192
        $region191: #{tpu_custom_call.1} parent=187 // pred_region
          %s4070 = sand.u32 %s665, 1
          %s4071 = scalar_lea.sflag [#allocation4], %s4070
          %s4072 = sand.u32 %s665, 1
          %s4073 = smul.addr %s4072, 24
          %s4074 = scalar_lea.vmem [#allocation22], %s4073
          %4075 = dma.done %s4071, 384
        $region192: #{tpu_custom_call.1} parent=187 // pred_fallthru
          _
      $region188: #{tpu_custom_call.1} parent=5 // pred_fallthru
        _
    $region6: #{tpu_custom_call.1} parent=1 // loop_footer
      %s52 = sadd.s32 1, %s48
    $region7: #{tpu_custom_call.1} parent=1 // loop_footer_branch
      %47 = sbr.rel target = $region3
    $region8: #{tpu_custom_call.1} parent=1 // loop_exit
      _
    %4076 = vsyncpa [#allocation3], 1
    %s4077 = scalar_lea.sflag [#allocation3], 1
    %4078 = vsyncpa %s4077, 1
    %4079 = vsyncpa [#allocation6], 1
    %s4080 = scalar_lea.sflag [#allocation6], 1
    %4081 = vsyncpa %s4080, 1
    %4082 = vsyncpa [#allocation9], 1
    %4083 = vsyncpa [#allocation12], 1
    %4084 = vsyncpa [#allocation15], 1
    %4085 = vsyncpa [#allocation18], 1
    %4086 = vsyncpa [#allocation21], 1
    %4087 = vsyncpa [#allocation4], 1
    %s4088 = scalar_lea.sflag [#allocation4], 1
    %4089 = vsyncpa %s4088, 1

</llo_original>
